<compile_context>
chip_gen: v5e
topology: v5e:2x2
jax: 0.10.0
libtpu: 0.0.40
codegen_flags: <defaults>
</compile_context>

<pallas_src>
import functools
import math

import jax
import jax.numpy as jnp
from jax.experimental import pallas as pl
from jax.experimental.pallas import tpu as pltpu

NUM_CLASSES = 29  # len(map_to_label) in the reference module
LANE = 128

CFG = dict(
    hidden=32,
    heads=4,
    layers=2,
    intermediate=64,
    vocab=64,
    max_pos=16,
    type_vocab=2,
    ln_eps=1e-12,
)


# ------------------------------ fused kernel ---------------------------------

def _fused_bert_kernel(
    x_ref, mask_ref,
    emb_g_ref, emb_b_ref,
    wqkv_ref, bqkv_ref, wo_ref, bo_ref, ln1_g_ref, ln1_b_ref,
    wi_ref, bi_ref, wf_ref, bf_ref, ln2_g_ref, ln2_b_ref,
    pool_w_ref, pool_b_ref, fc_w_ref, fc_b_ref,
    o_ref,
    *, layers, batch, seq, heads, head_dim, eps,
):
    H = heads * head_dim
    M = batch * seq
    scale = 1.0 / math.sqrt(head_dim)

    def layernorm(h, g, b):
        mu = jnp.mean(h, axis=-1, keepdims=True)
        var = jnp.mean(jnp.square(h - mu), axis=-1, keepdims=True)
        return (h - mu) * jax.lax.rsqrt(var + eps) * g + b

    def gelu(y):
        # TODO(synk): HF BERT uses exact erf-GELU; tanh approximation keeps TPU lowering clean.
        c = math.sqrt(2.0 / math.pi)
        return 0.5 * y * (1.0 + jnp.tanh(c * (y + 0.044715 * y * y * y)))

    # Embedding LayerNorm (fused, no zero-residual add).
    x = layernorm(x_ref[...], emb_g_ref[...], emb_b_ref[...])

    # Additive key mask, broadcast once (hoisted out of the layer loop).
    mask_k = mask_ref[...][:, None, :]                                   # (B, 1, S)

    for l in range(layers):                                              # static unroll (L=2)
        # ---- self-attention: fused QKV projection (one MXU pass over x) ----
        qkv = jnp.dot(x, wqkv_ref[l], preferred_element_type=jnp.float32) + bqkv_ref[l]
        wo = wo_ref[l]                                                   # (H, H)

        attn = jnp.zeros((M, H), jnp.float32)
        for h in range(heads):                                           # static unroll (4)
            lo = h * head_dim
            qh = qkv[:, lo:lo + head_dim].reshape(batch, seq, head_dim)
            kh = qkv[:, H + lo:H + lo + head_dim].reshape(batch, seq, head_dim)
            vh = qkv[:, 2 * H + lo:2 * H + lo + head_dim].reshape(batch, seq, head_dim)

            s = jnp.einsum("bqd,bkd->bqk", qh, kh,
                           preferred_element_type=jnp.float32) * scale + mask_k
            s_max = jnp.max(s, axis=-1, keepdims=True)
            p = jnp.exp(s - s_max)
            p = p * pl.reciprocal(jnp.sum(p, axis=-1, keepdims=True), approx=True)
            ctx = jnp.einsum("bqk,bkd->bqd", p, vh,
                             preferred_element_type=jnp.float32)         # (B, S, dh)
            # fold the per-head slice of the output projection in here (no concat)
            attn = attn + jnp.dot(ctx.reshape(M, head_dim), wo[lo:lo + head_dim, :],
                                  preferred_element_type=jnp.float32)
        attn = attn + bo_ref[l]

        # residual + LayerNorm fused epilogue
        x = layernorm(attn + x, ln1_g_ref[l], ln1_b_ref[l])

        # ---- feed-forward ----
        inter = gelu(jnp.dot(x, wi_ref[l], preferred_element_type=jnp.float32) + bi_ref[l])
        ffn = jnp.dot(inter, wf_ref[l], preferred_element_type=jnp.float32) + bf_ref[l]
        x = layernorm(ffn + x, ln2_g_ref[l], ln2_b_ref[l])

    # ---- pooler (tanh on [CLS]) + classifier head, fused into the kernel tail ----
    cls = x.reshape(batch, seq, H)[:, 0, :]                              # (B, H)
    pooled = jnp.tanh(jnp.dot(cls, pool_w_ref[...],
                              preferred_element_type=jnp.float32) + pool_b_ref[...])
    logits = jnp.dot(pooled, fc_w_ref[...],
                     preferred_element_type=jnp.float32) + fc_b_ref[...]
    o_ref[...] = logits.astype(o_ref.dtype)                              # lane-dense (128) store


# ------------------------------ Pallas plumbing -------------------------------

def _full_spec(shape):
    nd = len(shape)
    return pl.BlockSpec(shape, lambda i, _nd=nd: (0,) * _nd)


# -------------------------------- Parameters ----------------------------------

def init_params(key, cfg, num_classes):
    H, I, L = cfg["hidden"], cfg["intermediate"], cfg["layers"]
    counter = [0]

    def nxt():
        counter[0] += 1
        return jax.random.fold_in(key, counter[0])

    def normal(shape, std=0.02):
        return std * jax.random.normal(nxt(), shape, jnp.float32)

    c_pad = ((num_classes + LANE - 1) // LANE) * LANE                    # 29 -> 128
    fc_w = normal((H, num_classes))
    fc_b = jnp.zeros((num_classes,), jnp.float32)

    params = dict(
        word_emb=normal((cfg["vocab"], H)),
        pos_emb=normal((cfg["max_pos"], H)),
        type_emb=normal((cfg["type_vocab"], H)),
        emb_ln_g=jnp.ones((1, H), jnp.float32),
        emb_ln_b=jnp.zeros((1, H), jnp.float32),
        # stacked per-layer weights: (L, ...) leading axis, indexed inside the kernel
        wqkv=normal((L, H, 3 * H)),                                      # wq|wk|wv fused
        bqkv=jnp.zeros((L, 1, 3 * H), jnp.float32),
        wo=normal((L, H, H)),
        bo=jnp.zeros((L, 1, H), jnp.float32),
        ln1_g=jnp.ones((L, 1, H), jnp.float32),
        ln1_b=jnp.zeros((L, 1, H), jnp.float32),
        wi=normal((L, H, I)),
        bi=jnp.zeros((L, 1, I), jnp.float32),
        wf=normal((L, I, H)),
        bf=jnp.zeros((L, 1, H), jnp.float32),
        ln2_g=jnp.ones((L, 1, H), jnp.float32),
        ln2_b=jnp.zeros((L, 1, H), jnp.float32),
        pool_w=normal((H, H)),
        pool_b=jnp.zeros((1, H), jnp.float32),
        # classifier head padded to a lane-dense 128-wide output; sliced after the kernel
        fc_w=jnp.zeros((H, c_pad), jnp.float32).at[:, :num_classes].set(fc_w),
        fc_b=jnp.zeros((1, c_pad), jnp.float32).at[:, :num_classes].set(fc_b),
    )
    return params


# --------------------------------- Forward ------------------------------------

def bert_classifier_forward(params, input_ids, attention_mask, cfg=CFG):
    B, S = input_ids.shape
    H = cfg["hidden"]

    # Embedding gather + add stays in XLA glue (data-dependent gather); LN runs in-kernel.
    emb = (jnp.take(params["word_emb"], input_ids, axis=0)
           + params["pos_emb"][None, :S, :]
           + params["type_emb"][0][None, None, :])
    x_emb = emb.reshape(B * S, H).astype(jnp.float32)

    # HF-style extended attention mask: 0 -> -1e9 additive key bias (B, S).
    mask_bias = (1.0 - attention_mask.astype(jnp.float32)) * -1e9

    c_pad = params["fc_w"].shape[1]
    kern = functools.partial(
        _fused_bert_kernel,
        layers=cfg["layers"], batch=B, seq=S,
        heads=cfg["heads"], head_dim=H // cfg["heads"], eps=cfg["ln_eps"],
    )
    args = (
        x_emb, mask_bias,
        params["emb_ln_g"], params["emb_ln_b"],
        params["wqkv"], params["bqkv"], params["wo"], params["bo"],
        params["ln1_g"], params["ln1_b"],
        params["wi"], params["bi"], params["wf"], params["bf"],
        params["ln2_g"], params["ln2_b"],
        params["pool_w"], params["pool_b"], params["fc_w"], params["fc_b"],
    )
    logits_pad = pl.pallas_call(
        kern,
        out_shape=jax.ShapeDtypeStruct((B, c_pad), jnp.float32),
        grid=(1,),
        in_specs=[_full_spec(a.shape) for a in args],
        out_specs=_full_spec((B, c_pad)),
        compiler_params=pltpu.CompilerParams(dimension_semantics=("arbitrary",)),
    )(*args)
    return logits_pad[:, :NUM_CLASSES]


# ----------------------------------- Main --------------------------------------

if __name__ == "__main__":
    key = jax.random.PRNGKey(0)
    k_param, k_ids = jax.random.split(key)

    B, S = 2, 8
    params = init_params(k_param, CFG, NUM_CLASSES)
    input_ids = jax.random.randint(k_ids, (B, S), 0, CFG["vocab"], dtype=jnp.int32)
    attention_mask = jnp.array(
        [[1, 1, 1, 1, 1, 1, 1, 1],
         [1, 1, 1, 1, 1, 1, 0, 0]], dtype=jnp.int32)

    logits = bert_classifier_forward(params, input_ids, attention_mask)
    jax.block_until_ready(logits)
    assert logits.shape == (B, NUM_CLASSES)
    print("KERNEL_OK")
</pallas_src>

<mosaic_0001>
module attributes {stable_mosaic.version = 11 : i64} {
  func.func @_fused_bert_kernel(%arg0: i32, %arg1: memref<16x32xf32, #tpu.memory_space<vmem>>, %arg2: memref<2x8xf32, #tpu.memory_space<vmem>>, %arg3: memref<1x32xf32, #tpu.memory_space<vmem>>, %arg4: memref<1x32xf32, #tpu.memory_space<vmem>>, %arg5: memref<2x32x96xf32, #tpu.memory_space<vmem>>, %arg6: memref<2x1x96xf32, #tpu.memory_space<vmem>>, %arg7: memref<2x32x32xf32, #tpu.memory_space<vmem>>, %arg8: memref<2x1x32xf32, #tpu.memory_space<vmem>>, %arg9: memref<2x1x32xf32, #tpu.memory_space<vmem>>, %arg10: memref<2x1x32xf32, #tpu.memory_space<vmem>>, %arg11: memref<2x32x64xf32, #tpu.memory_space<vmem>>, %arg12: memref<2x1x64xf32, #tpu.memory_space<vmem>>, %arg13: memref<2x64x32xf32, #tpu.memory_space<vmem>>, %arg14: memref<2x1x32xf32, #tpu.memory_space<vmem>>, %arg15: memref<2x1x32xf32, #tpu.memory_space<vmem>>, %arg16: memref<2x1x32xf32, #tpu.memory_space<vmem>>, %arg17: memref<32x32xf32, #tpu.memory_space<vmem>>, %arg18: memref<1x32xf32, #tpu.memory_space<vmem>>, %arg19: memref<32x128xf32, #tpu.memory_space<vmem>>, %arg20: memref<1x128xf32, #tpu.memory_space<vmem>>, %arg21: memref<2x128xf32, #tpu.memory_space<vmem>>) attributes {dimension_semantics = [#tpu.dimension_semantics<arbitrary>], iteration_bounds = array<i64: 1>, scalar_prefetch = 0 : i64, scratch_operands = 0 : i64, tpu.core_type = #tpu.core_type<tc>, window_params = [{pipeline_mode = #tpu.pipeline_mode<synchronous>, transform_indices = @transform_0, window_bounds = array<i64: 16, 32>}, {pipeline_mode = #tpu.pipeline_mode<synchronous>, transform_indices = @transform_1, window_bounds = array<i64: 2, 8>}, {pipeline_mode = #tpu.pipeline_mode<synchronous>, transform_indices = @transform_2, window_bounds = array<i64: 1, 32>}, {pipeline_mode = #tpu.pipeline_mode<synchronous>, transform_indices = @transform_3, window_bounds = array<i64: 1, 32>}, {pipeline_mode = #tpu.pipeline_mode<synchronous>, transform_indices = @transform_4, window_bounds = array<i64: 2, 32, 96>}, {pipeline_mode = #tpu.pipeline_mode<synchronous>, transform_indices = @transform_5, window_bounds = array<i64: 2, 1, 96>}, {pipeline_mode = #tpu.pipeline_mode<synchronous>, transform_indices = @transform_6, window_bounds = array<i64: 2, 32, 32>}, {pipeline_mode = #tpu.pipeline_mode<synchronous>, transform_indices = @transform_7, window_bounds = array<i64: 2, 1, 32>}, {pipeline_mode = #tpu.pipeline_mode<synchronous>, transform_indices = @transform_8, window_bounds = array<i64: 2, 1, 32>}, {pipeline_mode = #tpu.pipeline_mode<synchronous>, transform_indices = @transform_9, window_bounds = array<i64: 2, 1, 32>}, {pipeline_mode = #tpu.pipeline_mode<synchronous>, transform_indices = @transform_10, window_bounds = array<i64: 2, 32, 64>}, {pipeline_mode = #tpu.pipeline_mode<synchronous>, transform_indices = @transform_11, window_bounds = array<i64: 2, 1, 64>}, {pipeline_mode = #tpu.pipeline_mode<synchronous>, transform_indices = @transform_12, window_bounds = array<i64: 2, 64, 32>}, {pipeline_mode = #tpu.pipeline_mode<synchronous>, transform_indices = @transform_13, window_bounds = array<i64: 2, 1, 32>}, {pipeline_mode = #tpu.pipeline_mode<synchronous>, transform_indices = @transform_14, window_bounds = array<i64: 2, 1, 32>}, {pipeline_mode = #tpu.pipeline_mode<synchronous>, transform_indices = @transform_15, window_bounds = array<i64: 2, 1, 32>}, {pipeline_mode = #tpu.pipeline_mode<synchronous>, transform_indices = @transform_16, window_bounds = array<i64: 32, 32>}, {pipeline_mode = #tpu.pipeline_mode<synchronous>, transform_indices = @transform_17, window_bounds = array<i64: 1, 32>}, {pipeline_mode = #tpu.pipeline_mode<synchronous>, transform_indices = @transform_18, window_bounds = array<i64: 32, 128>}, {pipeline_mode = #tpu.pipeline_mode<synchronous>, transform_indices = @transform_19, window_bounds = array<i64: 1, 128>}, {pipeline_mode = #tpu.pipeline_mode<synchronous>, transform_indices = @transform_20, window_bounds = array<i64: 2, 128>}]} {
    %c0 = arith.constant 0 : index
    %c0_0 = arith.constant 0 : index
    %0 = vector.load %arg1[%c0, %c0_0] : memref<16x32xf32, #tpu.memory_space<vmem>>, vector<16x32xf32>
    %c0_1 = arith.constant 0 : index
    %c0_2 = arith.constant 0 : index
    %1 = vector.load %arg3[%c0_1, %c0_2] : memref<1x32xf32, #tpu.memory_space<vmem>>, vector<1x32xf32>
    %c0_3 = arith.constant 0 : index
    %c0_4 = arith.constant 0 : index
    %2 = vector.load %arg4[%c0_3, %c0_4] : memref<1x32xf32, #tpu.memory_space<vmem>>, vector<1x32xf32>
    %cst = arith.constant dense<0.000000e+00> : vector<16xf32>
    %3 = vector.multi_reduction <add>, %0, %cst [1] : vector<16x32xf32> to vector<16xf32>
    %4 = vector.shape_cast %3 : vector<16xf32> to vector<16x1xf32>
    %cst_5 = arith.constant 3.200000e+01 : f32
    %5 = vector.broadcast %cst_5 : f32 to vector<16x1xf32>
    %6 = arith.divf %4, %5 : vector<16x1xf32>
    %7 = vector.broadcast %6 : vector<16x1xf32> to vector<16x32xf32>
    %8 = arith.subf %0, %7 : vector<16x32xf32>
    %9 = arith.mulf %8, %8 : vector<16x32xf32>
    %cst_6 = arith.constant dense<0.000000e+00> : vector<16xf32>
    %10 = vector.multi_reduction <add>, %9, %cst_6 [1] : vector<16x32xf32> to vector<16xf32>
    %11 = vector.shape_cast %10 : vector<16xf32> to vector<16x1xf32>
    %cst_7 = arith.constant 3.200000e+01 : f32
    %12 = vector.broadcast %cst_7 : f32 to vector<16x1xf32>
    %13 = arith.divf %11, %12 : vector<16x1xf32>
    %14 = vector.broadcast %6 : vector<16x1xf32> to vector<16x32xf32>
    %15 = arith.subf %0, %14 : vector<16x32xf32>
    %cst_8 = arith.constant 9.99999996E-13 : f32
    %16 = vector.broadcast %cst_8 : f32 to vector<16x1xf32>
    %17 = arith.addf %13, %16 : vector<16x1xf32>
    %18 = math.rsqrt %17 : vector<16x1xf32>
    %19 = vector.broadcast %18 : vector<16x1xf32> to vector<16x32xf32>
    %20 = arith.mulf %15, %19 : vector<16x32xf32>
    %21 = vector.broadcast %1 : vector<1x32xf32> to vector<16x32xf32>
    %22 = arith.mulf %20, %21 : vector<16x32xf32>
    %23 = vector.broadcast %2 : vector<1x32xf32> to vector<16x32xf32>
    %24 = arith.addf %22, %23 : vector<16x32xf32>
    %c0_9 = arith.constant 0 : index
    %c0_10 = arith.constant 0 : index
    %25 = vector.load %arg2[%c0_9, %c0_10] : memref<2x8xf32, #tpu.memory_space<vmem>>, vector<2x8xf32>
    %26 = vector.shape_cast %25 : vector<2x8xf32> to vector<2x1x8xf32>
    %c0_11 = arith.constant 0 : index
    %c0_12 = arith.constant 0 : index
    %c0_13 = arith.constant 0 : index
    %27 = vector.load %arg5[%c0_11, %c0_12, %c0_13] : memref<2x32x96xf32, #tpu.memory_space<vmem>>, vector<1x32x96xf32>
    %28 = vector.shape_cast %27 : vector<1x32x96xf32> to vector<32x96xf32>
    %cst_14 = arith.constant dense<0.000000e+00> : vector<16x96xf32>
    %29 = tpu.matmul %24, %28, %cst_14 {dimension_numbers = #tpu.dot_dimension_numbers<[1], [0], [0], [1], [0, 0, 1, 1], [], []>} : vector<16x32xf32>, vector<32x96xf32>, vector<16x96xf32> -> vector<16x96xf32>
    %c0_15 = arith.constant 0 : index
    %c0_16 = arith.constant 0 : index
    %c0_17 = arith.constant 0 : index
    %30 = vector.load %arg6[%c0_15, %c0_16, %c0_17] : memref<2x1x96xf32, #tpu.memory_space<vmem>>, vector<1x1x96xf32>
    %31 = vector.shape_cast %30 : vector<1x1x96xf32> to vector<1x96xf32>
    %32 = vector.broadcast %31 : vector<1x96xf32> to vector<16x96xf32>
    %33 = arith.addf %29, %32 : vector<16x96xf32>
    %c0_18 = arith.constant 0 : index
    %c0_19 = arith.constant 0 : index
    %c0_20 = arith.constant 0 : index
    %34 = vector.load %arg7[%c0_18, %c0_19, %c0_20] : memref<2x32x32xf32, #tpu.memory_space<vmem>>, vector<1x32x32xf32>
    %35 = vector.shape_cast %34 : vector<1x32x32xf32> to vector<32x32xf32>
    %cst_21 = arith.constant 0.000000e+00 : f32
    %36 = vector.broadcast %cst_21 : f32 to vector<16x32xf32>
    %37 = vector.extract_strided_slice %33 {offsets = [0, 0], sizes = [16, 8], strides = [1, 1]} : vector<16x96xf32> to vector<16x8xf32>
    %38 = vector.shape_cast %37 : vector<16x8xf32> to vector<2x8x8xf32>
    %39 = vector.extract_strided_slice %33 {offsets = [0, 32], sizes = [16, 8], strides = [1, 1]} : vector<16x96xf32> to vector<16x8xf32>
    %40 = vector.shape_cast %39 : vector<16x8xf32> to vector<2x8x8xf32>
    %41 = vector.extract_strided_slice %33 {offsets = [0, 64], sizes = [16, 8], strides = [1, 1]} : vector<16x96xf32> to vector<16x8xf32>
    %42 = vector.shape_cast %41 : vector<16x8xf32> to vector<2x8x8xf32>
    "tpu.trace_start"() <{level = 10 : i32, message = "bqd,bkd->bqk"}> : () -> ()
    %cst_22 = arith.constant dense<0.000000e+00> : vector<2x8x8xf32>
    %43 = tpu.matmul %38, %40, %cst_22 {dimension_numbers = #tpu.dot_dimension_numbers<[2], [2], [1], [1], [0, 0, 0, 1, 1, 1], [0], [0]>} : vector<2x8x8xf32>, vector<2x8x8xf32>, vector<2x8x8xf32> -> vector<2x8x8xf32>
    "tpu.trace_stop"() : () -> ()
    %cst_23 = arith.constant 0.353553385 : f32
    %44 = vector.broadcast %cst_23 : f32 to vector<2x8x8xf32>
    %45 = arith.mulf %43, %44 : vector<2x8x8xf32>
    %46 = vector.broadcast %26 : vector<2x1x8xf32> to vector<2x8x8xf32>
    %47 = arith.addf %45, %46 : vector<2x8x8xf32>
    %cst_24 = arith.constant dense<0xFF800000> : vector<2x8xf32>
    %48 = vector.multi_reduction <maximumf>, %47, %cst_24 [2] : vector<2x8x8xf32> to vector<2x8xf32>
    %49 = vector.shape_cast %48 : vector<2x8xf32> to vector<2x8x1xf32>
    %50 = vector.broadcast %49 : vector<2x8x1xf32> to vector<2x8x8xf32>
    %51 = arith.subf %47, %50 : vector<2x8x8xf32>
    %52 = math.exp %51 : vector<2x8x8xf32>
    %cst_25 = arith.constant dense<0.000000e+00> : vector<2x8xf32>
    %53 = vector.multi_reduction <add>, %52, %cst_25 [2] : vector<2x8x8xf32> to vector<2x8xf32>
    %54 = vector.shape_cast %53 : vector<2x8xf32> to vector<2x8x1xf32>
    %55 = tpu.reciprocal %54 {approx = true} : vector<2x8x1xf32> -> vector<2x8x1xf32>
    %56 = vector.broadcast %55 : vector<2x8x1xf32> to vector<2x8x8xf32>
    %57 = arith.mulf %52, %56 : vector<2x8x8xf32>
    "tpu.trace_start"() <{level = 10 : i32, message = "bqk,bkd->bqd"}> : () -> ()
    %cst_26 = arith.constant dense<0.000000e+00> : vector<2x8x8xf32>
    %58 = tpu.matmul %57, %42, %cst_26 {dimension_numbers = #tpu.dot_dimension_numbers<[2], [1], [1], [2], [0, 0, 0, 1, 1, 2], [0], [0]>} : vector<2x8x8xf32>, vector<2x8x8xf32>, vector<2x8x8xf32> -> vector<2x8x8xf32>
    "tpu.trace_stop"() : () -> ()
    %59 = vector.shape_cast %58 : vector<2x8x8xf32> to vector<16x8xf32>
    %60 = vector.extract_strided_slice %35 {offsets = [0, 0], sizes = [8, 32], strides = [1, 1]} : vector<32x32xf32> to vector<8x32xf32>
    %cst_27 = arith.constant dense<0.000000e+00> : vector<16x32xf32>
    %61 = tpu.matmul %59, %60, %cst_27 {dimension_numbers = #tpu.dot_dimension_numbers<[1], [0], [0], [1], [0, 0, 1, 1], [], []>} : vector<16x8xf32>, vector<8x32xf32>, vector<16x32xf32> -> vector<16x32xf32>
    %62 = arith.addf %36, %61 : vector<16x32xf32>
    %63 = vector.extract_strided_slice %33 {offsets = [0, 8], sizes = [16, 8], strides = [1, 1]} : vector<16x96xf32> to vector<16x8xf32>
    %64 = vector.shape_cast %63 : vector<16x8xf32> to vector<2x8x8xf32>
    %65 = vector.extract_strided_slice %33 {offsets = [0, 40], sizes = [16, 8], strides = [1, 1]} : vector<16x96xf32> to vector<16x8xf32>
    %66 = vector.shape_cast %65 : vector<16x8xf32> to vector<2x8x8xf32>
    %67 = vector.extract_strided_slice %33 {offsets = [0, 72], sizes = [16, 8], strides = [1, 1]} : vector<16x96xf32> to vector<16x8xf32>
    %68 = vector.shape_cast %67 : vector<16x8xf32> to vector<2x8x8xf32>
    "tpu.trace_start"() <{level = 10 : i32, message = "bqd,bkd->bqk"}> : () -> ()
    %cst_28 = arith.constant dense<0.000000e+00> : vector<2x8x8xf32>
    %69 = tpu.matmul %64, %66, %cst_28 {dimension_numbers = #tpu.dot_dimension_numbers<[2], [2], [1], [1], [0, 0, 0, 1, 1, 1], [0], [0]>} : vector<2x8x8xf32>, vector<2x8x8xf32>, vector<2x8x8xf32> -> vector<2x8x8xf32>
    "tpu.trace_stop"() : () -> ()
    %cst_29 = arith.constant 0.353553385 : f32
    %70 = vector.broadcast %cst_29 : f32 to vector<2x8x8xf32>
    %71 = arith.mulf %69, %70 : vector<2x8x8xf32>
    %72 = vector.broadcast %26 : vector<2x1x8xf32> to vector<2x8x8xf32>
    %73 = arith.addf %71, %72 : vector<2x8x8xf32>
    %cst_30 = arith.constant dense<0xFF800000> : vector<2x8xf32>
    %74 = vector.multi_reduction <maximumf>, %73, %cst_30 [2] : vector<2x8x8xf32> to vector<2x8xf32>
    %75 = vector.shape_cast %74 : vector<2x8xf32> to vector<2x8x1xf32>
    %76 = vector.broadcast %75 : vector<2x8x1xf32> to vector<2x8x8xf32>
    %77 = arith.subf %73, %76 : vector<2x8x8xf32>
    %78 = math.exp %77 : vector<2x8x8xf32>
    %cst_31 = arith.constant dense<0.000000e+00> : vector<2x8xf32>
    %79 = vector.multi_reduction <add>, %78, %cst_31 [2] : vector<2x8x8xf32> to vector<2x8xf32>
    %80 = vector.shape_cast %79 : vector<2x8xf32> to vector<2x8x1xf32>
    %81 = tpu.reciprocal %80 {approx = true} : vector<2x8x1xf32> -> vector<2x8x1xf32>
    %82 = vector.broadcast %81 : vector<2x8x1xf32> to vector<2x8x8xf32>
    %83 = arith.mulf %78, %82 : vector<2x8x8xf32>
    "tpu.trace_start"() <{level = 10 : i32, message = "bqk,bkd->bqd"}> : () -> ()
    %cst_32 = arith.constant dense<0.000000e+00> : vector<2x8x8xf32>
    %84 = tpu.matmul %83, %68, %cst_32 {dimension_numbers = #tpu.dot_dimension_numbers<[2], [1], [1], [2], [0, 0, 0, 1, 1, 2], [0], [0]>} : vector<2x8x8xf32>, vector<2x8x8xf32>, vector<2x8x8xf32> -> vector<2x8x8xf32>
    "tpu.trace_stop"() : () -> ()
    %85 = vector.shape_cast %84 : vector<2x8x8xf32> to vector<16x8xf32>
    %86 = vector.extract_strided_slice %35 {offsets = [8, 0], sizes = [8, 32], strides = [1, 1]} : vector<32x32xf32> to vector<8x32xf32>
    %cst_33 = arith.constant dense<0.000000e+00> : vector<16x32xf32>
    %87 = tpu.matmul %85, %86, %cst_33 {dimension_numbers = #tpu.dot_dimension_numbers<[1], [0], [0], [1], [0, 0, 1, 1], [], []>} : vector<16x8xf32>, vector<8x32xf32>, vector<16x32xf32> -> vector<16x32xf32>
    %88 = arith.addf %62, %87 : vector<16x32xf32>
    %89 = vector.extract_strided_slice %33 {offsets = [0, 16], sizes = [16, 8], strides = [1, 1]} : vector<16x96xf32> to vector<16x8xf32>
    %90 = vector.shape_cast %89 : vector<16x8xf32> to vector<2x8x8xf32>
    %91 = vector.extract_strided_slice %33 {offsets = [0, 48], sizes = [16, 8], strides = [1, 1]} : vector<16x96xf32> to vector<16x8xf32>
    %92 = vector.shape_cast %91 : vector<16x8xf32> to vector<2x8x8xf32>
    %93 = vector.extract_strided_slice %33 {offsets = [0, 80], sizes = [16, 8], strides = [1, 1]} : vector<16x96xf32> to vector<16x8xf32>
    %94 = vector.shape_cast %93 : vector<16x8xf32> to vector<2x8x8xf32>
    "tpu.trace_start"() <{level = 10 : i32, message = "bqd,bkd->bqk"}> : () -> ()
    %cst_34 = arith.constant dense<0.000000e+00> : vector<2x8x8xf32>
    %95 = tpu.matmul %90, %92, %cst_34 {dimension_numbers = #tpu.dot_dimension_numbers<[2], [2], [1], [1], [0, 0, 0, 1, 1, 1], [0], [0]>} : vector<2x8x8xf32>, vector<2x8x8xf32>, vector<2x8x8xf32> -> vector<2x8x8xf32>
    "tpu.trace_stop"() : () -> ()
    %cst_35 = arith.constant 0.353553385 : f32
    %96 = vector.broadcast %cst_35 : f32 to vector<2x8x8xf32>
    %97 = arith.mulf %95, %96 : vector<2x8x8xf32>
    %98 = vector.broadcast %26 : vector<2x1x8xf32> to vector<2x8x8xf32>
    %99 = arith.addf %97, %98 : vector<2x8x8xf32>
    %cst_36 = arith.constant dense<0xFF800000> : vector<2x8xf32>
    %100 = vector.multi_reduction <maximumf>, %99, %cst_36 [2] : vector<2x8x8xf32> to vector<2x8xf32>
    %101 = vector.shape_cast %100 : vector<2x8xf32> to vector<2x8x1xf32>
    %102 = vector.broadcast %101 : vector<2x8x1xf32> to vector<2x8x8xf32>
    %103 = arith.subf %99, %102 : vector<2x8x8xf32>
    %104 = math.exp %103 : vector<2x8x8xf32>
    %cst_37 = arith.constant dense<0.000000e+00> : vector<2x8xf32>
    %105 = vector.multi_reduction <add>, %104, %cst_37 [2] : vector<2x8x8xf32> to vector<2x8xf32>
    %106 = vector.shape_cast %105 : vector<2x8xf32> to vector<2x8x1xf32>
    %107 = tpu.reciprocal %106 {approx = true} : vector<2x8x1xf32> -> vector<2x8x1xf32>
    %108 = vector.broadcast %107 : vector<2x8x1xf32> to vector<2x8x8xf32>
    %109 = arith.mulf %104, %108 : vector<2x8x8xf32>
    "tpu.trace_start"() <{level = 10 : i32, message = "bqk,bkd->bqd"}> : () -> ()
    %cst_38 = arith.constant dense<0.000000e+00> : vector<2x8x8xf32>
    %110 = tpu.matmul %109, %94, %cst_38 {dimension_numbers = #tpu.dot_dimension_numbers<[2], [1], [1], [2], [0, 0, 0, 1, 1, 2], [0], [0]>} : vector<2x8x8xf32>, vector<2x8x8xf32>, vector<2x8x8xf32> -> vector<2x8x8xf32>
    "tpu.trace_stop"() : () -> ()
    %111 = vector.shape_cast %110 : vector<2x8x8xf32> to vector<16x8xf32>
    %112 = vector.extract_strided_slice %35 {offsets = [16, 0], sizes = [8, 32], strides = [1, 1]} : vector<32x32xf32> to vector<8x32xf32>
    %cst_39 = arith.constant dense<0.000000e+00> : vector<16x32xf32>
    %113 = tpu.matmul %111, %112, %cst_39 {dimension_numbers = #tpu.dot_dimension_numbers<[1], [0], [0], [1], [0, 0, 1, 1], [], []>} : vector<16x8xf32>, vector<8x32xf32>, vector<16x32xf32> -> vector<16x32xf32>
    %114 = arith.addf %88, %113 : vector<16x32xf32>
    %115 = vector.extract_strided_slice %33 {offsets = [0, 24], sizes = [16, 8], strides = [1, 1]} : vector<16x96xf32> to vector<16x8xf32>
    %116 = vector.shape_cast %115 : vector<16x8xf32> to vector<2x8x8xf32>
    %117 = vector.extract_strided_slice %33 {offsets = [0, 56], sizes = [16, 8], strides = [1, 1]} : vector<16x96xf32> to vector<16x8xf32>
    %118 = vector.shape_cast %117 : vector<16x8xf32> to vector<2x8x8xf32>
    %119 = vector.extract_strided_slice %33 {offsets = [0, 88], sizes = [16, 8], strides = [1, 1]} : vector<16x96xf32> to vector<16x8xf32>
    %120 = vector.shape_cast %119 : vector<16x8xf32> to vector<2x8x8xf32>
    "tpu.trace_start"() <{level = 10 : i32, message = "bqd,bkd->bqk"}> : () -> ()
    %cst_40 = arith.constant dense<0.000000e+00> : vector<2x8x8xf32>
    %121 = tpu.matmul %116, %118, %cst_40 {dimension_numbers = #tpu.dot_dimension_numbers<[2], [2], [1], [1], [0, 0, 0, 1, 1, 1], [0], [0]>} : vector<2x8x8xf32>, vector<2x8x8xf32>, vector<2x8x8xf32> -> vector<2x8x8xf32>
    "tpu.trace_stop"() : () -> ()
    %cst_41 = arith.constant 0.353553385 : f32
    %122 = vector.broadcast %cst_41 : f32 to vector<2x8x8xf32>
    %123 = arith.mulf %121, %122 : vector<2x8x8xf32>
    %124 = vector.broadcast %26 : vector<2x1x8xf32> to vector<2x8x8xf32>
    %125 = arith.addf %123, %124 : vector<2x8x8xf32>
    %cst_42 = arith.constant dense<0xFF800000> : vector<2x8xf32>
    %126 = vector.multi_reduction <maximumf>, %125, %cst_42 [2] : vector<2x8x8xf32> to vector<2x8xf32>
    %127 = vector.shape_cast %126 : vector<2x8xf32> to vector<2x8x1xf32>
    %128 = vector.broadcast %127 : vector<2x8x1xf32> to vector<2x8x8xf32>
    %129 = arith.subf %125, %128 : vector<2x8x8xf32>
    %130 = math.exp %129 : vector<2x8x8xf32>
    %cst_43 = arith.constant dense<0.000000e+00> : vector<2x8xf32>
    %131 = vector.multi_reduction <add>, %130, %cst_43 [2] : vector<2x8x8xf32> to vector<2x8xf32>
    %132 = vector.shape_cast %131 : vector<2x8xf32> to vector<2x8x1xf32>
    %133 = tpu.reciprocal %132 {approx = true} : vector<2x8x1xf32> -> vector<2x8x1xf32>
    %134 = vector.broadcast %133 : vector<2x8x1xf32> to vector<2x8x8xf32>
    %135 = arith.mulf %130, %134 : vector<2x8x8xf32>
    "tpu.trace_start"() <{level = 10 : i32, message = "bqk,bkd->bqd"}> : () -> ()
    %cst_44 = arith.constant dense<0.000000e+00> : vector<2x8x8xf32>
    %136 = tpu.matmul %135, %120, %cst_44 {dimension_numbers = #tpu.dot_dimension_numbers<[2], [1], [1], [2], [0, 0, 0, 1, 1, 2], [0], [0]>} : vector<2x8x8xf32>, vector<2x8x8xf32>, vector<2x8x8xf32> -> vector<2x8x8xf32>
    "tpu.trace_stop"() : () -> ()
    %137 = vector.shape_cast %136 : vector<2x8x8xf32> to vector<16x8xf32>
    %138 = vector.extract_strided_slice %35 {offsets = [24, 0], sizes = [8, 32], strides = [1, 1]} : vector<32x32xf32> to vector<8x32xf32>
    %cst_45 = arith.constant dense<0.000000e+00> : vector<16x32xf32>
    %139 = tpu.matmul %137, %138, %cst_45 {dimension_numbers = #tpu.dot_dimension_numbers<[1], [0], [0], [1], [0, 0, 1, 1], [], []>} : vector<16x8xf32>, vector<8x32xf32>, vector<16x32xf32> -> vector<16x32xf32>
    %140 = arith.addf %114, %139 : vector<16x32xf32>
    %c0_46 = arith.constant 0 : index
    %c0_47 = arith.constant 0 : index
    %c0_48 = arith.constant 0 : index
    %141 = vector.load %arg8[%c0_46, %c0_47, %c0_48] : memref<2x1x32xf32, #tpu.memory_space<vmem>>, vector<1x1x32xf32>
    %142 = vector.shape_cast %141 : vector<1x1x32xf32> to vector<1x32xf32>
    %143 = vector.broadcast %142 : vector<1x32xf32> to vector<16x32xf32>
    %144 = arith.addf %140, %143 : vector<16x32xf32>
    %145 = arith.addf %144, %24 : vector<16x32xf32>
    %c0_49 = arith.constant 0 : index
    %c0_50 = arith.constant 0 : index
    %c0_51 = arith.constant 0 : index
    %146 = vector.load %arg9[%c0_49, %c0_50, %c0_51] : memref<2x1x32xf32, #tpu.memory_space<vmem>>, vector<1x1x32xf32>
    %147 = vector.shape_cast %146 : vector<1x1x32xf32> to vector<1x32xf32>
    %c0_52 = arith.constant 0 : index
    %c0_53 = arith.constant 0 : index
    %c0_54 = arith.constant 0 : index
    %148 = vector.load %arg10[%c0_52, %c0_53, %c0_54] : memref<2x1x32xf32, #tpu.memory_space<vmem>>, vector<1x1x32xf32>
    %149 = vector.shape_cast %148 : vector<1x1x32xf32> to vector<1x32xf32>
    %cst_55 = arith.constant dense<0.000000e+00> : vector<16xf32>
    %150 = vector.multi_reduction <add>, %145, %cst_55 [1] : vector<16x32xf32> to vector<16xf32>
    %151 = vector.shape_cast %150 : vector<16xf32> to vector<16x1xf32>
    %cst_56 = arith.constant 3.200000e+01 : f32
    %152 = vector.broadcast %cst_56 : f32 to vector<16x1xf32>
    %153 = arith.divf %151, %152 : vector<16x1xf32>
    %154 = vector.broadcast %153 : vector<16x1xf32> to vector<16x32xf32>
    %155 = arith.subf %145, %154 : vector<16x32xf32>
    %156 = arith.mulf %155, %155 : vector<16x32xf32>
    %cst_57 = arith.constant dense<0.000000e+00> : vector<16xf32>
    %157 = vector.multi_reduction <add>, %156, %cst_57 [1] : vector<16x32xf32> to vector<16xf32>
    %158 = vector.shape_cast %157 : vector<16xf32> to vector<16x1xf32>
    %cst_58 = arith.constant 3.200000e+01 : f32
    %159 = vector.broadcast %cst_58 : f32 to vector<16x1xf32>
    %160 = arith.divf %158, %159 : vector<16x1xf32>
    %161 = vector.broadcast %153 : vector<16x1xf32> to vector<16x32xf32>
    %162 = arith.subf %145, %161 : vector<16x32xf32>
    %cst_59 = arith.constant 9.99999996E-13 : f32
    %163 = vector.broadcast %cst_59 : f32 to vector<16x1xf32>
    %164 = arith.addf %160, %163 : vector<16x1xf32>
    %165 = math.rsqrt %164 : vector<16x1xf32>
    %166 = vector.broadcast %165 : vector<16x1xf32> to vector<16x32xf32>
    %167 = arith.mulf %162, %166 : vector<16x32xf32>
    %168 = vector.broadcast %147 : vector<1x32xf32> to vector<16x32xf32>
    %169 = arith.mulf %167, %168 : vector<16x32xf32>
    %170 = vector.broadcast %149 : vector<1x32xf32> to vector<16x32xf32>
    %171 = arith.addf %169, %170 : vector<16x32xf32>
    %c0_60 = arith.constant 0 : index
    %c0_61 = arith.constant 0 : index
    %c0_62 = arith.constant 0 : index
    %172 = vector.load %arg11[%c0_60, %c0_61, %c0_62] : memref<2x32x64xf32, #tpu.memory_space<vmem>>, vector<1x32x64xf32>
    %173 = vector.shape_cast %172 : vector<1x32x64xf32> to vector<32x64xf32>
    %cst_63 = arith.constant dense<0.000000e+00> : vector<16x64xf32>
    %174 = tpu.matmul %171, %173, %cst_63 {dimension_numbers = #tpu.dot_dimension_numbers<[1], [0], [0], [1], [0, 0, 1, 1], [], []>} : vector<16x32xf32>, vector<32x64xf32>, vector<16x64xf32> -> vector<16x64xf32>
    %c0_64 = arith.constant 0 : index
    %c0_65 = arith.constant 0 : index
    %c0_66 = arith.constant 0 : index
    %175 = vector.load %arg12[%c0_64, %c0_65, %c0_66] : memref<2x1x64xf32, #tpu.memory_space<vmem>>, vector<1x1x64xf32>
    %176 = vector.shape_cast %175 : vector<1x1x64xf32> to vector<1x64xf32>
    %177 = vector.broadcast %176 : vector<1x64xf32> to vector<16x64xf32>
    %178 = arith.addf %174, %177 : vector<16x64xf32>
    %cst_67 = arith.constant 5.000000e-01 : f32
    %179 = vector.broadcast %cst_67 : f32 to vector<16x64xf32>
    %180 = arith.mulf %179, %178 : vector<16x64xf32>
    %cst_68 = arith.constant 4.471500e-02 : f32
    %181 = vector.broadcast %cst_68 : f32 to vector<16x64xf32>
    %182 = arith.mulf %181, %178 : vector<16x64xf32>
    %183 = arith.mulf %182, %178 : vector<16x64xf32>
    %184 = arith.mulf %183, %178 : vector<16x64xf32>
    %185 = arith.addf %178, %184 : vector<16x64xf32>
    %cst_69 = arith.constant 0.797884583 : f32
    %186 = vector.broadcast %cst_69 : f32 to vector<16x64xf32>
    %187 = arith.mulf %186, %185 : vector<16x64xf32>
    %188 = math.tanh %187 : vector<16x64xf32>
    %cst_70 = arith.constant 1.000000e+00 : f32
    %189 = vector.broadcast %cst_70 : f32 to vector<16x64xf32>
    %190 = arith.addf %189, %188 : vector<16x64xf32>
    %191 = arith.mulf %180, %190 : vector<16x64xf32>
    %c0_71 = arith.constant 0 : index
    %c0_72 = arith.constant 0 : index
    %c0_73 = arith.constant 0 : index
    %192 = vector.load %arg13[%c0_71, %c0_72, %c0_73] : memref<2x64x32xf32, #tpu.memory_space<vmem>>, vector<1x64x32xf32>
    %193 = vector.shape_cast %192 : vector<1x64x32xf32> to vector<64x32xf32>
    %cst_74 = arith.constant dense<0.000000e+00> : vector<16x32xf32>
    %194 = tpu.matmul %191, %193, %cst_74 {dimension_numbers = #tpu.dot_dimension_numbers<[1], [0], [0], [1], [0, 0, 1, 1], [], []>} : vector<16x64xf32>, vector<64x32xf32>, vector<16x32xf32> -> vector<16x32xf32>
    %c0_75 = arith.constant 0 : index
    %c0_76 = arith.constant 0 : index
    %c0_77 = arith.constant 0 : index
    %195 = vector.load %arg14[%c0_75, %c0_76, %c0_77] : memref<2x1x32xf32, #tpu.memory_space<vmem>>, vector<1x1x32xf32>
    %196 = vector.shape_cast %195 : vector<1x1x32xf32> to vector<1x32xf32>
    %197 = vector.broadcast %196 : vector<1x32xf32> to vector<16x32xf32>
    %198 = arith.addf %194, %197 : vector<16x32xf32>
    %199 = arith.addf %198, %171 : vector<16x32xf32>
    %c0_78 = arith.constant 0 : index
    %c0_79 = arith.constant 0 : index
    %c0_80 = arith.constant 0 : index
    %200 = vector.load %arg15[%c0_78, %c0_79, %c0_80] : memref<2x1x32xf32, #tpu.memory_space<vmem>>, vector<1x1x32xf32>
    %201 = vector.shape_cast %200 : vector<1x1x32xf32> to vector<1x32xf32>
    %c0_81 = arith.constant 0 : index
    %c0_82 = arith.constant 0 : index
    %c0_83 = arith.constant 0 : index
    %202 = vector.load %arg16[%c0_81, %c0_82, %c0_83] : memref<2x1x32xf32, #tpu.memory_space<vmem>>, vector<1x1x32xf32>
    %203 = vector.shape_cast %202 : vector<1x1x32xf32> to vector<1x32xf32>
    %cst_84 = arith.constant dense<0.000000e+00> : vector<16xf32>
    %204 = vector.multi_reduction <add>, %199, %cst_84 [1] : vector<16x32xf32> to vector<16xf32>
    %205 = vector.shape_cast %204 : vector<16xf32> to vector<16x1xf32>
    %cst_85 = arith.constant 3.200000e+01 : f32
    %206 = vector.broadcast %cst_85 : f32 to vector<16x1xf32>
    %207 = arith.divf %205, %206 : vector<16x1xf32>
    %208 = vector.broadcast %207 : vector<16x1xf32> to vector<16x32xf32>
    %209 = arith.subf %199, %208 : vector<16x32xf32>
    %210 = arith.mulf %209, %209 : vector<16x32xf32>
    %cst_86 = arith.constant dense<0.000000e+00> : vector<16xf32>
    %211 = vector.multi_reduction <add>, %210, %cst_86 [1] : vector<16x32xf32> to vector<16xf32>
    %212 = vector.shape_cast %211 : vector<16xf32> to vector<16x1xf32>
    %cst_87 = arith.constant 3.200000e+01 : f32
    %213 = vector.broadcast %cst_87 : f32 to vector<16x1xf32>
    %214 = arith.divf %212, %213 : vector<16x1xf32>
    %215 = vector.broadcast %207 : vector<16x1xf32> to vector<16x32xf32>
    %216 = arith.subf %199, %215 : vector<16x32xf32>
    %cst_88 = arith.constant 9.99999996E-13 : f32
    %217 = vector.broadcast %cst_88 : f32 to vector<16x1xf32>
    %218 = arith.addf %214, %217 : vector<16x1xf32>
    %219 = math.rsqrt %218 : vector<16x1xf32>
    %220 = vector.broadcast %219 : vector<16x1xf32> to vector<16x32xf32>
    %221 = arith.mulf %216, %220 : vector<16x32xf32>
    %222 = vector.broadcast %201 : vector<1x32xf32> to vector<16x32xf32>
    %223 = arith.mulf %221, %222 : vector<16x32xf32>
    %224 = vector.broadcast %203 : vector<1x32xf32> to vector<16x32xf32>
    %225 = arith.addf %223, %224 : vector<16x32xf32>
    %c1 = arith.constant 1 : index
    %c0_89 = arith.constant 0 : index
    %c0_90 = arith.constant 0 : index
    %226 = vector.load %arg5[%c1, %c0_89, %c0_90] : memref<2x32x96xf32, #tpu.memory_space<vmem>>, vector<1x32x96xf32>
    %227 = vector.shape_cast %226 : vector<1x32x96xf32> to vector<32x96xf32>
    %cst_91 = arith.constant dense<0.000000e+00> : vector<16x96xf32>
    %228 = tpu.matmul %225, %227, %cst_91 {dimension_numbers = #tpu.dot_dimension_numbers<[1], [0], [0], [1], [0, 0, 1, 1], [], []>} : vector<16x32xf32>, vector<32x96xf32>, vector<16x96xf32> -> vector<16x96xf32>
    %c1_92 = arith.constant 1 : index
    %c0_93 = arith.constant 0 : index
    %c0_94 = arith.constant 0 : index
    %229 = vector.load %arg6[%c1_92, %c0_93, %c0_94] : memref<2x1x96xf32, #tpu.memory_space<vmem>>, vector<1x1x96xf32>
    %230 = vector.shape_cast %229 : vector<1x1x96xf32> to vector<1x96xf32>
    %231 = vector.broadcast %230 : vector<1x96xf32> to vector<16x96xf32>
    %232 = arith.addf %228, %231 : vector<16x96xf32>
    %c1_95 = arith.constant 1 : index
    %c0_96 = arith.constant 0 : index
    %c0_97 = arith.constant 0 : index
    %233 = vector.load %arg7[%c1_95, %c0_96, %c0_97] : memref<2x32x32xf32, #tpu.memory_space<vmem>>, vector<1x32x32xf32>
    %234 = vector.shape_cast %233 : vector<1x32x32xf32> to vector<32x32xf32>
    %cst_98 = arith.constant 0.000000e+00 : f32
    %235 = vector.broadcast %cst_98 : f32 to vector<16x32xf32>
    %236 = vector.extract_strided_slice %232 {offsets = [0, 0], sizes = [16, 8], strides = [1, 1]} : vector<16x96xf32> to vector<16x8xf32>
    %237 = vector.shape_cast %236 : vector<16x8xf32> to vector<2x8x8xf32>
    %238 = vector.extract_strided_slice %232 {offsets = [0, 32], sizes = [16, 8], strides = [1, 1]} : vector<16x96xf32> to vector<16x8xf32>
    %239 = vector.shape_cast %238 : vector<16x8xf32> to vector<2x8x8xf32>
    %240 = vector.extract_strided_slice %232 {offsets = [0, 64], sizes = [16, 8], strides = [1, 1]} : vector<16x96xf32> to vector<16x8xf32>
    %241 = vector.shape_cast %240 : vector<16x8xf32> to vector<2x8x8xf32>
    "tpu.trace_start"() <{level = 10 : i32, message = "bqd,bkd->bqk"}> : () -> ()
    %cst_99 = arith.constant dense<0.000000e+00> : vector<2x8x8xf32>
    %242 = tpu.matmul %237, %239, %cst_99 {dimension_numbers = #tpu.dot_dimension_numbers<[2], [2], [1], [1], [0, 0, 0, 1, 1, 1], [0], [0]>} : vector<2x8x8xf32>, vector<2x8x8xf32>, vector<2x8x8xf32> -> vector<2x8x8xf32>
    "tpu.trace_stop"() : () -> ()
    %cst_100 = arith.constant 0.353553385 : f32
    %243 = vector.broadcast %cst_100 : f32 to vector<2x8x8xf32>
    %244 = arith.mulf %242, %243 : vector<2x8x8xf32>
    %245 = vector.broadcast %26 : vector<2x1x8xf32> to vector<2x8x8xf32>
    %246 = arith.addf %244, %245 : vector<2x8x8xf32>
    %cst_101 = arith.constant dense<0xFF800000> : vector<2x8xf32>
    %247 = vector.multi_reduction <maximumf>, %246, %cst_101 [2] : vector<2x8x8xf32> to vector<2x8xf32>
    %248 = vector.shape_cast %247 : vector<2x8xf32> to vector<2x8x1xf32>
    %249 = vector.broadcast %248 : vector<2x8x1xf32> to vector<2x8x8xf32>
    %250 = arith.subf %246, %249 : vector<2x8x8xf32>
    %251 = math.exp %250 : vector<2x8x8xf32>
    %cst_102 = arith.constant dense<0.000000e+00> : vector<2x8xf32>
    %252 = vector.multi_reduction <add>, %251, %cst_102 [2] : vector<2x8x8xf32> to vector<2x8xf32>
    %253 = vector.shape_cast %252 : vector<2x8xf32> to vector<2x8x1xf32>
    %254 = tpu.reciprocal %253 {approx = true} : vector<2x8x1xf32> -> vector<2x8x1xf32>
    %255 = vector.broadcast %254 : vector<2x8x1xf32> to vector<2x8x8xf32>
    %256 = arith.mulf %251, %255 : vector<2x8x8xf32>
    "tpu.trace_start"() <{level = 10 : i32, message = "bqk,bkd->bqd"}> : () -> ()
    %cst_103 = arith.constant dense<0.000000e+00> : vector<2x8x8xf32>
    %257 = tpu.matmul %256, %241, %cst_103 {dimension_numbers = #tpu.dot_dimension_numbers<[2], [1], [1], [2], [0, 0, 0, 1, 1, 2], [0], [0]>} : vector<2x8x8xf32>, vector<2x8x8xf32>, vector<2x8x8xf32> -> vector<2x8x8xf32>
    "tpu.trace_stop"() : () -> ()
    %258 = vector.shape_cast %257 : vector<2x8x8xf32> to vector<16x8xf32>
    %259 = vector.extract_strided_slice %234 {offsets = [0, 0], sizes = [8, 32], strides = [1, 1]} : vector<32x32xf32> to vector<8x32xf32>
    %cst_104 = arith.constant dense<0.000000e+00> : vector<16x32xf32>
    %260 = tpu.matmul %258, %259, %cst_104 {dimension_numbers = #tpu.dot_dimension_numbers<[1], [0], [0], [1], [0, 0, 1, 1], [], []>} : vector<16x8xf32>, vector<8x32xf32>, vector<16x32xf32> -> vector<16x32xf32>
    %261 = arith.addf %235, %260 : vector<16x32xf32>
    %262 = vector.extract_strided_slice %232 {offsets = [0, 8], sizes = [16, 8], strides = [1, 1]} : vector<16x96xf32> to vector<16x8xf32>
    %263 = vector.shape_cast %262 : vector<16x8xf32> to vector<2x8x8xf32>
    %264 = vector.extract_strided_slice %232 {offsets = [0, 40], sizes = [16, 8], strides = [1, 1]} : vector<16x96xf32> to vector<16x8xf32>
    %265 = vector.shape_cast %264 : vector<16x8xf32> to vector<2x8x8xf32>
    %266 = vector.extract_strided_slice %232 {offsets = [0, 72], sizes = [16, 8], strides = [1, 1]} : vector<16x96xf32> to vector<16x8xf32>
    %267 = vector.shape_cast %266 : vector<16x8xf32> to vector<2x8x8xf32>
    "tpu.trace_start"() <{level = 10 : i32, message = "bqd,bkd->bqk"}> : () -> ()
    %cst_105 = arith.constant dense<0.000000e+00> : vector<2x8x8xf32>
    %268 = tpu.matmul %263, %265, %cst_105 {dimension_numbers = #tpu.dot_dimension_numbers<[2], [2], [1], [1], [0, 0, 0, 1, 1, 1], [0], [0]>} : vector<2x8x8xf32>, vector<2x8x8xf32>, vector<2x8x8xf32> -> vector<2x8x8xf32>
    "tpu.trace_stop"() : () -> ()
    %cst_106 = arith.constant 0.353553385 : f32
    %269 = vector.broadcast %cst_106 : f32 to vector<2x8x8xf32>
    %270 = arith.mulf %268, %269 : vector<2x8x8xf32>
    %271 = vector.broadcast %26 : vector<2x1x8xf32> to vector<2x8x8xf32>
    %272 = arith.addf %270, %271 : vector<2x8x8xf32>
    %cst_107 = arith.constant dense<0xFF800000> : vector<2x8xf32>
    %273 = vector.multi_reduction <maximumf>, %272, %cst_107 [2] : vector<2x8x8xf32> to vector<2x8xf32>
    %274 = vector.shape_cast %273 : vector<2x8xf32> to vector<2x8x1xf32>
    %275 = vector.broadcast %274 : vector<2x8x1xf32> to vector<2x8x8xf32>
    %276 = arith.subf %272, %275 : vector<2x8x8xf32>
    %277 = math.exp %276 : vector<2x8x8xf32>
    %cst_108 = arith.constant dense<0.000000e+00> : vector<2x8xf32>
    %278 = vector.multi_reduction <add>, %277, %cst_108 [2] : vector<2x8x8xf32> to vector<2x8xf32>
    %279 = vector.shape_cast %278 : vector<2x8xf32> to vector<2x8x1xf32>
    %280 = tpu.reciprocal %279 {approx = true} : vector<2x8x1xf32> -> vector<2x8x1xf32>
    %281 = vector.broadcast %280 : vector<2x8x1xf32> to vector<2x8x8xf32>
    %282 = arith.mulf %277, %281 : vector<2x8x8xf32>
    "tpu.trace_start"() <{level = 10 : i32, message = "bqk,bkd->bqd"}> : () -> ()
    %cst_109 = arith.constant dense<0.000000e+00> : vector<2x8x8xf32>
    %283 = tpu.matmul %282, %267, %cst_109 {dimension_numbers = #tpu.dot_dimension_numbers<[2], [1], [1], [2], [0, 0, 0, 1, 1, 2], [0], [0]>} : vector<2x8x8xf32>, vector<2x8x8xf32>, vector<2x8x8xf32> -> vector<2x8x8xf32>
    "tpu.trace_stop"() : () -> ()
    %284 = vector.shape_cast %283 : vector<2x8x8xf32> to vector<16x8xf32>
    %285 = vector.extract_strided_slice %234 {offsets = [8, 0], sizes = [8, 32], strides = [1, 1]} : vector<32x32xf32> to vector<8x32xf32>
    %cst_110 = arith.constant dense<0.000000e+00> : vector<16x32xf32>
    %286 = tpu.matmul %284, %285, %cst_110 {dimension_numbers = #tpu.dot_dimension_numbers<[1], [0], [0], [1], [0, 0, 1, 1], [], []>} : vector<16x8xf32>, vector<8x32xf32>, vector<16x32xf32> -> vector<16x32xf32>
    %287 = arith.addf %261, %286 : vector<16x32xf32>
    %288 = vector.extract_strided_slice %232 {offsets = [0, 16], sizes = [16, 8], strides = [1, 1]} : vector<16x96xf32> to vector<16x8xf32>
    %289 = vector.shape_cast %288 : vector<16x8xf32> to vector<2x8x8xf32>
    %290 = vector.extract_strided_slice %232 {offsets = [0, 48], sizes = [16, 8], strides = [1, 1]} : vector<16x96xf32> to vector<16x8xf32>
    %291 = vector.shape_cast %290 : vector<16x8xf32> to vector<2x8x8xf32>
    %292 = vector.extract_strided_slice %232 {offsets = [0, 80], sizes = [16, 8], strides = [1, 1]} : vector<16x96xf32> to vector<16x8xf32>
    %293 = vector.shape_cast %292 : vector<16x8xf32> to vector<2x8x8xf32>
    "tpu.trace_start"() <{level = 10 : i32, message = "bqd,bkd->bqk"}> : () -> ()
    %cst_111 = arith.constant dense<0.000000e+00> : vector<2x8x8xf32>
    %294 = tpu.matmul %289, %291, %cst_111 {dimension_numbers = #tpu.dot_dimension_numbers<[2], [2], [1], [1], [0, 0, 0, 1, 1, 1], [0], [0]>} : vector<2x8x8xf32>, vector<2x8x8xf32>, vector<2x8x8xf32> -> vector<2x8x8xf32>
    "tpu.trace_stop"() : () -> ()
    %cst_112 = arith.constant 0.353553385 : f32
    %295 = vector.broadcast %cst_112 : f32 to vector<2x8x8xf32>
    %296 = arith.mulf %294, %295 : vector<2x8x8xf32>
    %297 = vector.broadcast %26 : vector<2x1x8xf32> to vector<2x8x8xf32>
    %298 = arith.addf %296, %297 : vector<2x8x8xf32>
    %cst_113 = arith.constant dense<0xFF800000> : vector<2x8xf32>
    %299 = vector.multi_reduction <maximumf>, %298, %cst_113 [2] : vector<2x8x8xf32> to vector<2x8xf32>
    %300 = vector.shape_cast %299 : vector<2x8xf32> to vector<2x8x1xf32>
    %301 = vector.broadcast %300 : vector<2x8x1xf32> to vector<2x8x8xf32>
    %302 = arith.subf %298, %301 : vector<2x8x8xf32>
    %303 = math.exp %302 : vector<2x8x8xf32>
    %cst_114 = arith.constant dense<0.000000e+00> : vector<2x8xf32>
    %304 = vector.multi_reduction <add>, %303, %cst_114 [2] : vector<2x8x8xf32> to vector<2x8xf32>
    %305 = vector.shape_cast %304 : vector<2x8xf32> to vector<2x8x1xf32>
    %306 = tpu.reciprocal %305 {approx = true} : vector<2x8x1xf32> -> vector<2x8x1xf32>
    %307 = vector.broadcast %306 : vector<2x8x1xf32> to vector<2x8x8xf32>
    %308 = arith.mulf %303, %307 : vector<2x8x8xf32>
    "tpu.trace_start"() <{level = 10 : i32, message = "bqk,bkd->bqd"}> : () -> ()
    %cst_115 = arith.constant dense<0.000000e+00> : vector<2x8x8xf32>
    %309 = tpu.matmul %308, %293, %cst_115 {dimension_numbers = #tpu.dot_dimension_numbers<[2], [1], [1], [2], [0, 0, 0, 1, 1, 2], [0], [0]>} : vector<2x8x8xf32>, vector<2x8x8xf32>, vector<2x8x8xf32> -> vector<2x8x8xf32>
    "tpu.trace_stop"() : () -> ()
    %310 = vector.shape_cast %309 : vector<2x8x8xf32> to vector<16x8xf32>
    %311 = vector.extract_strided_slice %234 {offsets = [16, 0], sizes = [8, 32], strides = [1, 1]} : vector<32x32xf32> to vector<8x32xf32>
    %cst_116 = arith.constant dense<0.000000e+00> : vector<16x32xf32>
    %312 = tpu.matmul %310, %311, %cst_116 {dimension_numbers = #tpu.dot_dimension_numbers<[1], [0], [0], [1], [0, 0, 1, 1], [], []>} : vector<16x8xf32>, vector<8x32xf32>, vector<16x32xf32> -> vector<16x32xf32>
    %313 = arith.addf %287, %312 : vector<16x32xf32>
    %314 = vector.extract_strided_slice %232 {offsets = [0, 24], sizes = [16, 8], strides = [1, 1]} : vector<16x96xf32> to vector<16x8xf32>
    %315 = vector.shape_cast %314 : vector<16x8xf32> to vector<2x8x8xf32>
    %316 = vector.extract_strided_slice %232 {offsets = [0, 56], sizes = [16, 8], strides = [1, 1]} : vector<16x96xf32> to vector<16x8xf32>
    %317 = vector.shape_cast %316 : vector<16x8xf32> to vector<2x8x8xf32>
    %318 = vector.extract_strided_slice %232 {offsets = [0, 88], sizes = [16, 8], strides = [1, 1]} : vector<16x96xf32> to vector<16x8xf32>
    %319 = vector.shape_cast %318 : vector<16x8xf32> to vector<2x8x8xf32>
    "tpu.trace_start"() <{level = 10 : i32, message = "bqd,bkd->bqk"}> : () -> ()
    %cst_117 = arith.constant dense<0.000000e+00> : vector<2x8x8xf32>
    %320 = tpu.matmul %315, %317, %cst_117 {dimension_numbers = #tpu.dot_dimension_numbers<[2], [2], [1], [1], [0, 0, 0, 1, 1, 1], [0], [0]>} : vector<2x8x8xf32>, vector<2x8x8xf32>, vector<2x8x8xf32> -> vector<2x8x8xf32>
    "tpu.trace_stop"() : () -> ()
    %cst_118 = arith.constant 0.353553385 : f32
    %321 = vector.broadcast %cst_118 : f32 to vector<2x8x8xf32>
    %322 = arith.mulf %320, %321 : vector<2x8x8xf32>
    %323 = vector.broadcast %26 : vector<2x1x8xf32> to vector<2x8x8xf32>
    %324 = arith.addf %322, %323 : vector<2x8x8xf32>
    %cst_119 = arith.constant dense<0xFF800000> : vector<2x8xf32>
    %325 = vector.multi_reduction <maximumf>, %324, %cst_119 [2] : vector<2x8x8xf32> to vector<2x8xf32>
    %326 = vector.shape_cast %325 : vector<2x8xf32> to vector<2x8x1xf32>
    %327 = vector.broadcast %326 : vector<2x8x1xf32> to vector<2x8x8xf32>
    %328 = arith.subf %324, %327 : vector<2x8x8xf32>
    %329 = math.exp %328 : vector<2x8x8xf32>
    %cst_120 = arith.constant dense<0.000000e+00> : vector<2x8xf32>
    %330 = vector.multi_reduction <add>, %329, %cst_120 [2] : vector<2x8x8xf32> to vector<2x8xf32>
    %331 = vector.shape_cast %330 : vector<2x8xf32> to vector<2x8x1xf32>
    %332 = tpu.reciprocal %331 {approx = true} : vector<2x8x1xf32> -> vector<2x8x1xf32>
    %333 = vector.broadcast %332 : vector<2x8x1xf32> to vector<2x8x8xf32>
    %334 = arith.mulf %329, %333 : vector<2x8x8xf32>
    "tpu.trace_start"() <{level = 10 : i32, message = "bqk,bkd->bqd"}> : () -> ()
    %cst_121 = arith.constant dense<0.000000e+00> : vector<2x8x8xf32>
    %335 = tpu.matmul %334, %319, %cst_121 {dimension_numbers = #tpu.dot_dimension_numbers<[2], [1], [1], [2], [0, 0, 0, 1, 1, 2], [0], [0]>} : vector<2x8x8xf32>, vector<2x8x8xf32>, vector<2x8x8xf32> -> vector<2x8x8xf32>
    "tpu.trace_stop"() : () -> ()
    %336 = vector.shape_cast %335 : vector<2x8x8xf32> to vector<16x8xf32>
    %337 = vector.extract_strided_slice %234 {offsets = [24, 0], sizes = [8, 32], strides = [1, 1]} : vector<32x32xf32> to vector<8x32xf32>
    %cst_122 = arith.constant dense<0.000000e+00> : vector<16x32xf32>
    %338 = tpu.matmul %336, %337, %cst_122 {dimension_numbers = #tpu.dot_dimension_numbers<[1], [0], [0], [1], [0, 0, 1, 1], [], []>} : vector<16x8xf32>, vector<8x32xf32>, vector<16x32xf32> -> vector<16x32xf32>
    %339 = arith.addf %313, %338 : vector<16x32xf32>
    %c1_123 = arith.constant 1 : index
    %c0_124 = arith.constant 0 : index
    %c0_125 = arith.constant 0 : index
    %340 = vector.load %arg8[%c1_123, %c0_124, %c0_125] : memref<2x1x32xf32, #tpu.memory_space<vmem>>, vector<1x1x32xf32>
    %341 = vector.shape_cast %340 : vector<1x1x32xf32> to vector<1x32xf32>
    %342 = vector.broadcast %341 : vector<1x32xf32> to vector<16x32xf32>
    %343 = arith.addf %339, %342 : vector<16x32xf32>
    %344 = arith.addf %343, %225 : vector<16x32xf32>
    %c1_126 = arith.constant 1 : index
    %c0_127 = arith.constant 0 : index
    %c0_128 = arith.constant 0 : index
    %345 = vector.load %arg9[%c1_126, %c0_127, %c0_128] : memref<2x1x32xf32, #tpu.memory_space<vmem>>, vector<1x1x32xf32>
    %346 = vector.shape_cast %345 : vector<1x1x32xf32> to vector<1x32xf32>
    %c1_129 = arith.constant 1 : index
    %c0_130 = arith.constant 0 : index
    %c0_131 = arith.constant 0 : index
    %347 = vector.load %arg10[%c1_129, %c0_130, %c0_131] : memref<2x1x32xf32, #tpu.memory_space<vmem>>, vector<1x1x32xf32>
    %348 = vector.shape_cast %347 : vector<1x1x32xf32> to vector<1x32xf32>
    %cst_132 = arith.constant dense<0.000000e+00> : vector<16xf32>
    %349 = vector.multi_reduction <add>, %344, %cst_132 [1] : vector<16x32xf32> to vector<16xf32>
    %350 = vector.shape_cast %349 : vector<16xf32> to vector<16x1xf32>
    %cst_133 = arith.constant 3.200000e+01 : f32
    %351 = vector.broadcast %cst_133 : f32 to vector<16x1xf32>
    %352 = arith.divf %350, %351 : vector<16x1xf32>
    %353 = vector.broadcast %352 : vector<16x1xf32> to vector<16x32xf32>
    %354 = arith.subf %344, %353 : vector<16x32xf32>
    %355 = arith.mulf %354, %354 : vector<16x32xf32>
    %cst_134 = arith.constant dense<0.000000e+00> : vector<16xf32>
    %356 = vector.multi_reduction <add>, %355, %cst_134 [1] : vector<16x32xf32> to vector<16xf32>
    %357 = vector.shape_cast %356 : vector<16xf32> to vector<16x1xf32>
    %cst_135 = arith.constant 3.200000e+01 : f32
    %358 = vector.broadcast %cst_135 : f32 to vector<16x1xf32>
    %359 = arith.divf %357, %358 : vector<16x1xf32>
    %360 = vector.broadcast %352 : vector<16x1xf32> to vector<16x32xf32>
    %361 = arith.subf %344, %360 : vector<16x32xf32>
    %cst_136 = arith.constant 9.99999996E-13 : f32
    %362 = vector.broadcast %cst_136 : f32 to vector<16x1xf32>
    %363 = arith.addf %359, %362 : vector<16x1xf32>
    %364 = math.rsqrt %363 : vector<16x1xf32>
    %365 = vector.broadcast %364 : vector<16x1xf32> to vector<16x32xf32>
    %366 = arith.mulf %361, %365 : vector<16x32xf32>
    %367 = vector.broadcast %346 : vector<1x32xf32> to vector<16x32xf32>
    %368 = arith.mulf %366, %367 : vector<16x32xf32>
    %369 = vector.broadcast %348 : vector<1x32xf32> to vector<16x32xf32>
    %370 = arith.addf %368, %369 : vector<16x32xf32>
    %c1_137 = arith.constant 1 : index
    %c0_138 = arith.constant 0 : index
    %c0_139 = arith.constant 0 : index
    %371 = vector.load %arg11[%c1_137, %c0_138, %c0_139] : memref<2x32x64xf32, #tpu.memory_space<vmem>>, vector<1x32x64xf32>
    %372 = vector.shape_cast %371 : vector<1x32x64xf32> to vector<32x64xf32>
    %cst_140 = arith.constant dense<0.000000e+00> : vector<16x64xf32>
    %373 = tpu.matmul %370, %372, %cst_140 {dimension_numbers = #tpu.dot_dimension_numbers<[1], [0], [0], [1], [0, 0, 1, 1], [], []>} : vector<16x32xf32>, vector<32x64xf32>, vector<16x64xf32> -> vector<16x64xf32>
    %c1_141 = arith.constant 1 : index
    %c0_142 = arith.constant 0 : index
    %c0_143 = arith.constant 0 : index
    %374 = vector.load %arg12[%c1_141, %c0_142, %c0_143] : memref<2x1x64xf32, #tpu.memory_space<vmem>>, vector<1x1x64xf32>
    %375 = vector.shape_cast %374 : vector<1x1x64xf32> to vector<1x64xf32>
    %376 = vector.broadcast %375 : vector<1x64xf32> to vector<16x64xf32>
    %377 = arith.addf %373, %376 : vector<16x64xf32>
    %cst_144 = arith.constant 5.000000e-01 : f32
    %378 = vector.broadcast %cst_144 : f32 to vector<16x64xf32>
    %379 = arith.mulf %378, %377 : vector<16x64xf32>
    %cst_145 = arith.constant 4.471500e-02 : f32
    %380 = vector.broadcast %cst_145 : f32 to vector<16x64xf32>
    %381 = arith.mulf %380, %377 : vector<16x64xf32>
    %382 = arith.mulf %381, %377 : vector<16x64xf32>
    %383 = arith.mulf %382, %377 : vector<16x64xf32>
    %384 = arith.addf %377, %383 : vector<16x64xf32>
    %cst_146 = arith.constant 0.797884583 : f32
    %385 = vector.broadcast %cst_146 : f32 to vector<16x64xf32>
    %386 = arith.mulf %385, %384 : vector<16x64xf32>
    %387 = math.tanh %386 : vector<16x64xf32>
    %cst_147 = arith.constant 1.000000e+00 : f32
    %388 = vector.broadcast %cst_147 : f32 to vector<16x64xf32>
    %389 = arith.addf %388, %387 : vector<16x64xf32>
    %390 = arith.mulf %379, %389 : vector<16x64xf32>
    %c1_148 = arith.constant 1 : index
    %c0_149 = arith.constant 0 : index
    %c0_150 = arith.constant 0 : index
    %391 = vector.load %arg13[%c1_148, %c0_149, %c0_150] : memref<2x64x32xf32, #tpu.memory_space<vmem>>, vector<1x64x32xf32>
    %392 = vector.shape_cast %391 : vector<1x64x32xf32> to vector<64x32xf32>
    %cst_151 = arith.constant dense<0.000000e+00> : vector<16x32xf32>
    %393 = tpu.matmul %390, %392, %cst_151 {dimension_numbers = #tpu.dot_dimension_numbers<[1], [0], [0], [1], [0, 0, 1, 1], [], []>} : vector<16x64xf32>, vector<64x32xf32>, vector<16x32xf32> -> vector<16x32xf32>
    %c1_152 = arith.constant 1 : index
    %c0_153 = arith.constant 0 : index
    %c0_154 = arith.constant 0 : index
    %394 = vector.load %arg14[%c1_152, %c0_153, %c0_154] : memref<2x1x32xf32, #tpu.memory_space<vmem>>, vector<1x1x32xf32>
    %395 = vector.shape_cast %394 : vector<1x1x32xf32> to vector<1x32xf32>
    %396 = vector.broadcast %395 : vector<1x32xf32> to vector<16x32xf32>
    %397 = arith.addf %393, %396 : vector<16x32xf32>
    %398 = arith.addf %397, %370 : vector<16x32xf32>
    %c1_155 = arith.constant 1 : index
    %c0_156 = arith.constant 0 : index
    %c0_157 = arith.constant 0 : index
    %399 = vector.load %arg15[%c1_155, %c0_156, %c0_157] : memref<2x1x32xf32, #tpu.memory_space<vmem>>, vector<1x1x32xf32>
    %400 = vector.shape_cast %399 : vector<1x1x32xf32> to vector<1x32xf32>
    %c1_158 = arith.constant 1 : index
    %c0_159 = arith.constant 0 : index
    %c0_160 = arith.constant 0 : index
    %401 = vector.load %arg16[%c1_158, %c0_159, %c0_160] : memref<2x1x32xf32, #tpu.memory_space<vmem>>, vector<1x1x32xf32>
    %402 = vector.shape_cast %401 : vector<1x1x32xf32> to vector<1x32xf32>
    %cst_161 = arith.constant dense<0.000000e+00> : vector<16xf32>
    %403 = vector.multi_reduction <add>, %398, %cst_161 [1] : vector<16x32xf32> to vector<16xf32>
    %404 = vector.shape_cast %403 : vector<16xf32> to vector<16x1xf32>
    %cst_162 = arith.constant 3.200000e+01 : f32
    %405 = vector.broadcast %cst_162 : f32 to vector<16x1xf32>
    %406 = arith.divf %404, %405 : vector<16x1xf32>
    %407 = vector.broadcast %406 : vector<16x1xf32> to vector<16x32xf32>
    %408 = arith.subf %398, %407 : vector<16x32xf32>
    %409 = arith.mulf %408, %408 : vector<16x32xf32>
    %cst_163 = arith.constant dense<0.000000e+00> : vector<16xf32>
    %410 = vector.multi_reduction <add>, %409, %cst_163 [1] : vector<16x32xf32> to vector<16xf32>
    %411 = vector.shape_cast %410 : vector<16xf32> to vector<16x1xf32>
    %cst_164 = arith.constant 3.200000e+01 : f32
    %412 = vector.broadcast %cst_164 : f32 to vector<16x1xf32>
    %413 = arith.divf %411, %412 : vector<16x1xf32>
    %414 = vector.broadcast %406 : vector<16x1xf32> to vector<16x32xf32>
    %415 = arith.subf %398, %414 : vector<16x32xf32>
    %cst_165 = arith.constant 9.99999996E-13 : f32
    %416 = vector.broadcast %cst_165 : f32 to vector<16x1xf32>
    %417 = arith.addf %413, %416 : vector<16x1xf32>
    %418 = math.rsqrt %417 : vector<16x1xf32>
    %419 = vector.broadcast %418 : vector<16x1xf32> to vector<16x32xf32>
    %420 = arith.mulf %415, %419 : vector<16x32xf32>
    %421 = vector.broadcast %400 : vector<1x32xf32> to vector<16x32xf32>
    %422 = arith.mulf %420, %421 : vector<16x32xf32>
    %423 = vector.broadcast %402 : vector<1x32xf32> to vector<16x32xf32>
    %424 = arith.addf %422, %423 : vector<16x32xf32>
    %425 = vector.shape_cast %424 : vector<16x32xf32> to vector<2x8x32xf32>
    %426 = vector.extract_strided_slice %425 {offsets = [0, 0, 0], sizes = [2, 1, 32], strides = [1, 1, 1]} : vector<2x8x32xf32> to vector<2x1x32xf32>
    %427 = vector.shape_cast %426 : vector<2x1x32xf32> to vector<2x32xf32>
    %c0_166 = arith.constant 0 : index
    %c0_167 = arith.constant 0 : index
    %428 = vector.load %arg17[%c0_166, %c0_167] : memref<32x32xf32, #tpu.memory_space<vmem>>, vector<32x32xf32>
    %cst_168 = arith.constant dense<0.000000e+00> : vector<2x32xf32>
    %429 = tpu.matmul %427, %428, %cst_168 {dimension_numbers = #tpu.dot_dimension_numbers<[1], [0], [0], [1], [0, 0, 1, 1], [], []>} : vector<2x32xf32>, vector<32x32xf32>, vector<2x32xf32> -> vector<2x32xf32>
    %c0_169 = arith.constant 0 : index
    %c0_170 = arith.constant 0 : index
    %430 = vector.load %arg18[%c0_169, %c0_170] : memref<1x32xf32, #tpu.memory_space<vmem>>, vector<1x32xf32>
    %431 = vector.broadcast %430 : vector<1x32xf32> to vector<2x32xf32>
    %432 = arith.addf %429, %431 : vector<2x32xf32>
    %433 = math.tanh %432 : vector<2x32xf32>
    %c0_171 = arith.constant 0 : index
    %c0_172 = arith.constant 0 : index
    %434 = vector.load %arg19[%c0_171, %c0_172] : memref<32x128xf32, #tpu.memory_space<vmem>>, vector<32x128xf32>
    %cst_173 = arith.constant dense<0.000000e+00> : vector<2x128xf32>
    %435 = tpu.matmul %433, %434, %cst_173 {dimension_numbers = #tpu.dot_dimension_numbers<[1], [0], [0], [1], [0, 0, 1, 1], [], []>} : vector<2x32xf32>, vector<32x128xf32>, vector<2x128xf32> -> vector<2x128xf32>
    %c0_174 = arith.constant 0 : index
    %c0_175 = arith.constant 0 : index
    %436 = vector.load %arg20[%c0_174, %c0_175] : memref<1x128xf32, #tpu.memory_space<vmem>>, vector<1x128xf32>
    %437 = vector.broadcast %436 : vector<1x128xf32> to vector<2x128xf32>
    %438 = arith.addf %435, %437 : vector<2x128xf32>
    %c0_176 = arith.constant 0 : index
    %c0_177 = arith.constant 0 : index
    %439 = vector.load %arg21[%c0_176, %c0_177] : memref<2x128xf32, #tpu.memory_space<vmem>>, vector<2x128xf32>
    tpu.vector_store %arg21[%c0_176, %c0_177], %438 {strides = array<i32>} : memref<2x128xf32, #tpu.memory_space<vmem>>, vector<2x128xf32>,
    return
  }
  func.func @transform_0(%arg0: i32) -> (i32, i32) {
    %c0_i32 = arith.constant 0 : i32
    %c0_i32_0 = arith.constant 0 : i32
    %c0_i32_1 = arith.constant 0 : i32
    return %c0_i32, %c0_i32_0 : i32, i32
  }
  func.func @transform_1(%arg0: i32) -> (i32, i32) {
    %c0_i32 = arith.constant 0 : i32
    %c0_i32_0 = arith.constant 0 : i32
    %c0_i32_1 = arith.constant 0 : i32
    return %c0_i32, %c0_i32_0 : i32, i32
  }
  func.func @transform_2(%arg0: i32) -> (i32, i32) {
    %c0_i32 = arith.constant 0 : i32
    %c0_i32_0 = arith.constant 0 : i32
    %c0_i32_1 = arith.constant 0 : i32
    return %c0_i32, %c0_i32_0 : i32, i32
  }
  func.func @transform_3(%arg0: i32) -> (i32, i32) {
    %c0_i32 = arith.constant 0 : i32
    %c0_i32_0 = arith.constant 0 : i32
    %c0_i32_1 = arith.constant 0 : i32
    return %c0_i32, %c0_i32_0 : i32, i32
  }
  func.func @transform_4(%arg0: i32) -> (i32, i32, i32) {
    %c0_i32 = arith.constant 0 : i32
    %c0_i32_0 = arith.constant 0 : i32
    %c0_i32_1 = arith.constant 0 : i32
    %c0_i32_2 = arith.constant 0 : i32
    return %c0_i32, %c0_i32_0, %c0_i32_1 : i32, i32, i32
  }
  func.func @transform_5(%arg0: i32) -> (i32, i32, i32) {
    %c0_i32 = arith.constant 0 : i32
    %c0_i32_0 = arith.constant 0 : i32
    %c0_i32_1 = arith.constant 0 : i32
    %c0_i32_2 = arith.constant 0 : i32
    return %c0_i32, %c0_i32_0, %c0_i32_1 : i32, i32, i32
  }
  func.func @transform_6(%arg0: i32) -> (i32, i32, i32) {
    %c0_i32 = arith.constant 0 : i32
    %c0_i32_0 = arith.constant 0 : i32
    %c0_i32_1 = arith.constant 0 : i32
    %c0_i32_2 = arith.constant 0 : i32
    return %c0_i32, %c0_i32_0, %c0_i32_1 : i32, i32, i32
  }
  func.func @transform_7(%arg0: i32) -> (i32, i32, i32) {
    %c0_i32 = arith.constant 0 : i32
    %c0_i32_0 = arith.constant 0 : i32
    %c0_i32_1 = arith.constant 0 : i32
    %c0_i32_2 = arith.constant 0 : i32
    return %c0_i32, %c0_i32_0, %c0_i32_1 : i32, i32, i32
  }
  func.func @transform_8(%arg0: i32) -> (i32, i32, i32) {
    %c0_i32 = arith.constant 0 : i32
    %c0_i32_0 = arith.constant 0 : i32
    %c0_i32_1 = arith.constant 0 : i32
    %c0_i32_2 = arith.constant 0 : i32
    return %c0_i32, %c0_i32_0, %c0_i32_1 : i32, i32, i32
  }
  func.func @transform_9(%arg0: i32) -> (i32, i32, i32) {
    %c0_i32 = arith.constant 0 : i32
    %c0_i32_0 = arith.constant 0 : i32
    %c0_i32_1 = arith.constant 0 : i32
    %c0_i32_2 = arith.constant 0 : i32
    return %c0_i32, %c0_i32_0, %c0_i32_1 : i32, i32, i32
  }
  func.func @transform_10(%arg0: i32) -> (i32, i32, i32) {
    %c0_i32 = arith.constant 0 : i32
    %c0_i32_0 = arith.constant 0 : i32
    %c0_i32_1 = arith.constant 0 : i32
    %c0_i32_2 = arith.constant 0 : i32
    return %c0_i32, %c0_i32_0, %c0_i32_1 : i32, i32, i32
  }
  func.func @transform_11(%arg0: i32) -> (i32, i32, i32) {
    %c0_i32 = arith.constant 0 : i32
    %c0_i32_0 = arith.constant 0 : i32
    %c0_i32_1 = arith.constant 0 : i32
    %c0_i32_2 = arith.constant 0 : i32
    return %c0_i32, %c0_i32_0, %c0_i32_1 : i32, i32, i32
  }
  func.func @transform_12(%arg0: i32) -> (i32, i32, i32) {
    %c0_i32 = arith.constant 0 : i32
    %c0_i32_0 = arith.constant 0 : i32
    %c0_i32_1 = arith.constant 0 : i32
    %c0_i32_2 = arith.constant 0 : i32
    return %c0_i32, %c0_i32_0, %c0_i32_1 : i32, i32, i32
  }
  func.func @transform_13(%arg0: i32) -> (i32, i32, i32) {
    %c0_i32 = arith.constant 0 : i32
    %c0_i32_0 = arith.constant 0 : i32
    %c0_i32_1 = arith.constant 0 : i32
    %c0_i32_2 = arith.constant 0 : i32
    return %c0_i32, %c0_i32_0, %c0_i32_1 : i32, i32, i32
  }
  func.func @transform_14(%arg0: i32) -> (i32, i32, i32) {
    %c0_i32 = arith.constant 0 : i32
    %c0_i32_0 = arith.constant 0 : i32
    %c0_i32_1 = arith.constant 0 : i32
    %c0_i32_2 = arith.constant 0 : i32
    return %c0_i32, %c0_i32_0, %c0_i32_1 : i32, i32, i32
  }
  func.func @transform_15(%arg0: i32) -> (i32, i32, i32) {
    %c0_i32 = arith.constant 0 : i32
    %c0_i32_0 = arith.constant 0 : i32
    %c0_i32_1 = arith.constant 0 : i32
    %c0_i32_2 = arith.constant 0 : i32
    return %c0_i32, %c0_i32_0, %c0_i32_1 : i32, i32, i32
  }
  func.func @transform_16(%arg0: i32) -> (i32, i32) {
    %c0_i32 = arith.constant 0 : i32
    %c0_i32_0 = arith.constant 0 : i32
    %c0_i32_1 = arith.constant 0 : i32
    return %c0_i32, %c0_i32_0 : i32, i32
  }
  func.func @transform_17(%arg0: i32) -> (i32, i32) {
    %c0_i32 = arith.constant 0 : i32
    %c0_i32_0 = arith.constant 0 : i32
    %c0_i32_1 = arith.constant 0 : i32
    return %c0_i32, %c0_i32_0 : i32, i32
  }
  func.func @transform_18(%arg0: i32) -> (i32, i32) {
    %c0_i32 = arith.constant 0 : i32
    %c0_i32_0 = arith.constant 0 : i32
    %c0_i32_1 = arith.constant 0 : i32
    return %c0_i32, %c0_i32_0 : i32, i32
  }
  func.func @transform_19(%arg0: i32) -> (i32, i32) {
    %c0_i32 = arith.constant 0 : i32
    %c0_i32_0 = arith.constant 0 : i32
    %c0_i32_1 = arith.constant 0 : i32
    return %c0_i32, %c0_i32_0 : i32, i32
  }
  func.func @transform_20(%arg0: i32) -> (i32, i32) {
    %c0_i32 = arith.constant 0 : i32
    %c0_i32_0 = arith.constant 0 : i32
    %c0_i32_1 = arith.constant 0 : i32
    return %c0_i32, %c0_i32_0 : i32, i32
  }
}

</mosaic_0001>

<llo_original>
// kernel: tpu_custom_call.1
$region0: #{tpu_custom_call.1}
  #allocation0 [shape = 'u32[]', space=smem, size = 0x4, offset = 0x4, fixed_abs, tag = 'smem constant byte address 0x4 - core index']
  #allocation1 [shape = 'u32[72,128]{1,0:T(1,128)}', space=vmem, size = 0x9000, scoped, tag = 'internal scratch']
  %s0 = inlined_call_operand.hbm [shape: f32[16,32], index: 0, kind: input, shape index: {}]
  %s1 = inlined_call_operand.hbm [shape: f32[2,8], index: 1, kind: input, shape index: {}]
  %s2 = inlined_call_operand.hbm [shape: f32[1,32], index: 2, kind: input, shape index: {}]
  %s3 = inlined_call_operand.hbm [shape: f32[1,32], index: 3, kind: input, shape index: {}]
  %s4 = inlined_call_operand.vmem [shape: f32[2,32,96], index: 4, kind: input, shape index: {}]
  %s5 = inlined_call_operand.vmem [shape: f32[2,1,96], index: 5, kind: input, shape index: {}]
  %s6 = inlined_call_operand.vmem [shape: f32[2,32,32], index: 6, kind: input, shape index: {}]
  %s7 = inlined_call_operand.vmem [shape: f32[2,1,32], index: 7, kind: input, shape index: {}]
  %s8 = inlined_call_operand.hbm [shape: f32[2,1,32], index: 8, kind: input, shape index: {}]
  %s9 = inlined_call_operand.vmem [shape: f32[2,1,32], index: 9, kind: input, shape index: {}]
  %s10 = inlined_call_operand.vmem [shape: f32[2,32,64], index: 10, kind: input, shape index: {}]
  %s11 = inlined_call_operand.vmem [shape: f32[2,1,64], index: 11, kind: input, shape index: {}]
  %s12 = inlined_call_operand.vmem [shape: f32[2,64,32], index: 12, kind: input, shape index: {}]
  %s13 = inlined_call_operand.vmem [shape: f32[2,1,32], index: 13, kind: input, shape index: {}]
  %s14 = inlined_call_operand.hbm [shape: f32[2,1,32], index: 14, kind: input, shape index: {}]
  %s15 = inlined_call_operand.vmem [shape: f32[2,1,32], index: 15, kind: input, shape index: {}]
  %s16 = inlined_call_operand.hbm [shape: f32[32,32], index: 16, kind: input, shape index: {}]
  %s17 = inlined_call_operand.vmem [shape: f32[1,32], index: 17, kind: input, shape index: {}]
  %s18 = inlined_call_operand.hbm [shape: f32[32,128], index: 18, kind: input, shape index: {}]
  %s19 = inlined_call_operand.vmem [shape: f32[1,128], index: 19, kind: input, shape index: {}]
  %s20 = inlined_call_operand.hbm [shape: f32[2,128], index: 20, kind: output, shape index: {}]
  %s21 = sld [smem:[#allocation0]]
  $region122: #{tpu_custom_call.1} parent=0
    _
  %s23 = ssub.s32 1, %s21
  %s24 = scalar_select 0, %s23, %s21
  $region1: #{tpu_custom_call.1} parent=0
    #allocation2 [shape = 'u8[8192]{0}', space=vmem, size = 0x2000, scoped, tag = 'input window, operand 0, single buffered']
    #allocation3 [shape = 's32[1]{0}', space=sflag, size = 0x4, scoped, tag = 'scoped memory for tpu_custom_call.1']
    #allocation4 [shape = 's32[1]{0}', space=sflag, size = 0x4, scoped, tag = 'scoped memory for tpu_custom_call.1']
    #allocation5 [shape = 'u8[1024]{0}', space=vmem, size = 0x400, scoped, tag = 'input window, operand 1, single buffered']
    #allocation6 [shape = 's32[1]{0}', space=sflag, size = 0x4, scoped, tag = 'scoped memory for tpu_custom_call.1']
    #allocation7 [shape = 'u8[512]{0}', space=vmem, size = 0x400, scoped, tag = 'input window, operand 2, single buffered']
    #allocation8 [shape = 'u8[512]{0}', space=vmem, size = 0x400, scoped, tag = 'input window, operand 3, single buffered']
    #allocation9 [shape = 's32[1]{0}', space=sflag, size = 0x4, scoped, tag = 'scoped memory for tpu_custom_call.1']
    #allocation10 [shape = 'u8[1024]{0}', space=vmem, size = 0x400, scoped, tag = 'input window, operand 8, single buffered']
    #allocation11 [shape = 'u8[1024]{0}', space=vmem, size = 0x400, scoped, tag = 'input window, operand 14, single buffered']
    #allocation12 [shape = 's32[1]{0}', space=sflag, size = 0x4, scoped, tag = 'scoped memory for tpu_custom_call.1']
    #allocation13 [shape = 'u8[16384]{0}', space=vmem, size = 0x4000, scoped, tag = 'input window, operand 16, single buffered']
    #allocation14 [shape = 'u8[16384]{0}', space=vmem, size = 0x4000, scoped, tag = 'input window, operand 18, single buffered']
    #allocation15 [shape = 's32[1]{0}', space=sflag, size = 0x4, scoped, tag = 'scoped memory for tpu_custom_call.1']
    #allocation16 [shape = 'u8[1024]{0}', space=vmem, size = 0x400, scoped, tag = 'output window, operand 0, single buffered']
    %25 = vsyncpa [#allocation3], 0
    %26 = vsyncpa [#allocation6], 0
    %27 = vsyncpa [#allocation9], 0
    %28 = vsyncpa [#allocation12], 0
    %29 = vsyncpa [#allocation15], 0
    %30 = vsyncpa [#allocation4], 0
    // Predicated region
    $region2: #{tpu_custom_call.1} parent=1 // pred_check
      _
    $region3: #{tpu_custom_call.1} parent=1 // pred_check_branch
      %32 = sbr.rel (0) target = $region5
    $region4: #{tpu_custom_call.1} parent=1 // pred_region
      %34 = vsyncadd [#allocation3], 0
      %s35 = sshll.u32 %s0, 4
      %s36 = int_to_ptr.hbm [resolvable:$true] %s35
      %s37 = sshll.u32 [#allocation2], 4
      %s38 = int_to_ptr.vmem [resolvable:$true] %s37
      %43 = dma.hbm_to_vmem [thread:$0]  %s36, 256, %s38, [#allocation3], 128, 128, 8
    $region5: #{tpu_custom_call.1} parent=1 // pred_fallthru
      _
    // Predicated region
    $region6: #{tpu_custom_call.1} parent=1 // pred_check
      _
    $region7: #{tpu_custom_call.1} parent=1 // pred_check_branch
      %45 = sbr.rel (0) target = $region9
    $region8: #{tpu_custom_call.1} parent=1 // pred_region
      %47 = vsyncadd [#allocation6], 0
      %s49 = sshll.u32 %s1, 4
      %s50 = int_to_ptr.hbm [resolvable:$true] %s49
      %s51 = sshll.u32 [#allocation5], 4
      %s52 = int_to_ptr.vmem [resolvable:$true] %s51
      %54 = dma.hbm_to_vmem [thread:$0]  %s50, 32, %s52, [#allocation6]
    $region9: #{tpu_custom_call.1} parent=1 // pred_fallthru
      _
    // Predicated region
    $region10: #{tpu_custom_call.1} parent=1 // pred_check
      _
    $region11: #{tpu_custom_call.1} parent=1 // pred_check_branch
      %56 = sbr.rel (0) target = $region13
    $region12: #{tpu_custom_call.1} parent=1 // pred_region
      %58 = vsyncadd [#allocation6], 0
      %s60 = sshll.u32 %s2, 4
      %s61 = int_to_ptr.hbm [resolvable:$true] %s60
      %s62 = sshll.u32 [#allocation7], 4
      %s63 = int_to_ptr.vmem [resolvable:$true] %s62
      %65 = dma.hbm_to_vmem [thread:$0]  %s61, 16, %s63, [#allocation6]
    $region13: #{tpu_custom_call.1} parent=1 // pred_fallthru
      _
    // Predicated region
    $region14: #{tpu_custom_call.1} parent=1 // pred_check
      _
    $region15: #{tpu_custom_call.1} parent=1 // pred_check_branch
      %67 = sbr.rel (0) target = $region17
    $region16: #{tpu_custom_call.1} parent=1 // pred_region
      %69 = vsyncadd [#allocation9], 0
      %s71 = sshll.u32 %s3, 4
      %s72 = int_to_ptr.hbm [resolvable:$true] %s71
      %s73 = sshll.u32 [#allocation8], 4
      %s74 = int_to_ptr.vmem [resolvable:$true] %s73
      %76 = dma.hbm_to_vmem [thread:$0]  %s72, 16, %s74, [#allocation9]
    $region17: #{tpu_custom_call.1} parent=1 // pred_fallthru
      _
    // Predicated region
    $region18: #{tpu_custom_call.1} parent=1 // pred_check
      _
    $region19: #{tpu_custom_call.1} parent=1 // pred_check_branch
      %78 = sbr.rel (0) target = $region21
    $region20: #{tpu_custom_call.1} parent=1 // pred_region
      _
    $region21: #{tpu_custom_call.1} parent=1 // pred_fallthru
      _
    // Predicated region
    $region22: #{tpu_custom_call.1} parent=1 // pred_check
      _
    $region23: #{tpu_custom_call.1} parent=1 // pred_check_branch
      %80 = sbr.rel (0) target = $region25
    $region24: #{tpu_custom_call.1} parent=1 // pred_region
      _
    $region25: #{tpu_custom_call.1} parent=1 // pred_fallthru
      _
    // Predicated region
    $region26: #{tpu_custom_call.1} parent=1 // pred_check
      _
    $region27: #{tpu_custom_call.1} parent=1 // pred_check_branch
      %82 = sbr.rel (0) target = $region29
    $region28: #{tpu_custom_call.1} parent=1 // pred_region
      _
    $region29: #{tpu_custom_call.1} parent=1 // pred_fallthru
      _
    // Predicated region
    $region30: #{tpu_custom_call.1} parent=1 // pred_check
      _
    $region31: #{tpu_custom_call.1} parent=1 // pred_check_branch
      %84 = sbr.rel (0) target = $region33
    $region32: #{tpu_custom_call.1} parent=1 // pred_region
      _
    $region33: #{tpu_custom_call.1} parent=1 // pred_fallthru
      _
    // Predicated region
    $region34: #{tpu_custom_call.1} parent=1 // pred_check
      _
    $region35: #{tpu_custom_call.1} parent=1 // pred_check_branch
      %86 = sbr.rel (0) target = $region37
    $region36: #{tpu_custom_call.1} parent=1 // pred_region
      %88 = vsyncadd [#allocation9], 0
      %s89 = sshll.u32 %s8, 4
      %s90 = int_to_ptr.hbm [resolvable:$true] %s89
      %s91 = sshll.u32 [#allocation10], 4
      %s92 = int_to_ptr.vmem [resolvable:$true] %s91
      %97 = dma.hbm_to_vmem [thread:$0]  %s90, 32, %s92, [#allocation9], 16, 16, 1
    $region37: #{tpu_custom_call.1} parent=1 // pred_fallthru
      _
    // Predicated region
    $region38: #{tpu_custom_call.1} parent=1 // pred_check
      _
    $region39: #{tpu_custom_call.1} parent=1 // pred_check_branch
      %99 = sbr.rel (0) target = $region41
    $region40: #{tpu_custom_call.1} parent=1 // pred_region
      _
    $region41: #{tpu_custom_call.1} parent=1 // pred_fallthru
      _
    // Predicated region
    $region42: #{tpu_custom_call.1} parent=1 // pred_check
      _
    $region43: #{tpu_custom_call.1} parent=1 // pred_check_branch
      %101 = sbr.rel (0) target = $region45
    $region44: #{tpu_custom_call.1} parent=1 // pred_region
      _
    $region45: #{tpu_custom_call.1} parent=1 // pred_fallthru
      _
    // Predicated region
    $region46: #{tpu_custom_call.1} parent=1 // pred_check
      _
    $region47: #{tpu_custom_call.1} parent=1 // pred_check_branch
      %103 = sbr.rel (0) target = $region49
    $region48: #{tpu_custom_call.1} parent=1 // pred_region
      _
    $region49: #{tpu_custom_call.1} parent=1 // pred_fallthru
      _
    // Predicated region
    $region50: #{tpu_custom_call.1} parent=1 // pred_check
      _
    $region51: #{tpu_custom_call.1} parent=1 // pred_check_branch
      %105 = sbr.rel (0) target = $region53
    $region52: #{tpu_custom_call.1} parent=1 // pred_region
      _
    $region53: #{tpu_custom_call.1} parent=1 // pred_fallthru
      _
    // Predicated region
    $region54: #{tpu_custom_call.1} parent=1 // pred_check
      _
    $region55: #{tpu_custom_call.1} parent=1 // pred_check_branch
      %107 = sbr.rel (0) target = $region57
    $region56: #{tpu_custom_call.1} parent=1 // pred_region
      _
    $region57: #{tpu_custom_call.1} parent=1 // pred_fallthru
      _
    // Predicated region
    $region58: #{tpu_custom_call.1} parent=1 // pred_check
      _
    $region59: #{tpu_custom_call.1} parent=1 // pred_check_branch
      %109 = sbr.rel (0) target = $region61
    $region60: #{tpu_custom_call.1} parent=1 // pred_region
      %111 = vsyncadd [#allocation12], 0
      %s112 = sshll.u32 %s14, 4
      %s113 = int_to_ptr.hbm [resolvable:$true] %s112
      %s114 = sshll.u32 [#allocation11], 4
      %s115 = int_to_ptr.vmem [resolvable:$true] %s114
      %120 = dma.hbm_to_vmem [thread:$0]  %s113, 32, %s115, [#allocation12], 16, 16, 1
    $region61: #{tpu_custom_call.1} parent=1 // pred_fallthru
      _
    // Predicated region
    $region62: #{tpu_custom_call.1} parent=1 // pred_check
      _
    $region63: #{tpu_custom_call.1} parent=1 // pred_check_branch
      %122 = sbr.rel (0) target = $region65
    $region64: #{tpu_custom_call.1} parent=1 // pred_region
      _
    $region65: #{tpu_custom_call.1} parent=1 // pred_fallthru
      _
    // Predicated region
    $region66: #{tpu_custom_call.1} parent=1 // pred_check
      _
    $region67: #{tpu_custom_call.1} parent=1 // pred_check_branch
      %124 = sbr.rel (0) target = $region69
    $region68: #{tpu_custom_call.1} parent=1 // pred_region
      %126 = vsyncadd [#allocation12], 0
      %s127 = sshll.u32 %s16, 4
      %s128 = int_to_ptr.hbm [resolvable:$true] %s127
      %s129 = sshll.u32 [#allocation13], 4
      %s130 = int_to_ptr.vmem [resolvable:$true] %s129
      %135 = dma.hbm_to_vmem [thread:$0]  %s128, 512, %s130, [#allocation12], 128, 128, 8
    $region69: #{tpu_custom_call.1} parent=1 // pred_fallthru
      _
    // Predicated region
    $region70: #{tpu_custom_call.1} parent=1 // pred_check
      _
    $region71: #{tpu_custom_call.1} parent=1 // pred_check_branch
      %137 = sbr.rel (0) target = $region73
    $region72: #{tpu_custom_call.1} parent=1 // pred_region
      _
    $region73: #{tpu_custom_call.1} parent=1 // pred_fallthru
      _
    // Predicated region
    $region74: #{tpu_custom_call.1} parent=1 // pred_check
      _
    $region75: #{tpu_custom_call.1} parent=1 // pred_check_branch
      %139 = sbr.rel (0) target = $region77
    $region76: #{tpu_custom_call.1} parent=1 // pred_region
      %141 = vsyncadd [#allocation15], 0
      %s142 = sshll.u32 %s18, 4
      %s143 = int_to_ptr.hbm [resolvable:$true] %s142
      %s144 = sshll.u32 [#allocation14], 4
      %s145 = int_to_ptr.vmem [resolvable:$true] %s144
      %150 = dma.hbm_to_vmem [thread:$0]  %s143, 512, %s145, [#allocation15], 128, 128, 8
    $region77: #{tpu_custom_call.1} parent=1 // pred_fallthru
      _
    // Predicated region
    $region78: #{tpu_custom_call.1} parent=1 // pred_check
      _
    $region79: #{tpu_custom_call.1} parent=1 // pred_check_branch
      %152 = sbr.rel (0) target = $region81
    $region80: #{tpu_custom_call.1} parent=1 // pred_region
      _
    $region81: #{tpu_custom_call.1} parent=1 // pred_fallthru
      _
    // Predicated region
    $region82: #{tpu_custom_call.1} parent=1 // pred_check
      _
    $region83: #{tpu_custom_call.1} parent=1 // pred_check_branch
      %154 = sbr.rel (0) target = $region85
    $region84: #{tpu_custom_call.1} parent=1 // pred_region
      %156 = dma.done [#allocation3], 256
    $region85: #{tpu_custom_call.1} parent=1 // pred_fallthru
      _
    // Predicated region
    $region86: #{tpu_custom_call.1} parent=1 // pred_check
      _
    $region87: #{tpu_custom_call.1} parent=1 // pred_check_branch
      %158 = sbr.rel (0) target = $region89
    $region88: #{tpu_custom_call.1} parent=1 // pred_region
      %160 = dma.done [#allocation6], 32
    $region89: #{tpu_custom_call.1} parent=1 // pred_fallthru
      _
    // Predicated region
    $region90: #{tpu_custom_call.1} parent=1 // pred_check
      _
    $region91: #{tpu_custom_call.1} parent=1 // pred_check_branch
      %162 = sbr.rel (0) target = $region93
    $region92: #{tpu_custom_call.1} parent=1 // pred_region
      %164 = dma.done [#allocation6], 16
    $region93: #{tpu_custom_call.1} parent=1 // pred_fallthru
      _
    // Predicated region
    $region94: #{tpu_custom_call.1} parent=1 // pred_check
      _
    $region95: #{tpu_custom_call.1} parent=1 // pred_check_branch
      %166 = sbr.rel (0) target = $region97
    $region96: #{tpu_custom_call.1} parent=1 // pred_region
      %168 = dma.done [#allocation9], 16
    $region97: #{tpu_custom_call.1} parent=1 // pred_fallthru
      _
    // Predicated region
    $region98: #{tpu_custom_call.1} parent=1 // pred_check
      _
    $region99: #{tpu_custom_call.1} parent=1 // pred_check_branch
      %170 = sbr.rel (0) target = $region101
    $region100: #{tpu_custom_call.1} parent=1 // pred_region
      %172 = dma.done [#allocation9], 32
    $region101: #{tpu_custom_call.1} parent=1 // pred_fallthru
      _
    // Predicated region
    $region102: #{tpu_custom_call.1} parent=1 // pred_check
      _
    $region103: #{tpu_custom_call.1} parent=1 // pred_check_branch
      %174 = sbr.rel (0) target = $region105
    $region104: #{tpu_custom_call.1} parent=1 // pred_region
      %176 = dma.done [#allocation12], 32
    $region105: #{tpu_custom_call.1} parent=1 // pred_fallthru
      _
    // Predicated region
    $region106: #{tpu_custom_call.1} parent=1 // pred_check
      _
    $region107: #{tpu_custom_call.1} parent=1 // pred_check_branch
      %178 = sbr.rel (0) target = $region109
    $region108: #{tpu_custom_call.1} parent=1 // pred_region
      %180 = dma.done [#allocation12], 512
    $region109: #{tpu_custom_call.1} parent=1 // pred_fallthru
      _
    // Predicated region
    $region110: #{tpu_custom_call.1} parent=1 // pred_check
      _
    $region111: #{tpu_custom_call.1} parent=1 // pred_check_branch
      %182 = sbr.rel (0) target = $region113
    $region112: #{tpu_custom_call.1} parent=1 // pred_region
      %184 = dma.done [#allocation15], 512
    $region113: #{tpu_custom_call.1} parent=1 // pred_fallthru
      _
    %v185 = vld [vmem:[#allocation2] sm:$0xff]
    %v186 = vld [vmem:[#allocation2 + $0x8] sm:$0xff]
    %v187 = vld [vmem:[#allocation7] sm:$0x1]
    %v188 = vld [vmem:[#allocation8] sm:$0x1]
    %vm189 = vcmask 261120
    %v190 = vsel %vm189, %v185, 0.0
    %191 = vadd.xlane.f32.xlu0 %v190
    %v192 = vpop.xlane.xlu0 %191
    %v193 = vsel %vm189, %v186, 0.0
    %194 = vadd.xlane.f32.xlu0 %v193
    %v195 = vpop.xlane.xlu0 %194
    %v196 = vrcp.pop 32.0
    %v197 = vmul.f32 32.0, %v196
    %v198 = vsub.f32 1.0, %v197
    %v199 = vmul.f32 %v196, %v198
    %v200 = vadd.f32 %v196, %v199
    %vm201 = vweird.f32 %v196
    %v202 = vsel %vm201, %v196, %v200
    %v203 = vmul.f32 %v192, %v202
    %v204 = vmul.f32 %v195, %v202
    %v205 = vsub.f32 %v185, %v203
    %v206 = vsub.f32 %v186, %v204
    %v207 = vmul.f32 %v205, %v205
    %v208 = vmul.f32 %v206, %v206
    %v209 = vsel %vm189, %v207, 0.0
    %210 = vadd.xlane.f32.xlu0 %v209
    %v211 = vpop.xlane.xlu0 %210
    %v212 = vsel %vm189, %v208, 0.0
    %213 = vadd.xlane.f32.xlu0 %v212
    %v214 = vpop.xlane.xlu0 %213
    %v215 = vmul.f32 %v211, %v202
    %v216 = vmul.f32 %v214, %v202
    %v217 = vadd.f32 %v215, 1e-12
    %v218 = vadd.f32 %v216, 1e-12
    %v219 = vrsqrt.pop %v217
    %v220 = vmul.f32 %v219, %v217
    %v221 = vmul.f32 %v220, %v219
    %v222 = vmul.f32 0.5, %v221
    %v223 = vsub.f32 1.5, %v222
    %v224 = vmul.f32 %v219, %v223
    %vm225 = vweird.f32 %v217
    %vm226 = vweird.f32 %v219
    %vm227 = vmor %vm225, %vm226
    %v228 = vsel %vm227, %v219, %v224
    %v229 = vrsqrt.pop %v218
    %v230 = vmul.f32 %v229, %v218
    %v231 = vmul.f32 %v230, %v229
    %v232 = vmul.f32 0.5, %v231
    %v233 = vsub.f32 1.5, %v232
    %v234 = vmul.f32 %v229, %v233
    %vm235 = vweird.f32 %v218
    %vm236 = vweird.f32 %v229
    %vm237 = vmor %vm235, %vm236
    %v238 = vsel %vm237, %v229, %v234
    %v239 = vmul.f32 %v205, %v228
    %v240 = vmul.f32 %v206, %v238
    %v242 = vperm.slane %v187, 0
    %v244 = vmul.f32 %v239, %v242
    %v245 = vmul.f32 %v240, %v242
    %v247 = vperm.slane %v188, 0
    %v249 = vadd.f32 %v244, %v247
    %v250 = vadd.f32 %v245, %v247
    %v251 = vld [vmem:[#allocation5] sm:$0x3]
    %v253 = vrot.slane %v251, 1
    %v254 = vld [vmem:[%s4] sm:$0xff]
    %v255 = vld [vmem:[%s4 + $0x8] sm:$0xff]
    %v256 = vld [vmem:[%s4 + $0x10] sm:$0xff]
    %v257 = vld [vmem:[%s4 + $0x18] sm:$0xff]
    %v258 = vld [vmem:[%s5] sm:$0x1]
    %v260 = vperm.slane %v258, 0
    %v263 = vsel %vm189, %v249, 0
    %v266 = vsel %vm189, %v250, 0
    %268 = vmatpush.msra.mxu0 0.0
    %269 = vmatpush.msra.mxu0 0.0
    %270 = vmatpush.msra.mxu0 0.0
    %271 = vmatpush.msra.mxu0 0.0
    %272 = vmatpush.msra.mxu0 0.0
    %273 = vmatpush.msra.mxu0 0.0
    %274 = vmatpush.msra.mxu0 0.0
    %275 = vmatpush.msra.mxu0 0.0
    %276 = vmatpush.msra.mxu0 0.0
    %277 = vmatpush.msra.mxu0 0.0
    %278 = vmatpush.msra.mxu0 0.0
    %279 = vmatpush.msra.mxu0 0.0
    %280 = vmatpush.msra.mxu0 %v257
    %281 = vmatpush.msra.mxu0 %v256
    %282 = vmatpush.msra.mxu0 %v255
    %283 = vmatpush.msra.mxu0 %v254
    %284 = vmatmul.f32.gmra.mxu0 %v263
    %v285 = vpop.f32.mrf.mxu0
    %v286 = vadd.f32 %v260, %v285
    %287 = vmatmul.f32.gmra.mxu0 %v266
    %v288 = vpop.f32.mrf.mxu0
    %v289 = vadd.f32 %v260, %v288
    %290 = vdwg.mxu0
    %v291 = vld [vmem:[%s6] sm:$0xff]
    %v292 = vld [vmem:[%s6 + $0x8] sm:$0xff]
    %v293 = vld [vmem:[%s6 + $0x10] sm:$0xff]
    %v294 = vld [vmem:[%s6 + $0x18] sm:$0xff]
    %296 = vrot.lane.b32.xlu0 %v286, 96
    %v297 = vpop.permute.xlu0 %296
    %vm298 = vcmask 64512
    %v299 = vsel %vm298, %v286, 0
    %v301 = vsel %vm298, %v297, 0
    %303 = vmatpush.xpose.msra.mxu0 0.0
    %304 = vmatpush.xpose.msra.mxu0 0.0
    %305 = vmatpush.xpose.msra.mxu0 0.0
    %306 = vmatpush.xpose.msra.mxu0 0.0
    %307 = vmatpush.xpose.msra.mxu0 0.0
    %308 = vmatpush.xpose.msra.mxu0 0.0
    %309 = vmatpush.xpose.msra.mxu0 0.0
    %310 = vmatpush.xpose.msra.mxu0 0.0
    %311 = vmatpush.xpose.msra.mxu0 0.0
    %312 = vmatpush.xpose.msra.mxu0 0.0
    %313 = vmatpush.xpose.msra.mxu0 0.0
    %314 = vmatpush.xpose.msra.mxu0 0.0
    %315 = vmatpush.xpose.msra.mxu0 0.0
    %316 = vmatpush.xpose.msra.mxu0 0.0
    %317 = vmatpush.xpose.msra.mxu0 0.0
    %318 = vmatpush.xpose.msra.mxu0 %v301
    %319 = vmatmul.f32.gmra.mxu0 %v299
    %v320 = vpop.f32.mrf.mxu0
    %v321 = vadd.f32 0.0, %v320
    %322 = vdwg.mxu0
    %324 = vrot.lane.b32.xlu0 %v289, 96
    %v325 = vpop.permute.xlu0 %324
    %v326 = vsel %vm298, %v289, 0
    %v328 = vsel %vm298, %v325, 0
    %330 = vmatpush.xpose.msra.mxu0 0.0
    %331 = vmatpush.xpose.msra.mxu0 0.0
    %332 = vmatpush.xpose.msra.mxu0 0.0
    %333 = vmatpush.xpose.msra.mxu0 0.0
    %334 = vmatpush.xpose.msra.mxu0 0.0
    %335 = vmatpush.xpose.msra.mxu0 0.0
    %336 = vmatpush.xpose.msra.mxu0 0.0
    %337 = vmatpush.xpose.msra.mxu0 0.0
    %338 = vmatpush.xpose.msra.mxu0 0.0
    %339 = vmatpush.xpose.msra.mxu0 0.0
    %340 = vmatpush.xpose.msra.mxu0 0.0
    %341 = vmatpush.xpose.msra.mxu0 0.0
    %342 = vmatpush.xpose.msra.mxu0 0.0
    %343 = vmatpush.xpose.msra.mxu0 0.0
    %344 = vmatpush.xpose.msra.mxu0 0.0
    %345 = vmatpush.xpose.msra.mxu0 %v328
    %346 = vmatmul.f32.gmra.mxu0 %v326
    %v347 = vpop.f32.mrf.mxu0
    %v348 = vadd.f32 0.0, %v347
    %349 = vdwg.mxu0
    %v350 = vmul.f32 %v321, 0.35355338
    %v351 = vmul.f32 %v348, 0.35355338
    %v352 = vperm.slane %v251, 0
    %v353 = vperm.slane %v253, 0
    %v356 = vadd.f32 %v350, %v352
    %v357 = vadd.f32 %v351, %v353
    %v358 = vsel %vm298, %v356, -inf
    %359 = vmax.xlane.f32.xlu0 %v358
    %v360 = vpop.xlane.xlu0 %359
    %v361 = vsel %vm298, %v357, -inf
    %362 = vmax.xlane.f32.xlu0 %v361
    %v363 = vpop.xlane.xlu0 %362
    %v364 = vsub.f32 %v356, %v360
    %v365 = vsub.f32 %v357, %v363
    %v366 = vmul.f32 %v364, 1.442695
    %v367 = vpow.pop %v366
    %v368 = vmul.f32 %v365, 1.442695
    %v369 = vpow.pop %v368
    %v370 = vsel %vm298, %v367, 0.0
    %371 = vadd.xlane.f32.xlu0 %v370
    %v372 = vpop.xlane.xlu0 %371
    %v373 = vsel %vm298, %v369, 0.0
    %374 = vadd.xlane.f32.xlu0 %v373
    %v375 = vpop.xlane.xlu0 %374
    %v376 = vrcp.pop %v372
    %v377 = vrcp.pop %v375
    %v378 = vmul.f32 %v367, %v376
    %v379 = vmul.f32 %v369, %v377
    %380 = vrot.lane.b32.xlu0 %v286, 64
    %v381 = vpop.permute.xlu0 %380
    %v384 = vsel %vm298, %v378, 0
    %386 = vmatpush.msra.mxu0 0.0
    %387 = vmatpush.msra.mxu0 0.0
    %388 = vmatpush.msra.mxu0 0.0
    %389 = vmatpush.msra.mxu0 0.0
    %390 = vmatpush.msra.mxu0 0.0
    %391 = vmatpush.msra.mxu0 0.0
    %392 = vmatpush.msra.mxu0 0.0
    %393 = vmatpush.msra.mxu0 0.0
    %394 = vmatpush.msra.mxu0 0.0
    %395 = vmatpush.msra.mxu0 0.0
    %396 = vmatpush.msra.mxu0 0.0
    %397 = vmatpush.msra.mxu0 0.0
    %398 = vmatpush.msra.mxu0 0.0
    %399 = vmatpush.msra.mxu0 0.0
    %400 = vmatpush.msra.mxu0 0.0
    %401 = vmatpush.msra.mxu0 %v381
    %402 = vmatmul.f32.gmra.mxu0 %v384
    %v403 = vpop.f32.mrf.mxu0
    %v404 = vadd.f32 0.0, %v403
    %405 = vdwg.mxu0
    %406 = vrot.lane.b32.xlu0 %v289, 64
    %v407 = vpop.permute.xlu0 %406
    %v410 = vsel %vm298, %v379, 0
    %412 = vmatpush.msra.mxu0 0.0
    %413 = vmatpush.msra.mxu0 0.0
    %414 = vmatpush.msra.mxu0 0.0
    %415 = vmatpush.msra.mxu0 0.0
    %416 = vmatpush.msra.mxu0 0.0
    %417 = vmatpush.msra.mxu0 0.0
    %418 = vmatpush.msra.mxu0 0.0
    %419 = vmatpush.msra.mxu0 0.0
    %420 = vmatpush.msra.mxu0 0.0
    %421 = vmatpush.msra.mxu0 0.0
    %422 = vmatpush.msra.mxu0 0.0
    %423 = vmatpush.msra.mxu0 0.0
    %424 = vmatpush.msra.mxu0 0.0
    %425 = vmatpush.msra.mxu0 0.0
    %426 = vmatpush.msra.mxu0 0.0
    %427 = vmatpush.msra.mxu0 %v407
    %428 = vmatmul.f32.gmra.mxu0 %v410
    %v429 = vpop.f32.mrf.mxu0
    %v430 = vadd.f32 0.0, %v429
    %431 = vdwg.mxu0
    %432 = vrot.lane.b32.xlu0 %v286, 120
    %v433 = vpop.permute.xlu0 %432
    %434 = vrot.lane.b32.xlu0 %v286, 88
    %v435 = vpop.permute.xlu0 %434
    %v436 = vsel %vm298, %v433, 0
    %v438 = vsel %vm298, %v435, 0
    %440 = vmatpush.xpose.msra.mxu0 0.0
    %441 = vmatpush.xpose.msra.mxu0 0.0
    %442 = vmatpush.xpose.msra.mxu0 0.0
    %443 = vmatpush.xpose.msra.mxu0 0.0
    %444 = vmatpush.xpose.msra.mxu0 0.0
    %445 = vmatpush.xpose.msra.mxu0 0.0
    %446 = vmatpush.xpose.msra.mxu0 0.0
    %447 = vmatpush.xpose.msra.mxu0 0.0
    %448 = vmatpush.xpose.msra.mxu0 0.0
    %449 = vmatpush.xpose.msra.mxu0 0.0
    %450 = vmatpush.xpose.msra.mxu0 0.0
    %451 = vmatpush.xpose.msra.mxu0 0.0
    %452 = vmatpush.xpose.msra.mxu0 0.0
    %453 = vmatpush.xpose.msra.mxu0 0.0
    %454 = vmatpush.xpose.msra.mxu0 0.0
    %455 = vmatpush.xpose.msra.mxu0 %v438
    %456 = vmatmul.f32.gmra.mxu0 %v436
    %v457 = vpop.f32.mrf.mxu0
    %v458 = vadd.f32 0.0, %v457
    %459 = vdwg.mxu0
    %460 = vrot.lane.b32.xlu0 %v289, 120
    %v461 = vpop.permute.xlu0 %460
    %462 = vrot.lane.b32.xlu0 %v289, 88
    %v463 = vpop.permute.xlu0 %462
    %v464 = vsel %vm298, %v461, 0
    %v466 = vsel %vm298, %v463, 0
    %468 = vmatpush.xpose.msra.mxu0 0.0
    %469 = vmatpush.xpose.msra.mxu0 0.0
    %470 = vmatpush.xpose.msra.mxu0 0.0
    %471 = vmatpush.xpose.msra.mxu0 0.0
    %472 = vmatpush.xpose.msra.mxu0 0.0
    %473 = vmatpush.xpose.msra.mxu0 0.0
    %474 = vmatpush.xpose.msra.mxu0 0.0
    %475 = vmatpush.xpose.msra.mxu0 0.0
    %476 = vmatpush.xpose.msra.mxu0 0.0
    %477 = vmatpush.xpose.msra.mxu0 0.0
    %478 = vmatpush.xpose.msra.mxu0 0.0
    %479 = vmatpush.xpose.msra.mxu0 0.0
    %480 = vmatpush.xpose.msra.mxu0 0.0
    %481 = vmatpush.xpose.msra.mxu0 0.0
    %482 = vmatpush.xpose.msra.mxu0 0.0
    %483 = vmatpush.xpose.msra.mxu0 %v466
    %484 = vmatmul.f32.gmra.mxu0 %v464
    %v485 = vpop.f32.mrf.mxu0
    %v486 = vadd.f32 0.0, %v485
    %487 = vdwg.mxu0
    %v488 = vmul.f32 %v458, 0.35355338
    %v489 = vmul.f32 %v486, 0.35355338
    %v490 = vadd.f32 %v488, %v352
    %v491 = vadd.f32 %v489, %v353
    %v492 = vsel %vm298, %v490, -inf
    %493 = vmax.xlane.f32.xlu0 %v492
    %v494 = vpop.xlane.xlu0 %493
    %v495 = vsel %vm298, %v491, -inf
    %496 = vmax.xlane.f32.xlu0 %v495
    %v497 = vpop.xlane.xlu0 %496
    %v498 = vsub.f32 %v490, %v494
    %v499 = vsub.f32 %v491, %v497
    %v500 = vmul.f32 %v498, 1.442695
    %v501 = vpow.pop %v500
    %v502 = vmul.f32 %v499, 1.442695
    %v503 = vpow.pop %v502
    %v504 = vsel %vm298, %v501, 0.0
    %505 = vadd.xlane.f32.xlu0 %v504
    %v506 = vpop.xlane.xlu0 %505
    %v507 = vsel %vm298, %v503, 0.0
    %508 = vadd.xlane.f32.xlu0 %v507
    %v509 = vpop.xlane.xlu0 %508
    %v510 = vrcp.pop %v506
    %v511 = vrcp.pop %v509
    %v512 = vmul.f32 %v501, %v510
    %v513 = vmul.f32 %v503, %v511
    %514 = vrot.lane.b32.xlu0 %v286, 56
    %v515 = vpop.permute.xlu0 %514
    %v518 = vsel %vm298, %v512, 0
    %520 = vmatpush.msra.mxu0 0.0
    %521 = vmatpush.msra.mxu0 0.0
    %522 = vmatpush.msra.mxu0 0.0
    %523 = vmatpush.msra.mxu0 0.0
    %524 = vmatpush.msra.mxu0 0.0
    %525 = vmatpush.msra.mxu0 0.0
    %526 = vmatpush.msra.mxu0 0.0
    %527 = vmatpush.msra.mxu0 0.0
    %528 = vmatpush.msra.mxu0 0.0
    %529 = vmatpush.msra.mxu0 0.0
    %530 = vmatpush.msra.mxu0 0.0
    %531 = vmatpush.msra.mxu0 0.0
    %532 = vmatpush.msra.mxu0 0.0
    %533 = vmatpush.msra.mxu0 0.0
    %534 = vmatpush.msra.mxu0 0.0
    %535 = vmatpush.msra.mxu0 %v515
    %536 = vmatmul.f32.gmra.mxu0 %v518
    %v537 = vpop.f32.mrf.mxu0
    %v538 = vadd.f32 0.0, %v537
    %539 = vdwg.mxu0
    %540 = vrot.lane.b32.xlu0 %v289, 56
    %v541 = vpop.permute.xlu0 %540
    %v544 = vsel %vm298, %v513, 0
    %546 = vmatpush.msra.mxu0 0.0
    %547 = vmatpush.msra.mxu0 0.0
    %548 = vmatpush.msra.mxu0 0.0
    %549 = vmatpush.msra.mxu0 0.0
    %550 = vmatpush.msra.mxu0 0.0
    %551 = vmatpush.msra.mxu0 0.0
    %552 = vmatpush.msra.mxu0 0.0
    %553 = vmatpush.msra.mxu0 0.0
    %554 = vmatpush.msra.mxu0 0.0
    %555 = vmatpush.msra.mxu0 0.0
    %556 = vmatpush.msra.mxu0 0.0
    %557 = vmatpush.msra.mxu0 0.0
    %558 = vmatpush.msra.mxu0 0.0
    %559 = vmatpush.msra.mxu0 0.0
    %560 = vmatpush.msra.mxu0 0.0
    %561 = vmatpush.msra.mxu0 %v541
    %562 = vmatmul.f32.gmra.mxu0 %v544
    %v563 = vpop.f32.mrf.mxu0
    %v564 = vadd.f32 0.0, %v563
    %565 = vdwg.mxu0
    %v567 = vsel %vm298, %v538, 0
    %v570 = vsel %vm298, %v564, 0
    %572 = vmatpush.msra.mxu0 0.0
    %573 = vmatpush.msra.mxu0 0.0
    %574 = vmatpush.msra.mxu0 0.0
    %575 = vmatpush.msra.mxu0 0.0
    %576 = vmatpush.msra.mxu0 0.0
    %577 = vmatpush.msra.mxu0 0.0
    %578 = vmatpush.msra.mxu0 0.0
    %579 = vmatpush.msra.mxu0 0.0
    %580 = vmatpush.msra.mxu0 0.0
    %581 = vmatpush.msra.mxu0 0.0
    %582 = vmatpush.msra.mxu0 0.0
    %583 = vmatpush.msra.mxu0 0.0
    %584 = vmatpush.msra.mxu0 0.0
    %585 = vmatpush.msra.mxu0 0.0
    %586 = vmatpush.msra.mxu0 0.0
    %587 = vmatpush.msra.mxu0 %v292
    %588 = vmatmul.f32.gmra.mxu0 %v567
    %v589 = vpop.f32.mrf.mxu0
    %v590 = vadd.f32 0.0, %v589
    %591 = vmatmul.f32.gmra.mxu0 %v570
    %v592 = vpop.f32.mrf.mxu0
    %v593 = vadd.f32 0.0, %v592
    %594 = vdwg.mxu0
    %v596 = vsel %vm298, %v404, 0
    %v599 = vsel %vm298, %v430, 0
    %601 = vmatpush.msra.mxu0 0.0
    %602 = vmatpush.msra.mxu0 0.0
    %603 = vmatpush.msra.mxu0 0.0
    %604 = vmatpush.msra.mxu0 0.0
    %605 = vmatpush.msra.mxu0 0.0
    %606 = vmatpush.msra.mxu0 0.0
    %607 = vmatpush.msra.mxu0 0.0
    %608 = vmatpush.msra.mxu0 0.0
    %609 = vmatpush.msra.mxu0 0.0
    %610 = vmatpush.msra.mxu0 0.0
    %611 = vmatpush.msra.mxu0 0.0
    %612 = vmatpush.msra.mxu0 0.0
    %613 = vmatpush.msra.mxu0 0.0
    %614 = vmatpush.msra.mxu0 0.0
    %615 = vmatpush.msra.mxu0 0.0
    %616 = vmatpush.msra.mxu0 %v291
    %617 = vmatmul.f32.gmra.mxu0 %v596
    %v618 = vpop.f32.mrf.mxu0
    %v619 = vadd.f32 %v590, %v618
    %620 = vmatmul.f32.gmra.mxu0 %v599
    %v621 = vpop.f32.mrf.mxu0
    %v622 = vadd.f32 %v593, %v621
    %623 = vdwg.mxu0
    %624 = vrot.lane.b32.xlu0 %v286, 112
    %v625 = vpop.permute.xlu0 %624
    %626 = vrot.lane.b32.xlu0 %v286, 80
    %v627 = vpop.permute.xlu0 %626
    %v628 = vsel %vm298, %v625, 0
    %v630 = vsel %vm298, %v627, 0
    %632 = vmatpush.xpose.msra.mxu0 0.0
    %633 = vmatpush.xpose.msra.mxu0 0.0
    %634 = vmatpush.xpose.msra.mxu0 0.0
    %635 = vmatpush.xpose.msra.mxu0 0.0
    %636 = vmatpush.xpose.msra.mxu0 0.0
    %637 = vmatpush.xpose.msra.mxu0 0.0
    %638 = vmatpush.xpose.msra.mxu0 0.0
    %639 = vmatpush.xpose.msra.mxu0 0.0
    %640 = vmatpush.xpose.msra.mxu0 0.0
    %641 = vmatpush.xpose.msra.mxu0 0.0
    %642 = vmatpush.xpose.msra.mxu0 0.0
    %643 = vmatpush.xpose.msra.mxu0 0.0
    %644 = vmatpush.xpose.msra.mxu0 0.0
    %645 = vmatpush.xpose.msra.mxu0 0.0
    %646 = vmatpush.xpose.msra.mxu0 0.0
    %647 = vmatpush.xpose.msra.mxu0 %v630
    %648 = vmatmul.f32.gmra.mxu0 %v628
    %v649 = vpop.f32.mrf.mxu0
    %v650 = vadd.f32 0.0, %v649
    %651 = vdwg.mxu0
    %652 = vrot.lane.b32.xlu0 %v289, 112
    %v653 = vpop.permute.xlu0 %652
    %654 = vrot.lane.b32.xlu0 %v289, 80
    %v655 = vpop.permute.xlu0 %654
    %v656 = vsel %vm298, %v653, 0
    %v658 = vsel %vm298, %v655, 0
    %660 = vmatpush.xpose.msra.mxu0 0.0
    %661 = vmatpush.xpose.msra.mxu0 0.0
    %662 = vmatpush.xpose.msra.mxu0 0.0
    %663 = vmatpush.xpose.msra.mxu0 0.0
    %664 = vmatpush.xpose.msra.mxu0 0.0
    %665 = vmatpush.xpose.msra.mxu0 0.0
    %666 = vmatpush.xpose.msra.mxu0 0.0
    %667 = vmatpush.xpose.msra.mxu0 0.0
    %668 = vmatpush.xpose.msra.mxu0 0.0
    %669 = vmatpush.xpose.msra.mxu0 0.0
    %670 = vmatpush.xpose.msra.mxu0 0.0
    %671 = vmatpush.xpose.msra.mxu0 0.0
    %672 = vmatpush.xpose.msra.mxu0 0.0
    %673 = vmatpush.xpose.msra.mxu0 0.0
    %674 = vmatpush.xpose.msra.mxu0 0.0
    %675 = vmatpush.xpose.msra.mxu0 %v658
    %676 = vmatmul.f32.gmra.mxu0 %v656
    %v677 = vpop.f32.mrf.mxu0
    %v678 = vadd.f32 0.0, %v677
    %679 = vdwg.mxu0
    %v680 = vmul.f32 %v650, 0.35355338
    %v681 = vmul.f32 %v678, 0.35355338
    %v682 = vadd.f32 %v680, %v352
    %v683 = vadd.f32 %v681, %v353
    %v684 = vsel %vm298, %v682, -inf
    %685 = vmax.xlane.f32.xlu0 %v684
    %v686 = vpop.xlane.xlu0 %685
    %v687 = vsel %vm298, %v683, -inf
    %688 = vmax.xlane.f32.xlu0 %v687
    %v689 = vpop.xlane.xlu0 %688
    %v690 = vsub.f32 %v682, %v686
    %v691 = vsub.f32 %v683, %v689
    %v692 = vmul.f32 %v690, 1.442695
    %v693 = vpow.pop %v692
    %v694 = vmul.f32 %v691, 1.442695
    %v695 = vpow.pop %v694
    %v696 = vsel %vm298, %v693, 0.0
    %697 = vadd.xlane.f32.xlu0 %v696
    %v698 = vpop.xlane.xlu0 %697
    %v699 = vsel %vm298, %v695, 0.0
    %700 = vadd.xlane.f32.xlu0 %v699
    %v701 = vpop.xlane.xlu0 %700
    %v702 = vrcp.pop %v698
    %v703 = vrcp.pop %v701
    %v704 = vmul.f32 %v693, %v702
    %v705 = vmul.f32 %v695, %v703
    %706 = vrot.lane.b32.xlu0 %v286, 48
    %v707 = vpop.permute.xlu0 %706
    %v710 = vsel %vm298, %v704, 0
    %712 = vmatpush.msra.mxu0 0.0
    %713 = vmatpush.msra.mxu0 0.0
    %714 = vmatpush.msra.mxu0 0.0
    %715 = vmatpush.msra.mxu0 0.0
    %716 = vmatpush.msra.mxu0 0.0
    %717 = vmatpush.msra.mxu0 0.0
    %718 = vmatpush.msra.mxu0 0.0
    %719 = vmatpush.msra.mxu0 0.0
    %720 = vmatpush.msra.mxu0 0.0
    %721 = vmatpush.msra.mxu0 0.0
    %722 = vmatpush.msra.mxu0 0.0
    %723 = vmatpush.msra.mxu0 0.0
    %724 = vmatpush.msra.mxu0 0.0
    %725 = vmatpush.msra.mxu0 0.0
    %726 = vmatpush.msra.mxu0 0.0
    %727 = vmatpush.msra.mxu0 %v707
    %728 = vmatmul.f32.gmra.mxu0 %v710
    %v729 = vpop.f32.mrf.mxu0
    %v730 = vadd.f32 0.0, %v729
    %731 = vdwg.mxu0
    %732 = vrot.lane.b32.xlu0 %v289, 48
    %v733 = vpop.permute.xlu0 %732
    %v736 = vsel %vm298, %v705, 0
    %738 = vmatpush.msra.mxu0 0.0
    %739 = vmatpush.msra.mxu0 0.0
    %740 = vmatpush.msra.mxu0 0.0
    %741 = vmatpush.msra.mxu0 0.0
    %742 = vmatpush.msra.mxu0 0.0
    %743 = vmatpush.msra.mxu0 0.0
    %744 = vmatpush.msra.mxu0 0.0
    %745 = vmatpush.msra.mxu0 0.0
    %746 = vmatpush.msra.mxu0 0.0
    %747 = vmatpush.msra.mxu0 0.0
    %748 = vmatpush.msra.mxu0 0.0
    %749 = vmatpush.msra.mxu0 0.0
    %750 = vmatpush.msra.mxu0 0.0
    %751 = vmatpush.msra.mxu0 0.0
    %752 = vmatpush.msra.mxu0 0.0
    %753 = vmatpush.msra.mxu0 %v733
    %754 = vmatmul.f32.gmra.mxu0 %v736
    %v755 = vpop.f32.mrf.mxu0
    %v756 = vadd.f32 0.0, %v755
    %757 = vdwg.mxu0
    %v759 = vsel %vm298, %v730, 0
    %v762 = vsel %vm298, %v756, 0
    %764 = vmatpush.msra.mxu0 0.0
    %765 = vmatpush.msra.mxu0 0.0
    %766 = vmatpush.msra.mxu0 0.0
    %767 = vmatpush.msra.mxu0 0.0
    %768 = vmatpush.msra.mxu0 0.0
    %769 = vmatpush.msra.mxu0 0.0
    %770 = vmatpush.msra.mxu0 0.0
    %771 = vmatpush.msra.mxu0 0.0
    %772 = vmatpush.msra.mxu0 0.0
    %773 = vmatpush.msra.mxu0 0.0
    %774 = vmatpush.msra.mxu0 0.0
    %775 = vmatpush.msra.mxu0 0.0
    %776 = vmatpush.msra.mxu0 0.0
    %777 = vmatpush.msra.mxu0 0.0
    %778 = vmatpush.msra.mxu0 0.0
    %779 = vmatpush.msra.mxu0 %v293
    %780 = vmatmul.f32.gmra.mxu0 %v759
    %v781 = vpop.f32.mrf.mxu0
    %v782 = vadd.f32 0.0, %v781
    %783 = vmatmul.f32.gmra.mxu0 %v762
    %v784 = vpop.f32.mrf.mxu0
    %v785 = vadd.f32 0.0, %v784
    %786 = vdwg.mxu0
    %v787 = vadd.f32 %v619, %v782
    %v788 = vadd.f32 %v622, %v785
    %789 = vrot.lane.b32.xlu0 %v286, 104
    %v790 = vpop.permute.xlu0 %789
    %791 = vrot.lane.b32.xlu0 %v286, 72
    %v792 = vpop.permute.xlu0 %791
    %v793 = vsel %vm298, %v790, 0
    %v795 = vsel %vm298, %v792, 0
    %797 = vmatpush.xpose.msra.mxu0 0.0
    %798 = vmatpush.xpose.msra.mxu0 0.0
    %799 = vmatpush.xpose.msra.mxu0 0.0
    %800 = vmatpush.xpose.msra.mxu0 0.0
    %801 = vmatpush.xpose.msra.mxu0 0.0
    %802 = vmatpush.xpose.msra.mxu0 0.0
    %803 = vmatpush.xpose.msra.mxu0 0.0
    %804 = vmatpush.xpose.msra.mxu0 0.0
    %805 = vmatpush.xpose.msra.mxu0 0.0
    %806 = vmatpush.xpose.msra.mxu0 0.0
    %807 = vmatpush.xpose.msra.mxu0 0.0
    %808 = vmatpush.xpose.msra.mxu0 0.0
    %809 = vmatpush.xpose.msra.mxu0 0.0
    %810 = vmatpush.xpose.msra.mxu0 0.0
    %811 = vmatpush.xpose.msra.mxu0 0.0
    %812 = vmatpush.xpose.msra.mxu0 %v795
    %813 = vmatmul.f32.gmra.mxu0 %v793
    %v814 = vpop.f32.mrf.mxu0
    %v815 = vadd.f32 0.0, %v814
    %816 = vdwg.mxu0
    %817 = vrot.lane.b32.xlu0 %v289, 104
    %v818 = vpop.permute.xlu0 %817
    %819 = vrot.lane.b32.xlu0 %v289, 72
    %v820 = vpop.permute.xlu0 %819
    %v821 = vsel %vm298, %v818, 0
    %v823 = vsel %vm298, %v820, 0
    %825 = vmatpush.xpose.msra.mxu0 0.0
    %826 = vmatpush.xpose.msra.mxu0 0.0
    %827 = vmatpush.xpose.msra.mxu0 0.0
    %828 = vmatpush.xpose.msra.mxu0 0.0
    %829 = vmatpush.xpose.msra.mxu0 0.0
    %830 = vmatpush.xpose.msra.mxu0 0.0
    %831 = vmatpush.xpose.msra.mxu0 0.0
    %832 = vmatpush.xpose.msra.mxu0 0.0
    %833 = vmatpush.xpose.msra.mxu0 0.0
    %834 = vmatpush.xpose.msra.mxu0 0.0
    %835 = vmatpush.xpose.msra.mxu0 0.0
    %836 = vmatpush.xpose.msra.mxu0 0.0
    %837 = vmatpush.xpose.msra.mxu0 0.0
    %838 = vmatpush.xpose.msra.mxu0 0.0
    %839 = vmatpush.xpose.msra.mxu0 0.0
    %840 = vmatpush.xpose.msra.mxu0 %v823
    %841 = vmatmul.f32.gmra.mxu0 %v821
    %v842 = vpop.f32.mrf.mxu0
    %v843 = vadd.f32 0.0, %v842
    %844 = vdwg.mxu0
    %v845 = vmul.f32 %v815, 0.35355338
    %v846 = vmul.f32 %v843, 0.35355338
    %v847 = vadd.f32 %v845, %v352
    %v848 = vadd.f32 %v846, %v353
    %v849 = vsel %vm298, %v847, -inf
    %850 = vmax.xlane.f32.xlu0 %v849
    %v851 = vpop.xlane.xlu0 %850
    %v852 = vsel %vm298, %v848, -inf
    %853 = vmax.xlane.f32.xlu0 %v852
    %v854 = vpop.xlane.xlu0 %853
    %v855 = vsub.f32 %v847, %v851
    %v856 = vsub.f32 %v848, %v854
    %v857 = vmul.f32 %v855, 1.442695
    %v858 = vpow.pop %v857
    %v859 = vmul.f32 %v856, 1.442695
    %v860 = vpow.pop %v859
    %v861 = vsel %vm298, %v858, 0.0
    %862 = vadd.xlane.f32.xlu0 %v861
    %v863 = vpop.xlane.xlu0 %862
    %v864 = vsel %vm298, %v860, 0.0
    %865 = vadd.xlane.f32.xlu0 %v864
    %v866 = vpop.xlane.xlu0 %865
    %v867 = vrcp.pop %v863
    %v868 = vrcp.pop %v866
    %v869 = vmul.f32 %v858, %v867
    %v870 = vmul.f32 %v860, %v868
    %871 = vrot.lane.b32.xlu0 %v286, 40
    %v872 = vpop.permute.xlu0 %871
    %v875 = vsel %vm298, %v869, 0
    %877 = vmatpush.msra.mxu0 0.0
    %878 = vmatpush.msra.mxu0 0.0
    %879 = vmatpush.msra.mxu0 0.0
    %880 = vmatpush.msra.mxu0 0.0
    %881 = vmatpush.msra.mxu0 0.0
    %882 = vmatpush.msra.mxu0 0.0
    %883 = vmatpush.msra.mxu0 0.0
    %884 = vmatpush.msra.mxu0 0.0
    %885 = vmatpush.msra.mxu0 0.0
    %886 = vmatpush.msra.mxu0 0.0
    %887 = vmatpush.msra.mxu0 0.0
    %888 = vmatpush.msra.mxu0 0.0
    %889 = vmatpush.msra.mxu0 0.0
    %890 = vmatpush.msra.mxu0 0.0
    %891 = vmatpush.msra.mxu0 0.0
    %892 = vmatpush.msra.mxu0 %v872
    %893 = vmatmul.f32.gmra.mxu0 %v875
    %v894 = vpop.f32.mrf.mxu0
    %v895 = vadd.f32 0.0, %v894
    %896 = vdwg.mxu0
    %897 = vrot.lane.b32.xlu0 %v289, 40
    %v898 = vpop.permute.xlu0 %897
    %v901 = vsel %vm298, %v870, 0
    %903 = vmatpush.msra.mxu0 0.0
    %904 = vmatpush.msra.mxu0 0.0
    %905 = vmatpush.msra.mxu0 0.0
    %906 = vmatpush.msra.mxu0 0.0
    %907 = vmatpush.msra.mxu0 0.0
    %908 = vmatpush.msra.mxu0 0.0
    %909 = vmatpush.msra.mxu0 0.0
    %910 = vmatpush.msra.mxu0 0.0
    %911 = vmatpush.msra.mxu0 0.0
    %912 = vmatpush.msra.mxu0 0.0
    %913 = vmatpush.msra.mxu0 0.0
    %914 = vmatpush.msra.mxu0 0.0
    %915 = vmatpush.msra.mxu0 0.0
    %916 = vmatpush.msra.mxu0 0.0
    %917 = vmatpush.msra.mxu0 0.0
    %918 = vmatpush.msra.mxu0 %v898
    %919 = vmatmul.f32.gmra.mxu0 %v901
    %v920 = vpop.f32.mrf.mxu0
    %v921 = vadd.f32 0.0, %v920
    %922 = vdwg.mxu0
    %v924 = vsel %vm298, %v895, 0
    %v927 = vsel %vm298, %v921, 0
    %929 = vmatpush.msra.mxu0 0.0
    %930 = vmatpush.msra.mxu0 0.0
    %931 = vmatpush.msra.mxu0 0.0
    %932 = vmatpush.msra.mxu0 0.0
    %933 = vmatpush.msra.mxu0 0.0
    %934 = vmatpush.msra.mxu0 0.0
    %935 = vmatpush.msra.mxu0 0.0
    %936 = vmatpush.msra.mxu0 0.0
    %937 = vmatpush.msra.mxu0 0.0
    %938 = vmatpush.msra.mxu0 0.0
    %939 = vmatpush.msra.mxu0 0.0
    %940 = vmatpush.msra.mxu0 0.0
    %941 = vmatpush.msra.mxu0 0.0
    %942 = vmatpush.msra.mxu0 0.0
    %943 = vmatpush.msra.mxu0 0.0
    %944 = vmatpush.msra.mxu0 %v294
    %945 = vmatmul.f32.gmra.mxu0 %v924
    %v946 = vpop.f32.mrf.mxu0
    %v947 = vadd.f32 0.0, %v946
    %948 = vmatmul.f32.gmra.mxu0 %v927
    %v949 = vpop.f32.mrf.mxu0
    %v950 = vadd.f32 0.0, %v949
    %951 = vdwg.mxu0
    %v952 = vadd.f32 %v787, %v947
    %v953 = vadd.f32 %v788, %v950
    %v954 = vld [vmem:[%s7] sm:$0x1]
    %v956 = vperm.slane %v954, 0
    %v958 = vadd.f32 %v952, %v956
    %v959 = vadd.f32 %v953, %v956
    %v960 = vadd.f32 %v958, %v249
    %v961 = vadd.f32 %v959, %v250
    %v962 = vld [vmem:[#allocation10] sm:$0x1]
    %v963 = vld [vmem:[%s9] sm:$0x1]
    %v964 = vsel %vm189, %v960, 0.0
    %965 = vadd.xlane.f32.xlu0 %v964
    %v966 = vpop.xlane.xlu0 %965
    %v967 = vsel %vm189, %v961, 0.0
    %968 = vadd.xlane.f32.xlu0 %v967
    %v969 = vpop.xlane.xlu0 %968
    %v970 = vmul.f32 %v966, %v202
    %v971 = vmul.f32 %v969, %v202
    %v972 = vsub.f32 %v960, %v970
    %v973 = vsub.f32 %v961, %v971
    %v974 = vmul.f32 %v972, %v972
    %v975 = vmul.f32 %v973, %v973
    %v976 = vsel %vm189, %v974, 0.0
    %977 = vadd.xlane.f32.xlu0 %v976
    %v978 = vpop.xlane.xlu0 %977
    %v979 = vsel %vm189, %v975, 0.0
    %980 = vadd.xlane.f32.xlu0 %v979
    %v981 = vpop.xlane.xlu0 %980
    %v982 = vmul.f32 %v978, %v202
    %v983 = vmul.f32 %v981, %v202
    %v984 = vadd.f32 %v982, 1e-12
    %v985 = vadd.f32 %v983, 1e-12
    %v986 = vrsqrt.pop %v984
    %v987 = vmul.f32 %v986, %v984
    %v988 = vmul.f32 %v987, %v986
    %v989 = vmul.f32 0.5, %v988
    %v990 = vsub.f32 1.5, %v989
    %v991 = vmul.f32 %v986, %v990
    %vm992 = vweird.f32 %v984
    %vm993 = vweird.f32 %v986
    %vm994 = vmor %vm992, %vm993
    %v995 = vsel %vm994, %v986, %v991
    %v996 = vrsqrt.pop %v985
    %v997 = vmul.f32 %v996, %v985
    %v998 = vmul.f32 %v997, %v996
    %v999 = vmul.f32 0.5, %v998
    %v1000 = vsub.f32 1.5, %v999
    %v1001 = vmul.f32 %v996, %v1000
    %vm1002 = vweird.f32 %v985
    %vm1003 = vweird.f32 %v996
    %vm1004 = vmor %vm1002, %vm1003
    %v1005 = vsel %vm1004, %v996, %v1001
    %v1006 = vmul.f32 %v972, %v995
    %v1007 = vmul.f32 %v973, %v1005
    %v1009 = vperm.slane %v962, 0
    %v1011 = vmul.f32 %v1006, %v1009
    %v1012 = vmul.f32 %v1007, %v1009
    %v1014 = vperm.slane %v963, 0
    %v1016 = vadd.f32 %v1011, %v1014
    %v1017 = vadd.f32 %v1012, %v1014
    %v1018 = vld [vmem:[%s10] sm:$0xff]
    %v1019 = vld [vmem:[%s10 + $0x8] sm:$0xff]
    %v1020 = vld [vmem:[%s10 + $0x10] sm:$0xff]
    %v1021 = vld [vmem:[%s10 + $0x18] sm:$0xff]
    %v1022 = vld [vmem:[%s11] sm:$0x1]
    %v1024 = vperm.slane %v1022, 0
    %v1027 = vsel %vm189, %v1016, 0
    %v1030 = vsel %vm189, %v1017, 0
    %1032 = vmatpush.msra.mxu0 0.0
    %1033 = vmatpush.msra.mxu0 0.0
    %1034 = vmatpush.msra.mxu0 0.0
    %1035 = vmatpush.msra.mxu0 0.0
    %1036 = vmatpush.msra.mxu0 0.0
    %1037 = vmatpush.msra.mxu0 0.0
    %1038 = vmatpush.msra.mxu0 0.0
    %1039 = vmatpush.msra.mxu0 0.0
    %1040 = vmatpush.msra.mxu0 0.0
    %1041 = vmatpush.msra.mxu0 0.0
    %1042 = vmatpush.msra.mxu0 0.0
    %1043 = vmatpush.msra.mxu0 0.0
    %1044 = vmatpush.msra.mxu0 %v1021
    %1045 = vmatpush.msra.mxu0 %v1020
    %1046 = vmatpush.msra.mxu0 %v1019
    %1047 = vmatpush.msra.mxu0 %v1018
    %1048 = vmatmul.f32.gmra.mxu0 %v1027
    %v1049 = vpop.f32.mrf.mxu0
    %v1050 = vadd.f32 %v1024, %v1049
    %1051 = vmatmul.f32.gmra.mxu0 %v1030
    %v1052 = vpop.f32.mrf.mxu0
    %v1053 = vadd.f32 %v1024, %v1052
    %1054 = vdwg.mxu0
    %v1055 = vmul.f32 %v1050, 0.5
    %v1056 = vmul.f32 %v1053, 0.5
    %v1057 = vmul.f32 %v1050, 0.044715
    %v1058 = vmul.f32 %v1053, 0.044715
    %v1059 = vmul.f32 %v1057, %v1050
    %v1060 = vmul.f32 %v1058, %v1053
    %v1061 = vmul.f32 %v1059, %v1050
    %v1062 = vmul.f32 %v1060, %v1053
    %v1063 = vadd.f32 %v1050, %v1061
    %v1064 = vadd.f32 %v1053, %v1062
    %v1065 = vmul.f32 %v1063, 0.7978846
    %v1066 = vmul.f32 %v1064, 0.7978846
    %v1067 = vtanh.pop %v1065
    %v1068 = vtanh.pop %v1066
    %v1069 = vadd.f32 %v1067, 1.0
    %v1070 = vadd.f32 %v1068, 1.0
    %v1071 = vmul.f32 %v1055, %v1069
    %v1072 = vmul.f32 %v1056, %v1070
    %v1073 = vld [vmem:[%s12] sm:$0xff]
    %v1074 = vld [vmem:[%s12 + $0x8] sm:$0xff]
    %v1075 = vld [vmem:[%s12 + $0x10] sm:$0xff]
    %v1076 = vld [vmem:[%s12 + $0x18] sm:$0xff]
    %v1077 = vld [vmem:[%s12 + $0x20] sm:$0xff]
    %v1078 = vld [vmem:[%s12 + $0x28] sm:$0xff]
    %v1079 = vld [vmem:[%s12 + $0x30] sm:$0xff]
    %v1080 = vld [vmem:[%s12 + $0x38] sm:$0xff]
    %v1081 = vld [vmem:[%s13] sm:$0x1]
    %v1083 = vperm.slane %v1081, 0
    %vm1085 = vcmask 523264
    %v1087 = vsel %vm1085, %v1071, 0
    %v1090 = vsel %vm1085, %v1072, 0
    %1092 = vmatpush.msra.mxu0 0.0
    %1093 = vmatpush.msra.mxu0 0.0
    %1094 = vmatpush.msra.mxu0 0.0
    %1095 = vmatpush.msra.mxu0 0.0
    %1096 = vmatpush.msra.mxu0 0.0
    %1097 = vmatpush.msra.mxu0 0.0
    %1098 = vmatpush.msra.mxu0 0.0
    %1099 = vmatpush.msra.mxu0 0.0
    %1100 = vmatpush.msra.mxu0 %v1080
    %1101 = vmatpush.msra.mxu0 %v1079
    %1102 = vmatpush.msra.mxu0 %v1078
    %1103 = vmatpush.msra.mxu0 %v1077
    %1104 = vmatpush.msra.mxu0 %v1076
    %1105 = vmatpush.msra.mxu0 %v1075
    %1106 = vmatpush.msra.mxu0 %v1074
    %1107 = vmatpush.msra.mxu0 %v1073
    %1108 = vmatmul.f32.gmra.mxu0 %v1087
    %v1109 = vpop.f32.mrf.mxu0
    %v1110 = vadd.f32 %v1083, %v1109
    %1111 = vmatmul.f32.gmra.mxu0 %v1090
    %v1112 = vpop.f32.mrf.mxu0
    %v1113 = vadd.f32 %v1083, %v1112
    %1114 = vdwg.mxu0
    %v1115 = vadd.f32 %v1110, %v1016
    %v1116 = vadd.f32 %v1113, %v1017
    %v1117 = vld [vmem:[#allocation11] sm:$0x1]
    %v1118 = vld [vmem:[%s15] sm:$0x1]
    %v1119 = vsel %vm189, %v1115, 0.0
    %1120 = vadd.xlane.f32.xlu0 %v1119
    %v1121 = vpop.xlane.xlu0 %1120
    %v1122 = vsel %vm189, %v1116, 0.0
    %1123 = vadd.xlane.f32.xlu0 %v1122
    %v1124 = vpop.xlane.xlu0 %1123
    %v1125 = vmul.f32 %v1121, %v202
    %v1126 = vmul.f32 %v1124, %v202
    %v1127 = vsub.f32 %v1115, %v1125
    %v1128 = vsub.f32 %v1116, %v1126
    %v1129 = vmul.f32 %v1127, %v1127
    %v1130 = vmul.f32 %v1128, %v1128
    %v1131 = vsel %vm189, %v1129, 0.0
    %1132 = vadd.xlane.f32.xlu0 %v1131
    %v1133 = vpop.xlane.xlu0 %1132
    %v1134 = vsel %vm189, %v1130, 0.0
    %1135 = vadd.xlane.f32.xlu0 %v1134
    %v1136 = vpop.xlane.xlu0 %1135
    %v1137 = vmul.f32 %v1133, %v202
    %v1138 = vmul.f32 %v1136, %v202
    %v1139 = vadd.f32 %v1137, 1e-12
    %v1140 = vadd.f32 %v1138, 1e-12
    %v1141 = vrsqrt.pop %v1139
    %v1142 = vmul.f32 %v1141, %v1139
    %v1143 = vmul.f32 %v1142, %v1141
    %v1144 = vmul.f32 0.5, %v1143
    %v1145 = vsub.f32 1.5, %v1144
    %v1146 = vmul.f32 %v1141, %v1145
    %vm1147 = vweird.f32 %v1139
    %vm1148 = vweird.f32 %v1141
    %vm1149 = vmor %vm1147, %vm1148
    %v1150 = vsel %vm1149, %v1141, %v1146
    %v1151 = vrsqrt.pop %v1140
    %v1152 = vmul.f32 %v1151, %v1140
    %v1153 = vmul.f32 %v1152, %v1151
    %v1154 = vmul.f32 0.5, %v1153
    %v1155 = vsub.f32 1.5, %v1154
    %v1156 = vmul.f32 %v1151, %v1155
    %vm1157 = vweird.f32 %v1140
    %vm1158 = vweird.f32 %v1151
    %vm1159 = vmor %vm1157, %vm1158
    %v1160 = vsel %vm1159, %v1151, %v1156
    %v1161 = vmul.f32 %v1127, %v1150
    %v1162 = vmul.f32 %v1128, %v1160
    %v1164 = vperm.slane %v1117, 0
    %v1166 = vmul.f32 %v1161, %v1164
    %v1167 = vmul.f32 %v1162, %v1164
    %v1169 = vperm.slane %v1118, 0
    %v1171 = vadd.f32 %v1166, %v1169
    %v1172 = vadd.f32 %v1167, %v1169
    %s1173 = scalar_lea.vmem %s4, 32
    %v1174 = vld [vmem:[%s1173] sm:$0xff]
    %v1175 = vld [vmem:[%s1173 + $0x8] sm:$0xff]
    %v1176 = vld [vmem:[%s1173 + $0x10] sm:$0xff]
    %v1177 = vld [vmem:[%s1173 + $0x18] sm:$0xff]
    %s1178 = scalar_lea.vmem %s5, 1
    %v1179 = vld [vmem:[%s1178] sm:$0x1]
    %v1181 = vperm.slane %v1179, 0
    %v1184 = vsel %vm189, %v1171, 0
    %v1187 = vsel %vm189, %v1172, 0
    %1189 = vmatpush.msra.mxu0 0.0
    %1190 = vmatpush.msra.mxu0 0.0
    %1191 = vmatpush.msra.mxu0 0.0
    %1192 = vmatpush.msra.mxu0 0.0
    %1193 = vmatpush.msra.mxu0 0.0
    %1194 = vmatpush.msra.mxu0 0.0
    %1195 = vmatpush.msra.mxu0 0.0
    %1196 = vmatpush.msra.mxu0 0.0
    %1197 = vmatpush.msra.mxu0 0.0
    %1198 = vmatpush.msra.mxu0 0.0
    %1199 = vmatpush.msra.mxu0 0.0
    %1200 = vmatpush.msra.mxu0 0.0
    %1201 = vmatpush.msra.mxu0 %v1177
    %1202 = vmatpush.msra.mxu0 %v1176
    %1203 = vmatpush.msra.mxu0 %v1175
    %1204 = vmatpush.msra.mxu0 %v1174
    %1205 = vmatmul.f32.gmra.mxu0 %v1184
    %v1206 = vpop.f32.mrf.mxu0
    %v1207 = vadd.f32 %v1181, %v1206
    %1208 = vmatmul.f32.gmra.mxu0 %v1187
    %v1209 = vpop.f32.mrf.mxu0
    %v1210 = vadd.f32 %v1181, %v1209
    %1211 = vdwg.mxu0
    %s1212 = scalar_lea.vmem %s6, 32
    %v1213 = vld [vmem:[%s1212] sm:$0xff]
    %v1214 = vld [vmem:[%s1212 + $0x8] sm:$0xff]
    %v1215 = vld [vmem:[%s1212 + $0x10] sm:$0xff]
    %v1216 = vld [vmem:[%s1212 + $0x18] sm:$0xff]
    %1218 = vrot.lane.b32.xlu0 %v1207, 96
    %v1219 = vpop.permute.xlu0 %1218
    %v1220 = vsel %vm298, %v1207, 0
    %v1222 = vsel %vm298, %v1219, 0
    %1224 = vmatpush.xpose.msra.mxu0 0.0
    %1225 = vmatpush.xpose.msra.mxu0 0.0
    %1226 = vmatpush.xpose.msra.mxu0 0.0
    %1227 = vmatpush.xpose.msra.mxu0 0.0
    %1228 = vmatpush.xpose.msra.mxu0 0.0
    %1229 = vmatpush.xpose.msra.mxu0 0.0
    %1230 = vmatpush.xpose.msra.mxu0 0.0
    %1231 = vmatpush.xpose.msra.mxu0 0.0
    %1232 = vmatpush.xpose.msra.mxu0 0.0
    %1233 = vmatpush.xpose.msra.mxu0 0.0
    %1234 = vmatpush.xpose.msra.mxu0 0.0
    %1235 = vmatpush.xpose.msra.mxu0 0.0
    %1236 = vmatpush.xpose.msra.mxu0 0.0
    %1237 = vmatpush.xpose.msra.mxu0 0.0
    %1238 = vmatpush.xpose.msra.mxu0 0.0
    %1239 = vmatpush.xpose.msra.mxu0 %v1222
    %1240 = vmatmul.f32.gmra.mxu0 %v1220
    %v1241 = vpop.f32.mrf.mxu0
    %v1242 = vadd.f32 0.0, %v1241
    %1243 = vdwg.mxu0
    %1245 = vrot.lane.b32.xlu0 %v1210, 96
    %v1246 = vpop.permute.xlu0 %1245
    %v1247 = vsel %vm298, %v1210, 0
    %v1249 = vsel %vm298, %v1246, 0
    %1251 = vmatpush.xpose.msra.mxu0 0.0
    %1252 = vmatpush.xpose.msra.mxu0 0.0
    %1253 = vmatpush.xpose.msra.mxu0 0.0
    %1254 = vmatpush.xpose.msra.mxu0 0.0
    %1255 = vmatpush.xpose.msra.mxu0 0.0
    %1256 = vmatpush.xpose.msra.mxu0 0.0
    %1257 = vmatpush.xpose.msra.mxu0 0.0
    %1258 = vmatpush.xpose.msra.mxu0 0.0
    %1259 = vmatpush.xpose.msra.mxu0 0.0
    %1260 = vmatpush.xpose.msra.mxu0 0.0
    %1261 = vmatpush.xpose.msra.mxu0 0.0
    %1262 = vmatpush.xpose.msra.mxu0 0.0
    %1263 = vmatpush.xpose.msra.mxu0 0.0
    %1264 = vmatpush.xpose.msra.mxu0 0.0
    %1265 = vmatpush.xpose.msra.mxu0 0.0
    %1266 = vmatpush.xpose.msra.mxu0 %v1249
    %1267 = vmatmul.f32.gmra.mxu0 %v1247
    %v1268 = vpop.f32.mrf.mxu0
    %v1269 = vadd.f32 0.0, %v1268
    %1270 = vdwg.mxu0
    %v1271 = vmul.f32 %v1242, 0.35355338
    %v1272 = vmul.f32 %v1269, 0.35355338
    %v1273 = vadd.f32 %v1271, %v352
    %v1274 = vadd.f32 %v1272, %v353
    %v1275 = vsel %vm298, %v1273, -inf
    %1276 = vmax.xlane.f32.xlu0 %v1275
    %v1277 = vpop.xlane.xlu0 %1276
    %v1278 = vsel %vm298, %v1274, -inf
    %1279 = vmax.xlane.f32.xlu0 %v1278
    %v1280 = vpop.xlane.xlu0 %1279
    %v1281 = vsub.f32 %v1273, %v1277
    %v1282 = vsub.f32 %v1274, %v1280
    %v1283 = vmul.f32 %v1281, 1.442695
    %v1284 = vpow.pop %v1283
    %v1285 = vmul.f32 %v1282, 1.442695
    %v1286 = vpow.pop %v1285
    %v1287 = vsel %vm298, %v1284, 0.0
    %1288 = vadd.xlane.f32.xlu0 %v1287
    %v1289 = vpop.xlane.xlu0 %1288
    %v1290 = vsel %vm298, %v1286, 0.0
    %1291 = vadd.xlane.f32.xlu0 %v1290
    %v1292 = vpop.xlane.xlu0 %1291
    %v1293 = vrcp.pop %v1289
    %v1294 = vrcp.pop %v1292
    %v1295 = vmul.f32 %v1284, %v1293
    %v1296 = vmul.f32 %v1286, %v1294
    %1297 = vrot.lane.b32.xlu0 %v1207, 64
    %v1298 = vpop.permute.xlu0 %1297
    %v1301 = vsel %vm298, %v1295, 0
    %1303 = vmatpush.msra.mxu0 0.0
    %1304 = vmatpush.msra.mxu0 0.0
    %1305 = vmatpush.msra.mxu0 0.0
    %1306 = vmatpush.msra.mxu0 0.0
    %1307 = vmatpush.msra.mxu0 0.0
    %1308 = vmatpush.msra.mxu0 0.0
    %1309 = vmatpush.msra.mxu0 0.0
    %1310 = vmatpush.msra.mxu0 0.0
    %1311 = vmatpush.msra.mxu0 0.0
    %1312 = vmatpush.msra.mxu0 0.0
    %1313 = vmatpush.msra.mxu0 0.0
    %1314 = vmatpush.msra.mxu0 0.0
    %1315 = vmatpush.msra.mxu0 0.0
    %1316 = vmatpush.msra.mxu0 0.0
    %1317 = vmatpush.msra.mxu0 0.0
    %1318 = vmatpush.msra.mxu0 %v1298
    %1319 = vmatmul.f32.gmra.mxu0 %v1301
    %v1320 = vpop.f32.mrf.mxu0
    %v1321 = vadd.f32 0.0, %v1320
    %1322 = vdwg.mxu0
    %1323 = vrot.lane.b32.xlu0 %v1210, 64
    %v1324 = vpop.permute.xlu0 %1323
    %v1327 = vsel %vm298, %v1296, 0
    %1329 = vmatpush.msra.mxu0 0.0
    %1330 = vmatpush.msra.mxu0 0.0
    %1331 = vmatpush.msra.mxu0 0.0
    %1332 = vmatpush.msra.mxu0 0.0
    %1333 = vmatpush.msra.mxu0 0.0
    %1334 = vmatpush.msra.mxu0 0.0
    %1335 = vmatpush.msra.mxu0 0.0
    %1336 = vmatpush.msra.mxu0 0.0
    %1337 = vmatpush.msra.mxu0 0.0
    %1338 = vmatpush.msra.mxu0 0.0
    %1339 = vmatpush.msra.mxu0 0.0
    %1340 = vmatpush.msra.mxu0 0.0
    %1341 = vmatpush.msra.mxu0 0.0
    %1342 = vmatpush.msra.mxu0 0.0
    %1343 = vmatpush.msra.mxu0 0.0
    %1344 = vmatpush.msra.mxu0 %v1324
    %1345 = vmatmul.f32.gmra.mxu0 %v1327
    %v1346 = vpop.f32.mrf.mxu0
    %v1347 = vadd.f32 0.0, %v1346
    %1348 = vdwg.mxu0
    %1349 = vrot.lane.b32.xlu0 %v1207, 120
    %v1350 = vpop.permute.xlu0 %1349
    %1351 = vrot.lane.b32.xlu0 %v1207, 88
    %v1352 = vpop.permute.xlu0 %1351
    %v1353 = vsel %vm298, %v1350, 0
    %v1355 = vsel %vm298, %v1352, 0
    %1357 = vmatpush.xpose.msra.mxu0 0.0
    %1358 = vmatpush.xpose.msra.mxu0 0.0
    %1359 = vmatpush.xpose.msra.mxu0 0.0
    %1360 = vmatpush.xpose.msra.mxu0 0.0
    %1361 = vmatpush.xpose.msra.mxu0 0.0
    %1362 = vmatpush.xpose.msra.mxu0 0.0
    %1363 = vmatpush.xpose.msra.mxu0 0.0
    %1364 = vmatpush.xpose.msra.mxu0 0.0
    %1365 = vmatpush.xpose.msra.mxu0 0.0
    %1366 = vmatpush.xpose.msra.mxu0 0.0
    %1367 = vmatpush.xpose.msra.mxu0 0.0
    %1368 = vmatpush.xpose.msra.mxu0 0.0
    %1369 = vmatpush.xpose.msra.mxu0 0.0
    %1370 = vmatpush.xpose.msra.mxu0 0.0
    %1371 = vmatpush.xpose.msra.mxu0 0.0
    %1372 = vmatpush.xpose.msra.mxu0 %v1355
    %1373 = vmatmul.f32.gmra.mxu0 %v1353
    %v1374 = vpop.f32.mrf.mxu0
    %v1375 = vadd.f32 0.0, %v1374
    %1376 = vdwg.mxu0
    %1377 = vrot.lane.b32.xlu0 %v1210, 120
    %v1378 = vpop.permute.xlu0 %1377
    %1379 = vrot.lane.b32.xlu0 %v1210, 88
    %v1380 = vpop.permute.xlu0 %1379
    %v1381 = vsel %vm298, %v1378, 0
    %v1383 = vsel %vm298, %v1380, 0
    %1385 = vmatpush.xpose.msra.mxu0 0.0
    %1386 = vmatpush.xpose.msra.mxu0 0.0
    %1387 = vmatpush.xpose.msra.mxu0 0.0
    %1388 = vmatpush.xpose.msra.mxu0 0.0
    %1389 = vmatpush.xpose.msra.mxu0 0.0
    %1390 = vmatpush.xpose.msra.mxu0 0.0
    %1391 = vmatpush.xpose.msra.mxu0 0.0
    %1392 = vmatpush.xpose.msra.mxu0 0.0
    %1393 = vmatpush.xpose.msra.mxu0 0.0
    %1394 = vmatpush.xpose.msra.mxu0 0.0
    %1395 = vmatpush.xpose.msra.mxu0 0.0
    %1396 = vmatpush.xpose.msra.mxu0 0.0
    %1397 = vmatpush.xpose.msra.mxu0 0.0
    %1398 = vmatpush.xpose.msra.mxu0 0.0
    %1399 = vmatpush.xpose.msra.mxu0 0.0
    %1400 = vmatpush.xpose.msra.mxu0 %v1383
    %1401 = vmatmul.f32.gmra.mxu0 %v1381
    %v1402 = vpop.f32.mrf.mxu0
    %v1403 = vadd.f32 0.0, %v1402
    %1404 = vdwg.mxu0
    %v1405 = vmul.f32 %v1375, 0.35355338
    %v1406 = vmul.f32 %v1403, 0.35355338
    %v1407 = vadd.f32 %v1405, %v352
    %v1408 = vadd.f32 %v1406, %v353
    %v1409 = vsel %vm298, %v1407, -inf
    %1410 = vmax.xlane.f32.xlu0 %v1409
    %v1411 = vpop.xlane.xlu0 %1410
    %v1412 = vsel %vm298, %v1408, -inf
    %1413 = vmax.xlane.f32.xlu0 %v1412
    %v1414 = vpop.xlane.xlu0 %1413
    %v1415 = vsub.f32 %v1407, %v1411
    %v1416 = vsub.f32 %v1408, %v1414
    %v1417 = vmul.f32 %v1415, 1.442695
    %v1418 = vpow.pop %v1417
    %v1419 = vmul.f32 %v1416, 1.442695
    %v1420 = vpow.pop %v1419
    %v1421 = vsel %vm298, %v1418, 0.0
    %1422 = vadd.xlane.f32.xlu0 %v1421
    %v1423 = vpop.xlane.xlu0 %1422
    %v1424 = vsel %vm298, %v1420, 0.0
    %1425 = vadd.xlane.f32.xlu0 %v1424
    %v1426 = vpop.xlane.xlu0 %1425
    %v1427 = vrcp.pop %v1423
    %v1428 = vrcp.pop %v1426
    %v1429 = vmul.f32 %v1418, %v1427
    %v1430 = vmul.f32 %v1420, %v1428
    %1431 = vrot.lane.b32.xlu0 %v1207, 56
    %v1432 = vpop.permute.xlu0 %1431
    %v1435 = vsel %vm298, %v1429, 0
    %1437 = vmatpush.msra.mxu0 0.0
    %1438 = vmatpush.msra.mxu0 0.0
    %1439 = vmatpush.msra.mxu0 0.0
    %1440 = vmatpush.msra.mxu0 0.0
    %1441 = vmatpush.msra.mxu0 0.0
    %1442 = vmatpush.msra.mxu0 0.0
    %1443 = vmatpush.msra.mxu0 0.0
    %1444 = vmatpush.msra.mxu0 0.0
    %1445 = vmatpush.msra.mxu0 0.0
    %1446 = vmatpush.msra.mxu0 0.0
    %1447 = vmatpush.msra.mxu0 0.0
    %1448 = vmatpush.msra.mxu0 0.0
    %1449 = vmatpush.msra.mxu0 0.0
    %1450 = vmatpush.msra.mxu0 0.0
    %1451 = vmatpush.msra.mxu0 0.0
    %1452 = vmatpush.msra.mxu0 %v1432
    %1453 = vmatmul.f32.gmra.mxu0 %v1435
    %v1454 = vpop.f32.mrf.mxu0
    %v1455 = vadd.f32 0.0, %v1454
    %1456 = vdwg.mxu0
    %1457 = vrot.lane.b32.xlu0 %v1210, 56
    %v1458 = vpop.permute.xlu0 %1457
    %v1461 = vsel %vm298, %v1430, 0
    %1463 = vmatpush.msra.mxu0 0.0
    %1464 = vmatpush.msra.mxu0 0.0
    %1465 = vmatpush.msra.mxu0 0.0
    %1466 = vmatpush.msra.mxu0 0.0
    %1467 = vmatpush.msra.mxu0 0.0
    %1468 = vmatpush.msra.mxu0 0.0
    %1469 = vmatpush.msra.mxu0 0.0
    %1470 = vmatpush.msra.mxu0 0.0
    %1471 = vmatpush.msra.mxu0 0.0
    %1472 = vmatpush.msra.mxu0 0.0
    %1473 = vmatpush.msra.mxu0 0.0
    %1474 = vmatpush.msra.mxu0 0.0
    %1475 = vmatpush.msra.mxu0 0.0
    %1476 = vmatpush.msra.mxu0 0.0
    %1477 = vmatpush.msra.mxu0 0.0
    %1478 = vmatpush.msra.mxu0 %v1458
    %1479 = vmatmul.f32.gmra.mxu0 %v1461
    %v1480 = vpop.f32.mrf.mxu0
    %v1481 = vadd.f32 0.0, %v1480
    %1482 = vdwg.mxu0
    %v1484 = vsel %vm298, %v1455, 0
    %v1487 = vsel %vm298, %v1481, 0
    %1489 = vmatpush.msra.mxu0 0.0
    %1490 = vmatpush.msra.mxu0 0.0
    %1491 = vmatpush.msra.mxu0 0.0
    %1492 = vmatpush.msra.mxu0 0.0
    %1493 = vmatpush.msra.mxu0 0.0
    %1494 = vmatpush.msra.mxu0 0.0
    %1495 = vmatpush.msra.mxu0 0.0
    %1496 = vmatpush.msra.mxu0 0.0
    %1497 = vmatpush.msra.mxu0 0.0
    %1498 = vmatpush.msra.mxu0 0.0
    %1499 = vmatpush.msra.mxu0 0.0
    %1500 = vmatpush.msra.mxu0 0.0
    %1501 = vmatpush.msra.mxu0 0.0
    %1502 = vmatpush.msra.mxu0 0.0
    %1503 = vmatpush.msra.mxu0 0.0
    %1504 = vmatpush.msra.mxu0 %v1214
    %1505 = vmatmul.f32.gmra.mxu0 %v1484
    %v1506 = vpop.f32.mrf.mxu0
    %v1507 = vadd.f32 0.0, %v1506
    %1508 = vmatmul.f32.gmra.mxu0 %v1487
    %v1509 = vpop.f32.mrf.mxu0
    %v1510 = vadd.f32 0.0, %v1509
    %1511 = vdwg.mxu0
    %v1513 = vsel %vm298, %v1321, 0
    %v1516 = vsel %vm298, %v1347, 0
    %1518 = vmatpush.msra.mxu0 0.0
    %1519 = vmatpush.msra.mxu0 0.0
    %1520 = vmatpush.msra.mxu0 0.0
    %1521 = vmatpush.msra.mxu0 0.0
    %1522 = vmatpush.msra.mxu0 0.0
    %1523 = vmatpush.msra.mxu0 0.0
    %1524 = vmatpush.msra.mxu0 0.0
    %1525 = vmatpush.msra.mxu0 0.0
    %1526 = vmatpush.msra.mxu0 0.0
    %1527 = vmatpush.msra.mxu0 0.0
    %1528 = vmatpush.msra.mxu0 0.0
    %1529 = vmatpush.msra.mxu0 0.0
    %1530 = vmatpush.msra.mxu0 0.0
    %1531 = vmatpush.msra.mxu0 0.0
    %1532 = vmatpush.msra.mxu0 0.0
    %1533 = vmatpush.msra.mxu0 %v1213
    %1534 = vmatmul.f32.gmra.mxu0 %v1513
    %v1535 = vpop.f32.mrf.mxu0
    %v1536 = vadd.f32 %v1507, %v1535
    %1537 = vmatmul.f32.gmra.mxu0 %v1516
    %v1538 = vpop.f32.mrf.mxu0
    %v1539 = vadd.f32 %v1510, %v1538
    %1540 = vdwg.mxu0
    %1541 = vrot.lane.b32.xlu0 %v1207, 112
    %v1542 = vpop.permute.xlu0 %1541
    %1543 = vrot.lane.b32.xlu0 %v1207, 80
    %v1544 = vpop.permute.xlu0 %1543
    %v1545 = vsel %vm298, %v1542, 0
    %v1547 = vsel %vm298, %v1544, 0
    %1549 = vmatpush.xpose.msra.mxu0 0.0
    %1550 = vmatpush.xpose.msra.mxu0 0.0
    %1551 = vmatpush.xpose.msra.mxu0 0.0
    %1552 = vmatpush.xpose.msra.mxu0 0.0
    %1553 = vmatpush.xpose.msra.mxu0 0.0
    %1554 = vmatpush.xpose.msra.mxu0 0.0
    %1555 = vmatpush.xpose.msra.mxu0 0.0
    %1556 = vmatpush.xpose.msra.mxu0 0.0
    %1557 = vmatpush.xpose.msra.mxu0 0.0
    %1558 = vmatpush.xpose.msra.mxu0 0.0
    %1559 = vmatpush.xpose.msra.mxu0 0.0
    %1560 = vmatpush.xpose.msra.mxu0 0.0
    %1561 = vmatpush.xpose.msra.mxu0 0.0
    %1562 = vmatpush.xpose.msra.mxu0 0.0
    %1563 = vmatpush.xpose.msra.mxu0 0.0
    %1564 = vmatpush.xpose.msra.mxu0 %v1547
    %1565 = vmatmul.f32.gmra.mxu0 %v1545
    %v1566 = vpop.f32.mrf.mxu0
    %v1567 = vadd.f32 0.0, %v1566
    %1568 = vdwg.mxu0
    %1569 = vrot.lane.b32.xlu0 %v1210, 112
    %v1570 = vpop.permute.xlu0 %1569
    %1571 = vrot.lane.b32.xlu0 %v1210, 80
    %v1572 = vpop.permute.xlu0 %1571
    %v1573 = vsel %vm298, %v1570, 0
    %v1575 = vsel %vm298, %v1572, 0
    %1577 = vmatpush.xpose.msra.mxu0 0.0
    %1578 = vmatpush.xpose.msra.mxu0 0.0
    %1579 = vmatpush.xpose.msra.mxu0 0.0
    %1580 = vmatpush.xpose.msra.mxu0 0.0
    %1581 = vmatpush.xpose.msra.mxu0 0.0
    %1582 = vmatpush.xpose.msra.mxu0 0.0
    %1583 = vmatpush.xpose.msra.mxu0 0.0
    %1584 = vmatpush.xpose.msra.mxu0 0.0
    %1585 = vmatpush.xpose.msra.mxu0 0.0
    %1586 = vmatpush.xpose.msra.mxu0 0.0
    %1587 = vmatpush.xpose.msra.mxu0 0.0
    %1588 = vmatpush.xpose.msra.mxu0 0.0
    %1589 = vmatpush.xpose.msra.mxu0 0.0
    %1590 = vmatpush.xpose.msra.mxu0 0.0
    %1591 = vmatpush.xpose.msra.mxu0 0.0
    %1592 = vmatpush.xpose.msra.mxu0 %v1575
    %1593 = vmatmul.f32.gmra.mxu0 %v1573
    %v1594 = vpop.f32.mrf.mxu0
    %v1595 = vadd.f32 0.0, %v1594
    %1596 = vdwg.mxu0
    %v1597 = vmul.f32 %v1567, 0.35355338
    %v1598 = vmul.f32 %v1595, 0.35355338
    %v1599 = vadd.f32 %v1597, %v352
    %v1600 = vadd.f32 %v1598, %v353
    %v1601 = vsel %vm298, %v1599, -inf
    %1602 = vmax.xlane.f32.xlu0 %v1601
    %v1603 = vpop.xlane.xlu0 %1602
    %v1604 = vsel %vm298, %v1600, -inf
    %1605 = vmax.xlane.f32.xlu0 %v1604
    %v1606 = vpop.xlane.xlu0 %1605
    %v1607 = vsub.f32 %v1599, %v1603
    %v1608 = vsub.f32 %v1600, %v1606
    %v1609 = vmul.f32 %v1607, 1.442695
    %v1610 = vpow.pop %v1609
    %v1611 = vmul.f32 %v1608, 1.442695
    %v1612 = vpow.pop %v1611
    %v1613 = vsel %vm298, %v1610, 0.0
    %1614 = vadd.xlane.f32.xlu0 %v1613
    %v1615 = vpop.xlane.xlu0 %1614
    %v1616 = vsel %vm298, %v1612, 0.0
    %1617 = vadd.xlane.f32.xlu0 %v1616
    %v1618 = vpop.xlane.xlu0 %1617
    %v1619 = vrcp.pop %v1615
    %v1620 = vrcp.pop %v1618
    %v1621 = vmul.f32 %v1610, %v1619
    %v1622 = vmul.f32 %v1612, %v1620
    %1623 = vrot.lane.b32.xlu0 %v1207, 48
    %v1624 = vpop.permute.xlu0 %1623
    %v1627 = vsel %vm298, %v1621, 0
    %1629 = vmatpush.msra.mxu0 0.0
    %1630 = vmatpush.msra.mxu0 0.0
    %1631 = vmatpush.msra.mxu0 0.0
    %1632 = vmatpush.msra.mxu0 0.0
    %1633 = vmatpush.msra.mxu0 0.0
    %1634 = vmatpush.msra.mxu0 0.0
    %1635 = vmatpush.msra.mxu0 0.0
    %1636 = vmatpush.msra.mxu0 0.0
    %1637 = vmatpush.msra.mxu0 0.0
    %1638 = vmatpush.msra.mxu0 0.0
    %1639 = vmatpush.msra.mxu0 0.0
    %1640 = vmatpush.msra.mxu0 0.0
    %1641 = vmatpush.msra.mxu0 0.0
    %1642 = vmatpush.msra.mxu0 0.0
    %1643 = vmatpush.msra.mxu0 0.0
    %1644 = vmatpush.msra.mxu0 %v1624
    %1645 = vmatmul.f32.gmra.mxu0 %v1627
    %v1646 = vpop.f32.mrf.mxu0
    %v1647 = vadd.f32 0.0, %v1646
    %1648 = vdwg.mxu0
    %1649 = vrot.lane.b32.xlu0 %v1210, 48
    %v1650 = vpop.permute.xlu0 %1649
    %v1653 = vsel %vm298, %v1622, 0
    %1655 = vmatpush.msra.mxu0 0.0
    %1656 = vmatpush.msra.mxu0 0.0
    %1657 = vmatpush.msra.mxu0 0.0
    %1658 = vmatpush.msra.mxu0 0.0
    %1659 = vmatpush.msra.mxu0 0.0
    %1660 = vmatpush.msra.mxu0 0.0
    %1661 = vmatpush.msra.mxu0 0.0
    %1662 = vmatpush.msra.mxu0 0.0
    %1663 = vmatpush.msra.mxu0 0.0
    %1664 = vmatpush.msra.mxu0 0.0
    %1665 = vmatpush.msra.mxu0 0.0
    %1666 = vmatpush.msra.mxu0 0.0
    %1667 = vmatpush.msra.mxu0 0.0
    %1668 = vmatpush.msra.mxu0 0.0
    %1669 = vmatpush.msra.mxu0 0.0
    %1670 = vmatpush.msra.mxu0 %v1650
    %1671 = vmatmul.f32.gmra.mxu0 %v1653
    %v1672 = vpop.f32.mrf.mxu0
    %v1673 = vadd.f32 0.0, %v1672
    %1674 = vdwg.mxu0
    %v1676 = vsel %vm298, %v1647, 0
    %v1679 = vsel %vm298, %v1673, 0
    %1681 = vmatpush.msra.mxu0 0.0
    %1682 = vmatpush.msra.mxu0 0.0
    %1683 = vmatpush.msra.mxu0 0.0
    %1684 = vmatpush.msra.mxu0 0.0
    %1685 = vmatpush.msra.mxu0 0.0
    %1686 = vmatpush.msra.mxu0 0.0
    %1687 = vmatpush.msra.mxu0 0.0
    %1688 = vmatpush.msra.mxu0 0.0
    %1689 = vmatpush.msra.mxu0 0.0
    %1690 = vmatpush.msra.mxu0 0.0
    %1691 = vmatpush.msra.mxu0 0.0
    %1692 = vmatpush.msra.mxu0 0.0
    %1693 = vmatpush.msra.mxu0 0.0
    %1694 = vmatpush.msra.mxu0 0.0
    %1695 = vmatpush.msra.mxu0 0.0
    %1696 = vmatpush.msra.mxu0 %v1215
    %1697 = vmatmul.f32.gmra.mxu0 %v1676
    %v1698 = vpop.f32.mrf.mxu0
    %v1699 = vadd.f32 0.0, %v1698
    %1700 = vmatmul.f32.gmra.mxu0 %v1679
    %v1701 = vpop.f32.mrf.mxu0
    %v1702 = vadd.f32 0.0, %v1701
    %1703 = vdwg.mxu0
    %v1704 = vadd.f32 %v1536, %v1699
    %v1705 = vadd.f32 %v1539, %v1702
    %1706 = vrot.lane.b32.xlu0 %v1207, 104
    %v1707 = vpop.permute.xlu0 %1706
    %1708 = vrot.lane.b32.xlu0 %v1207, 72
    %v1709 = vpop.permute.xlu0 %1708
    %v1710 = vsel %vm298, %v1707, 0
    %v1712 = vsel %vm298, %v1709, 0
    %1714 = vmatpush.xpose.msra.mxu0 0.0
    %1715 = vmatpush.xpose.msra.mxu0 0.0
    %1716 = vmatpush.xpose.msra.mxu0 0.0
    %1717 = vmatpush.xpose.msra.mxu0 0.0
    %1718 = vmatpush.xpose.msra.mxu0 0.0
    %1719 = vmatpush.xpose.msra.mxu0 0.0
    %1720 = vmatpush.xpose.msra.mxu0 0.0
    %1721 = vmatpush.xpose.msra.mxu0 0.0
    %1722 = vmatpush.xpose.msra.mxu0 0.0
    %1723 = vmatpush.xpose.msra.mxu0 0.0
    %1724 = vmatpush.xpose.msra.mxu0 0.0
    %1725 = vmatpush.xpose.msra.mxu0 0.0
    %1726 = vmatpush.xpose.msra.mxu0 0.0
    %1727 = vmatpush.xpose.msra.mxu0 0.0
    %1728 = vmatpush.xpose.msra.mxu0 0.0
    %1729 = vmatpush.xpose.msra.mxu0 %v1712
    %1730 = vmatmul.f32.gmra.mxu0 %v1710
    %v1731 = vpop.f32.mrf.mxu0
    %v1732 = vadd.f32 0.0, %v1731
    %1733 = vdwg.mxu0
    %1734 = vrot.lane.b32.xlu0 %v1210, 104
    %v1735 = vpop.permute.xlu0 %1734
    %1736 = vrot.lane.b32.xlu0 %v1210, 72
    %v1737 = vpop.permute.xlu0 %1736
    %v1738 = vsel %vm298, %v1735, 0
    %v1740 = vsel %vm298, %v1737, 0
    %1742 = vmatpush.xpose.msra.mxu0 0.0
    %1743 = vmatpush.xpose.msra.mxu0 0.0
    %1744 = vmatpush.xpose.msra.mxu0 0.0
    %1745 = vmatpush.xpose.msra.mxu0 0.0
    %1746 = vmatpush.xpose.msra.mxu0 0.0
    %1747 = vmatpush.xpose.msra.mxu0 0.0
    %1748 = vmatpush.xpose.msra.mxu0 0.0
    %1749 = vmatpush.xpose.msra.mxu0 0.0
    %1750 = vmatpush.xpose.msra.mxu0 0.0
    %1751 = vmatpush.xpose.msra.mxu0 0.0
    %1752 = vmatpush.xpose.msra.mxu0 0.0
    %1753 = vmatpush.xpose.msra.mxu0 0.0
    %1754 = vmatpush.xpose.msra.mxu0 0.0
    %1755 = vmatpush.xpose.msra.mxu0 0.0
    %1756 = vmatpush.xpose.msra.mxu0 0.0
    %1757 = vmatpush.xpose.msra.mxu0 %v1740
    %1758 = vmatmul.f32.gmra.mxu0 %v1738
    %v1759 = vpop.f32.mrf.mxu0
    %v1760 = vadd.f32 0.0, %v1759
    %1761 = vdwg.mxu0
    %v1762 = vmul.f32 %v1732, 0.35355338
    %v1763 = vmul.f32 %v1760, 0.35355338
    %v1764 = vadd.f32 %v1762, %v352
    %v1765 = vadd.f32 %v1763, %v353
    %v1766 = vsel %vm298, %v1764, -inf
    %1767 = vmax.xlane.f32.xlu0 %v1766
    %v1768 = vpop.xlane.xlu0 %1767
    %v1769 = vsel %vm298, %v1765, -inf
    %1770 = vmax.xlane.f32.xlu0 %v1769
    %v1771 = vpop.xlane.xlu0 %1770
    %v1772 = vsub.f32 %v1764, %v1768
    %v1773 = vsub.f32 %v1765, %v1771
    %v1774 = vmul.f32 %v1772, 1.442695
    %v1775 = vpow.pop %v1774
    %v1776 = vmul.f32 %v1773, 1.442695
    %v1777 = vpow.pop %v1776
    %v1778 = vsel %vm298, %v1775, 0.0
    %1779 = vadd.xlane.f32.xlu0 %v1778
    %v1780 = vpop.xlane.xlu0 %1779
    %v1781 = vsel %vm298, %v1777, 0.0
    %1782 = vadd.xlane.f32.xlu0 %v1781
    %v1783 = vpop.xlane.xlu0 %1782
    %v1784 = vrcp.pop %v1780
    %v1785 = vrcp.pop %v1783
    %v1786 = vmul.f32 %v1775, %v1784
    %v1787 = vmul.f32 %v1777, %v1785
    %1788 = vrot.lane.b32.xlu0 %v1207, 40
    %v1789 = vpop.permute.xlu0 %1788
    %v1792 = vsel %vm298, %v1786, 0
    %1794 = vmatpush.msra.mxu0 0.0
    %1795 = vmatpush.msra.mxu0 0.0
    %1796 = vmatpush.msra.mxu0 0.0
    %1797 = vmatpush.msra.mxu0 0.0
    %1798 = vmatpush.msra.mxu0 0.0
    %1799 = vmatpush.msra.mxu0 0.0
    %1800 = vmatpush.msra.mxu0 0.0
    %1801 = vmatpush.msra.mxu0 0.0
    %1802 = vmatpush.msra.mxu0 0.0
    %1803 = vmatpush.msra.mxu0 0.0
    %1804 = vmatpush.msra.mxu0 0.0
    %1805 = vmatpush.msra.mxu0 0.0
    %1806 = vmatpush.msra.mxu0 0.0
    %1807 = vmatpush.msra.mxu0 0.0
    %1808 = vmatpush.msra.mxu0 0.0
    %1809 = vmatpush.msra.mxu0 %v1789
    %1810 = vmatmul.f32.gmra.mxu0 %v1792
    %v1811 = vpop.f32.mrf.mxu0
    %v1812 = vadd.f32 0.0, %v1811
    %1813 = vdwg.mxu0
    %1814 = vrot.lane.b32.xlu0 %v1210, 40
    %v1815 = vpop.permute.xlu0 %1814
    %v1818 = vsel %vm298, %v1787, 0
    %1820 = vmatpush.msra.mxu0 0.0
    %1821 = vmatpush.msra.mxu0 0.0
    %1822 = vmatpush.msra.mxu0 0.0
    %1823 = vmatpush.msra.mxu0 0.0
    %1824 = vmatpush.msra.mxu0 0.0
    %1825 = vmatpush.msra.mxu0 0.0
    %1826 = vmatpush.msra.mxu0 0.0
    %1827 = vmatpush.msra.mxu0 0.0
    %1828 = vmatpush.msra.mxu0 0.0
    %1829 = vmatpush.msra.mxu0 0.0
    %1830 = vmatpush.msra.mxu0 0.0
    %1831 = vmatpush.msra.mxu0 0.0
    %1832 = vmatpush.msra.mxu0 0.0
    %1833 = vmatpush.msra.mxu0 0.0
    %1834 = vmatpush.msra.mxu0 0.0
    %1835 = vmatpush.msra.mxu0 %v1815
    %1836 = vmatmul.f32.gmra.mxu0 %v1818
    %v1837 = vpop.f32.mrf.mxu0
    %v1838 = vadd.f32 0.0, %v1837
    %1839 = vdwg.mxu0
    %v1841 = vsel %vm298, %v1812, 0
    %v1844 = vsel %vm298, %v1838, 0
    %1846 = vmatpush.msra.mxu0 0.0
    %1847 = vmatpush.msra.mxu0 0.0
    %1848 = vmatpush.msra.mxu0 0.0
    %1849 = vmatpush.msra.mxu0 0.0
    %1850 = vmatpush.msra.mxu0 0.0
    %1851 = vmatpush.msra.mxu0 0.0
    %1852 = vmatpush.msra.mxu0 0.0
    %1853 = vmatpush.msra.mxu0 0.0
    %1854 = vmatpush.msra.mxu0 0.0
    %1855 = vmatpush.msra.mxu0 0.0
    %1856 = vmatpush.msra.mxu0 0.0
    %1857 = vmatpush.msra.mxu0 0.0
    %1858 = vmatpush.msra.mxu0 0.0
    %1859 = vmatpush.msra.mxu0 0.0
    %1860 = vmatpush.msra.mxu0 0.0
    %1861 = vmatpush.msra.mxu0 %v1216
    %1862 = vmatmul.f32.gmra.mxu0 %v1841
    %v1863 = vpop.f32.mrf.mxu0
    %v1864 = vadd.f32 0.0, %v1863
    %1865 = vmatmul.f32.gmra.mxu0 %v1844
    %v1866 = vpop.f32.mrf.mxu0
    %v1867 = vadd.f32 0.0, %v1866
    %1868 = vdwg.mxu0
    %v1869 = vadd.f32 %v1704, %v1864
    %v1870 = vadd.f32 %v1705, %v1867
    %s1871 = scalar_lea.vmem %s7, 1
    %v1872 = vld [vmem:[%s1871] sm:$0x1]
    %v1874 = vperm.slane %v1872, 0
    %v1876 = vadd.f32 %v1869, %v1874
    %v1877 = vadd.f32 %v1870, %v1874
    %v1878 = vadd.f32 %v1876, %v1171
    %v1879 = vadd.f32 %v1877, %v1172
    %s1880 = scalar_lea.vmem [#allocation10], 1
    %v1881 = vld [vmem:[%s1880] sm:$0x1]
    %s1882 = scalar_lea.vmem %s9, 1
    %v1883 = vld [vmem:[%s1882] sm:$0x1]
    %v1884 = vsel %vm189, %v1878, 0.0
    %1885 = vadd.xlane.f32.xlu0 %v1884
    %v1886 = vpop.xlane.xlu0 %1885
    %v1887 = vsel %vm189, %v1879, 0.0
    %1888 = vadd.xlane.f32.xlu0 %v1887
    %v1889 = vpop.xlane.xlu0 %1888
    %v1890 = vmul.f32 %v1886, %v202
    %v1891 = vmul.f32 %v1889, %v202
    %v1892 = vsub.f32 %v1878, %v1890
    %v1893 = vsub.f32 %v1879, %v1891
    %v1894 = vmul.f32 %v1892, %v1892
    %v1895 = vmul.f32 %v1893, %v1893
    %v1896 = vsel %vm189, %v1894, 0.0
    %1897 = vadd.xlane.f32.xlu0 %v1896
    %v1898 = vpop.xlane.xlu0 %1897
    %v1899 = vsel %vm189, %v1895, 0.0
    %1900 = vadd.xlane.f32.xlu0 %v1899
    %v1901 = vpop.xlane.xlu0 %1900
    %v1902 = vmul.f32 %v1898, %v202
    %v1903 = vmul.f32 %v1901, %v202
    %v1904 = vadd.f32 %v1902, 1e-12
    %v1905 = vadd.f32 %v1903, 1e-12
    %v1906 = vrsqrt.pop %v1904
    %v1907 = vmul.f32 %v1906, %v1904
    %v1908 = vmul.f32 %v1907, %v1906
    %v1909 = vmul.f32 0.5, %v1908
    %v1910 = vsub.f32 1.5, %v1909
    %v1911 = vmul.f32 %v1906, %v1910
    %vm1912 = vweird.f32 %v1904
    %vm1913 = vweird.f32 %v1906
    %vm1914 = vmor %vm1912, %vm1913
    %v1915 = vsel %vm1914, %v1906, %v1911
    %v1916 = vrsqrt.pop %v1905
    %v1917 = vmul.f32 %v1916, %v1905
    %v1918 = vmul.f32 %v1917, %v1916
    %v1919 = vmul.f32 0.5, %v1918
    %v1920 = vsub.f32 1.5, %v1919
    %v1921 = vmul.f32 %v1916, %v1920
    %vm1922 = vweird.f32 %v1905
    %vm1923 = vweird.f32 %v1916
    %vm1924 = vmor %vm1922, %vm1923
    %v1925 = vsel %vm1924, %v1916, %v1921
    %v1926 = vmul.f32 %v1892, %v1915
    %v1927 = vmul.f32 %v1893, %v1925
    %v1929 = vperm.slane %v1881, 0
    %v1931 = vmul.f32 %v1926, %v1929
    %v1932 = vmul.f32 %v1927, %v1929
    %v1934 = vperm.slane %v1883, 0
    %v1936 = vadd.f32 %v1931, %v1934
    %v1937 = vadd.f32 %v1932, %v1934
    %s1938 = scalar_lea.vmem %s10, 32
    %v1939 = vld [vmem:[%s1938] sm:$0xff]
    %v1940 = vld [vmem:[%s1938 + $0x8] sm:$0xff]
    %v1941 = vld [vmem:[%s1938 + $0x10] sm:$0xff]
    %v1942 = vld [vmem:[%s1938 + $0x18] sm:$0xff]
    %s1943 = scalar_lea.vmem %s11, 1
    %v1944 = vld [vmem:[%s1943] sm:$0x1]
    %v1946 = vperm.slane %v1944, 0
    %v1949 = vsel %vm189, %v1936, 0
    %v1952 = vsel %vm189, %v1937, 0
    %1954 = vmatpush.msra.mxu0 0.0
    %1955 = vmatpush.msra.mxu0 0.0
    %1956 = vmatpush.msra.mxu0 0.0
    %1957 = vmatpush.msra.mxu0 0.0
    %1958 = vmatpush.msra.mxu0 0.0
    %1959 = vmatpush.msra.mxu0 0.0
    %1960 = vmatpush.msra.mxu0 0.0
    %1961 = vmatpush.msra.mxu0 0.0
    %1962 = vmatpush.msra.mxu0 0.0
    %1963 = vmatpush.msra.mxu0 0.0
    %1964 = vmatpush.msra.mxu0 0.0
    %1965 = vmatpush.msra.mxu0 0.0
    %1966 = vmatpush.msra.mxu0 %v1942
    %1967 = vmatpush.msra.mxu0 %v1941
    %1968 = vmatpush.msra.mxu0 %v1940
    %1969 = vmatpush.msra.mxu0 %v1939
    %1970 = vmatmul.f32.gmra.mxu0 %v1949
    %v1971 = vpop.f32.mrf.mxu0
    %v1972 = vadd.f32 %v1946, %v1971
    %1973 = vmatmul.f32.gmra.mxu0 %v1952
    %v1974 = vpop.f32.mrf.mxu0
    %v1975 = vadd.f32 %v1946, %v1974
    %1976 = vdwg.mxu0
    %v1977 = vmul.f32 %v1972, 0.5
    %v1978 = vmul.f32 %v1975, 0.5
    %v1979 = vmul.f32 %v1972, 0.044715
    %v1980 = vmul.f32 %v1975, 0.044715
    %v1981 = vmul.f32 %v1979, %v1972
    %v1982 = vmul.f32 %v1980, %v1975
    %v1983 = vmul.f32 %v1981, %v1972
    %v1984 = vmul.f32 %v1982, %v1975
    %v1985 = vadd.f32 %v1972, %v1983
    %v1986 = vadd.f32 %v1975, %v1984
    %v1987 = vmul.f32 %v1985, 0.7978846
    %v1988 = vmul.f32 %v1986, 0.7978846
    %v1989 = vtanh.pop %v1987
    %v1990 = vtanh.pop %v1988
    %v1991 = vadd.f32 %v1989, 1.0
    %v1992 = vadd.f32 %v1990, 1.0
    %v1993 = vmul.f32 %v1977, %v1991
    %v1994 = vmul.f32 %v1978, %v1992
    %s1995 = scalar_lea.vmem %s12, 64
    %v1996 = vld [vmem:[%s1995] sm:$0xff]
    %v1997 = vld [vmem:[%s1995 + $0x8] sm:$0xff]
    %v1998 = vld [vmem:[%s1995 + $0x10] sm:$0xff]
    %v1999 = vld [vmem:[%s1995 + $0x18] sm:$0xff]
    %v2000 = vld [vmem:[%s1995 + $0x20] sm:$0xff]
    %v2001 = vld [vmem:[%s1995 + $0x28] sm:$0xff]
    %v2002 = vld [vmem:[%s1995 + $0x30] sm:$0xff]
    %v2003 = vld [vmem:[%s1995 + $0x38] sm:$0xff]
    %s2004 = scalar_lea.vmem %s13, 1
    %v2005 = vld [vmem:[%s2004] sm:$0x1]
    %v2007 = vperm.slane %v2005, 0
    %v2010 = vsel %vm1085, %v1993, 0
    %v2013 = vsel %vm1085, %v1994, 0
    %2015 = vmatpush.msra.mxu0 0.0
    %2016 = vmatpush.msra.mxu0 0.0
    %2017 = vmatpush.msra.mxu0 0.0
    %2018 = vmatpush.msra.mxu0 0.0
    %2019 = vmatpush.msra.mxu0 0.0
    %2020 = vmatpush.msra.mxu0 0.0
    %2021 = vmatpush.msra.mxu0 0.0
    %2022 = vmatpush.msra.mxu0 0.0
    %2023 = vmatpush.msra.mxu0 %v2003
    %2024 = vmatpush.msra.mxu0 %v2002
    %2025 = vmatpush.msra.mxu0 %v2001
    %2026 = vmatpush.msra.mxu0 %v2000
    %2027 = vmatpush.msra.mxu0 %v1999
    %2028 = vmatpush.msra.mxu0 %v1998
    %2029 = vmatpush.msra.mxu0 %v1997
    %2030 = vmatpush.msra.mxu0 %v1996
    %2031 = vmatmul.f32.gmra.mxu0 %v2010
    %v2032 = vpop.f32.mrf.mxu0
    %v2033 = vadd.f32 %v2007, %v2032
    %2034 = vmatmul.f32.gmra.mxu0 %v2013
    %v2035 = vpop.f32.mrf.mxu0
    %v2036 = vadd.f32 %v2007, %v2035
    %2037 = vdwg.mxu0
    %v2038 = vadd.f32 %v2033, %v1936
    %v2039 = vadd.f32 %v2036, %v1937
    %s2040 = scalar_lea.vmem [#allocation11], 1
    %v2041 = vld [vmem:[%s2040] sm:$0x1]
    %s2042 = scalar_lea.vmem %s15, 1
    %v2043 = vld [vmem:[%s2042] sm:$0x1]
    %v2044 = vsel %vm189, %v2038, 0.0
    %2045 = vadd.xlane.f32.xlu0 %v2044
    %v2046 = vpop.xlane.xlu0 %2045
    %v2047 = vsel %vm189, %v2039, 0.0
    %2048 = vadd.xlane.f32.xlu0 %v2047
    %v2049 = vpop.xlane.xlu0 %2048
    %v2050 = vmul.f32 %v2046, %v202
    %v2051 = vmul.f32 %v2049, %v202
    %v2052 = vsub.f32 %v2038, %v2050
    %v2053 = vsub.f32 %v2039, %v2051
    %v2054 = vmul.f32 %v2052, %v2052
    %v2055 = vmul.f32 %v2053, %v2053
    %v2056 = vsel %vm189, %v2054, 0.0
    %2057 = vadd.xlane.f32.xlu0 %v2056
    %v2058 = vpop.xlane.xlu0 %2057
    %v2059 = vsel %vm189, %v2055, 0.0
    %2060 = vadd.xlane.f32.xlu0 %v2059
    %v2061 = vpop.xlane.xlu0 %2060
    %v2062 = vmul.f32 %v2058, %v202
    %v2063 = vmul.f32 %v2061, %v202
    %v2064 = vadd.f32 %v2062, 1e-12
    %v2065 = vadd.f32 %v2063, 1e-12
    %v2066 = vrsqrt.pop %v2064
    %v2067 = vmul.f32 %v2066, %v2064
    %v2068 = vmul.f32 %v2067, %v2066
    %v2069 = vmul.f32 0.5, %v2068
    %v2070 = vsub.f32 1.5, %v2069
    %v2071 = vmul.f32 %v2066, %v2070
    %vm2072 = vweird.f32 %v2064
    %vm2073 = vweird.f32 %v2066
    %vm2074 = vmor %vm2072, %vm2073
    %v2075 = vsel %vm2074, %v2066, %v2071
    %v2076 = vrsqrt.pop %v2065
    %v2077 = vmul.f32 %v2076, %v2065
    %v2078 = vmul.f32 %v2077, %v2076
    %v2079 = vmul.f32 0.5, %v2078
    %v2080 = vsub.f32 1.5, %v2079
    %v2081 = vmul.f32 %v2076, %v2080
    %vm2082 = vweird.f32 %v2065
    %vm2083 = vweird.f32 %v2076
    %vm2084 = vmor %vm2082, %vm2083
    %v2085 = vsel %vm2084, %v2076, %v2081
    %v2086 = vmul.f32 %v2052, %v2075
    %v2087 = vmul.f32 %v2053, %v2085
    %v2089 = vperm.slane %v2041, 0
    %v2091 = vmul.f32 %v2086, %v2089
    %v2092 = vmul.f32 %v2087, %v2089
    %v2094 = vperm.slane %v2043, 0
    %v2096 = vadd.f32 %v2091, %v2094
    %v2097 = vadd.f32 %v2092, %v2094
    %v2098 = vld [vmem:[#allocation13] sm:$0xff]
    %v2099 = vld [vmem:[#allocation13 + $0x8] sm:$0xff]
    %v2100 = vld [vmem:[#allocation13 + $0x10] sm:$0xff]
    %v2101 = vld [vmem:[#allocation13 + $0x18] sm:$0xff]
    %v2102 = vld [vmem:[%s17] sm:$0x1]
    %v2104 = vperm.slane %v2102, 0
    %v2108 = vrot.slane %v2097, 7
    %vm2109 = vcmask 1041409
    %v2110 = vsel %vm2109, %v2108, %v2096
    %v2111 = vsel %vm189, %v2110, 0
    %2113 = vmatpush.msra.mxu0 0.0
    %2114 = vmatpush.msra.mxu0 0.0
    %2115 = vmatpush.msra.mxu0 0.0
    %2116 = vmatpush.msra.mxu0 0.0
    %2117 = vmatpush.msra.mxu0 0.0
    %2118 = vmatpush.msra.mxu0 0.0
    %2119 = vmatpush.msra.mxu0 0.0
    %2120 = vmatpush.msra.mxu0 0.0
    %2121 = vmatpush.msra.mxu0 0.0
    %2122 = vmatpush.msra.mxu0 0.0
    %2123 = vmatpush.msra.mxu0 0.0
    %2124 = vmatpush.msra.mxu0 0.0
    %2125 = vmatpush.msra.mxu0 %v2101
    %2126 = vmatpush.msra.mxu0 %v2100
    %2127 = vmatpush.msra.mxu0 %v2099
    %2128 = vmatpush.msra.mxu0 %v2098
    %2129 = vmatmul.f32.gmra.mxu0 %v2111
    %v2130 = vpop.f32.mrf.mxu0
    %v2131 = vadd.f32 %v2104, %v2130
    %2132 = vdwg.mxu0
    %v2133 = vtanh.pop %v2131
    %v2134 = vld [vmem:[#allocation14] sm:$0xff]
    %v2135 = vld [vmem:[#allocation14 + $0x8] sm:$0xff]
    %v2136 = vld [vmem:[#allocation14 + $0x10] sm:$0xff]
    %v2137 = vld [vmem:[#allocation14 + $0x18] sm:$0xff]
    %v2138 = vld [vmem:[%s19] sm:$0x1]
    %v2140 = vperm.slane %v2138, 0
    %v2143 = vsel %vm189, %v2133, 0
    %2145 = vmatpush.msra.mxu0 0.0
    %2146 = vmatpush.msra.mxu0 0.0
    %2147 = vmatpush.msra.mxu0 0.0
    %2148 = vmatpush.msra.mxu0 0.0
    %2149 = vmatpush.msra.mxu0 0.0
    %2150 = vmatpush.msra.mxu0 0.0
    %2151 = vmatpush.msra.mxu0 0.0
    %2152 = vmatpush.msra.mxu0 0.0
    %2153 = vmatpush.msra.mxu0 0.0
    %2154 = vmatpush.msra.mxu0 0.0
    %2155 = vmatpush.msra.mxu0 0.0
    %2156 = vmatpush.msra.mxu0 0.0
    %2157 = vmatpush.msra.mxu0 %v2137
    %2158 = vmatpush.msra.mxu0 %v2136
    %2159 = vmatpush.msra.mxu0 %v2135
    %2160 = vmatpush.msra.mxu0 %v2134
    %2161 = vmatmul.f32.gmra.mxu0 %v2143
    %v2162 = vpop.f32.mrf.mxu0
    %v2163 = vadd.f32 %v2140, %v2162
    %2164 = vdwg.mxu0
    %2165 = vst [vmem:[#allocation16] sm:$0x3] %v2163
    // Predicated region
    $region114: #{tpu_custom_call.1} parent=1 // pred_check
      _
    $region115: #{tpu_custom_call.1} parent=1 // pred_check_branch
      %2167 = sbr.rel (0) target = $region117
    $region116: #{tpu_custom_call.1} parent=1 // pred_region
      %2169 = vsyncadd [#allocation4], 0
      %s2171 = sshll.u32 [#allocation16], 4
      %s2172 = int_to_ptr.vmem [resolvable:$true] %s2171
      %s2173 = sshll.u32 %s20, 4
      %s2174 = int_to_ptr.hbm [resolvable:$true] %s2173
      %2176 = dma.vmem_to_hbm [thread:$0]  %s2172, 32, %s2174, [#allocation4]
    $region117: #{tpu_custom_call.1} parent=1 // pred_fallthru
      _
    // Predicated region
    $region118: #{tpu_custom_call.1} parent=1 // pred_check
      _
    $region119: #{tpu_custom_call.1} parent=1 // pred_check_branch
      %2178 = sbr.rel (0) target = $region121
    $region120: #{tpu_custom_call.1} parent=1 // pred_region
      %2180 = dma.done [#allocation4], 32
    $region121: #{tpu_custom_call.1} parent=1 // pred_fallthru
      _
    %2181 = vsyncpa [#allocation3], 1
    %2182 = vsyncpa [#allocation6], 1
    %2183 = vsyncpa [#allocation9], 1
    %2184 = vsyncpa [#allocation12], 1
    %2185 = vsyncpa [#allocation15], 1
    %2186 = vsyncpa [#allocation4], 1

</llo_original>
